<compile_context>
chip_gen: v6e
topology: v6e:2x2x1
jax: 0.10.0
libtpu: 0.0.40
codegen_flags: <defaults>
</compile_context>

<pallas_src>
import functools

import jax
import jax.numpy as jnp
from jax import lax
from jax.experimental import pallas as pl
from jax.experimental.pallas import tpu as pltpu

EPS = 1e-5  # PyTorch BatchNorm2d default


def _dlb_kernel(x_ref, hh_ref, ww_ref,
                wa_ref, ba_ref, ga_ref, bta_ref,
                wpT_ref, bp_ref, gp_ref, btp_ref,
                wb_ref, bb_ref, gb_ref, btb_ref,
                out_ref, *, C, S, H, W, k, pad):
    """Fused DLB forward in (C, S) channels-on-sublanes / spatial-on-lanes layout."""
    x = x_ref[...].astype(jnp.float32)          # (C, S): conv-a input AND residual
    hh = hh_ref[...]                            # (1, S) int32 row index per pixel
    ww = ww_ref[...]                            # (1, S) int32 col index per pixel
    inv_s = 1.0 / float(S)

    # Border-validity masks per tap (shared by both 'same' depthwise convs).
    masks = []
    for ky in range(k):
        for kx in range(k):
            dy, dx = ky - pad, kx - pad
            masks.append((hh + dy >= 0) & (hh + dy < H) &
                         (ww + dx >= 0) & (ww + dx < W))            # (1, S) bool

    def dw_same(v, w_ref, b_ref):
        # 'same'-padded stride-1 depthwise conv: tap (ky,kx) is a static lane
        # rotation by d = (ky-pad)*W + (kx-pad) (XLU, off the VALU path);
        # out-of-image taps are zeroed by the masks.  No pad scratch needed.
        w = w_ref[...]                                              # (C, k*k)
        acc = jnp.zeros((C, S), jnp.float32)
        t = 0
        for ky in range(k):
            for kx in range(k):
                d = (ky - pad) * W + (kx - pad)
                shifted = v if d == 0 else pltpu.roll(v, (-d) % S, 1)
                acc = acc + w[:, t:t + 1] * jnp.where(masks[t], shifted, 0.0)
                t += 1
        return acc + b_ref[...]                                     # + per-channel bias

    def bn_stats(v):
        # Single-pass batch statistics (biased variance), per channel.
        m = jnp.sum(v, axis=1, keepdims=True) * inv_s               # (C, 1)
        m2 = jnp.sum(v * v, axis=1, keepdims=True) * inv_s          # (C, 1)
        return m, m2 - m * m

    # ---- depthwise conv a (+ bias) ------------------------------------------
    acc_a = dw_same(x, wa_ref, ba_ref)                              # (C, S)

    # ---- BatchNorm a, folded into the pointwise conv ------------------------
    #   bn_a(h) = alpha*h + beta  with alpha = g*rsqrt(var+eps), beta = b - m*alpha
    m_a, v_a = bn_stats(acc_a)
    alpha = ga_ref[...] * lax.rsqrt(v_a + EPS)                      # (C, 1)
    beta = bta_ref[...] - m_a * alpha                               # (C, 1)

    # ---- 1x1 pointwise conv as an unrolled VPU MAC over Cin -----------------
    #   y[co,s] = sum_ci wpT[co,ci]*(alpha[ci]*h[ci,s] + beta[ci]) + bp[co]
    wpT = wpT_ref[...]                                              # (Cout, Cin)
    acc_p = jnp.zeros((C, S), jnp.float32)
    bias_p = bp_ref[...]                                            # (C, 1)
    for ci in range(C):
        col = wpT[:, ci:ci + 1]                                     # (Cout, 1)
        acc_p = acc_p + (col * alpha[ci:ci + 1, :]) * acc_a[ci:ci + 1, :]
        bias_p = bias_p + col * beta[ci:ci + 1, :]
    acc_p = acc_p + bias_p

    # ---- BatchNorm point, residual add, ReLU --------------------------------
    m_p, v_p = bn_stats(acc_p)
    p_bn = (acc_p - m_p) * (gp_ref[...] * lax.rsqrt(v_p + EPS)) + btp_ref[...]
    p_act = jnp.maximum(p_bn + x, 0.0)                              # residual = x

    # ---- depthwise conv b ('same', stride 1) + BatchNorm b ------------------
    acc_b = dw_same(p_act, wb_ref, bb_ref)
    m_b, v_b = bn_stats(acc_b)
    z = (acc_b - m_b) * (gb_ref[...] * lax.rsqrt(v_b + EPS)) + btb_ref[...]

    # ---- final residual adds + ReLU, lane-dense store ------------------------
    out_ref[...] = jnp.maximum(z + p_act + x, 0.0).astype(out_ref.dtype)


def dlb_forward(x_nchw, params, kernel_size, padding, stride, downsample=None):
    """Wrapper: NCHW in, NCHW out (mirrors the PyTorch module, downsample=None)."""
    if downsample is not None:
        raise NotImplementedError("TODO(synk): downsample branch not implemented")
    N, Cin, H, W = x_nchw.shape
    k = kernel_size
    Cout = params["wp"].shape[1]
    # Without a downsample module the residual add requires shape preservation.
    assert stride == 1 and padding == (k - 1) // 2 and Cout == Cin, \
        "DLB without downsample needs stride=1, 'same' padding and Cin == Cout"
    C = Cin
    S = N * H * W

    # Channels-on-sublanes / flat-spatial-on-lanes layout.
    x_cs = jnp.transpose(x_nchw, (1, 0, 2, 3)).reshape(C, S).astype(jnp.float32)
    idx = jnp.arange(S, dtype=jnp.int32)
    hh = ((idx // W) % H).reshape(1, S)
    ww = (idx % W).reshape(1, S)

    args = [x_cs, hh, ww,
            params["wa"], params["ba"], params["ga"], params["bta"],
            params["wp"].T, params["bp"], params["gp"], params["btp"],
            params["wb"], params["bb"], params["gb"], params["btb"]]

    in_specs = [pl.BlockSpec(a.shape, lambda i, nd=a.ndim: (0,) * nd) for a in args]
    out_spec = pl.BlockSpec((C, S), lambda i: (0, 0))

    kern = functools.partial(_dlb_kernel, C=C, S=S, H=H, W=W, k=k, pad=padding)

    flops = C * S * (4 * k * k + 2 * C + 14)
    bytes_accessed = 4 * (3 * C * S + 2 * S + C * (2 * k * k + C + 10))
    cost = pl.CostEstimate(flops=flops, transcendentals=3 * C,
                           bytes_accessed=bytes_accessed)

    out_cs = pl.pallas_call(
        kern,
        out_shape=jax.ShapeDtypeStruct((C, S), x_nchw.dtype),
        grid=(1,),
        in_specs=in_specs,
        out_specs=out_spec,
        compiler_params=pltpu.CompilerParams(
            dimension_semantics=("arbitrary",),
            vmem_limit_bytes=32 * 1024 * 1024),
        cost_estimate=cost,
    )(*args)

    return jnp.transpose(out_cs.reshape(C, N, H, W), (1, 0, 2, 3))


# ------------------------------ pure-JAX reference ---------------------------
def dlb_reference(x_nchw, p, k, padding, stride):
    x = jnp.transpose(x_nchw, (0, 2, 3, 1)).astype(jnp.float32)     # NHWC
    Cin = x.shape[-1]
    Cout = p["wp"].shape[1]

    def bn(t, g, b):
        m = jnp.mean(t, axis=(0, 1, 2), keepdims=True)
        v = jnp.mean(jnp.square(t - m), axis=(0, 1, 2), keepdims=True)
        return (t - m) * lax.rsqrt(v + EPS) * g.reshape(1, 1, 1, -1) + b.reshape(1, 1, 1, -1)

    wa = jnp.transpose(p["wa"].reshape(Cin, k, k), (1, 2, 0))[:, :, None, :]   # HWIO
    dn = lax.conv_dimension_numbers(x.shape, wa.shape, ("NHWC", "HWIO", "NHWC"))
    h = lax.conv_general_dilated(
        x, wa, (stride, stride), [(padding, padding), (padding, padding)],
        dimension_numbers=dn, feature_group_count=Cin) + p["ba"].reshape(1, 1, 1, -1)
    h = bn(h, p["ga"], p["bta"])

    y = jnp.einsum("nhwc,cd->nhwd", h, p["wp"]) + p["bp"].reshape(1, 1, 1, -1)
    y = bn(y, p["gp"], p["btp"])

    r = x                                                            # downsample=None
    p_act = jax.nn.relu(y + r)

    wb = jnp.transpose(p["wb"].reshape(Cout, k, k), (1, 2, 0))[:, :, None, :]
    dnb = lax.conv_dimension_numbers(p_act.shape, wb.shape, ("NHWC", "HWIO", "NHWC"))
    z = lax.conv_general_dilated(
        p_act, wb, (1, 1), "SAME", dimension_numbers=dnb,
        feature_group_count=Cout) + p["bb"].reshape(1, 1, 1, -1)
    z = bn(z, p["gb"], p["btb"])

    out = jax.nn.relu(z + p_act + r)
    return jnp.transpose(out, (0, 3, 1, 2))


if __name__ == "__main__":
    key = jax.random.PRNGKey(0)
    keys = jax.random.split(key, 13)

    # Residual path w/o downsample requires Cin == Cout and spatial preservation.
    N, C, H, W = 2, 16, 16, 16
    ks, pad, stride = 3, 1, 1

    x = jax.random.normal(keys[0], (N, C, H, W), jnp.float32)

    # Deterministic synthetic parameters.
    #   wa/wb: (C, k*k) depthwise taps; wp: (Cin, Cout); biases / BN params: (C, 1)
    params = dict(
        wa=0.3 * jax.random.normal(keys[1], (C, ks * ks), jnp.float32),
        ba=0.1 * jax.random.normal(keys[2], (C, 1), jnp.float32),
        ga=1.0 + 0.1 * jax.random.normal(keys[3], (C, 1), jnp.float32),
        bta=0.1 * jax.random.normal(keys[4], (C, 1), jnp.float32),
        wp=jax.random.normal(keys[5], (C, C), jnp.float32) / (C ** 0.5),
        bp=0.1 * jax.random.normal(keys[6], (C, 1), jnp.float32),
        gp=1.0 + 0.1 * jax.random.normal(keys[7], (C, 1), jnp.float32),
        btp=0.1 * jax.random.normal(keys[8], (C, 1), jnp.float32),
        wb=0.3 * jax.random.normal(keys[9], (C, ks * ks), jnp.float32),
        bb=0.1 * jax.random.normal(keys[10], (C, 1), jnp.float32),
        gb=1.0 + 0.1 * jax.random.normal(keys[11], (C, 1), jnp.float32),
        btb=0.1 * jax.random.normal(keys[12], (C, 1), jnp.float32),
    )

    out = dlb_forward(x, params, ks, pad, stride)
    out = jax.block_until_ready(out)

    ref = dlb_reference(x, params, ks, pad, stride)
    assert out.shape == ref.shape == (N, C, H, W)
    if not jnp.allclose(out, ref, rtol=2e-3, atol=2e-3):
        raise AssertionError("Pallas DLB kernel mismatch vs JAX reference: "
                             f"max|diff| = {float(jnp.max(jnp.abs(out - ref)))}")

    print("KERNEL_OK")
</pallas_src>

<mosaic_0001>
module attributes {stable_mosaic.version = 11 : i64} {
  func.func @_dlb_kernel(%arg0: i32, %arg1: memref<16x512xf32, #tpu.memory_space<vmem>>, %arg2: memref<1x512xi32, #tpu.memory_space<vmem>>, %arg3: memref<1x512xi32, #tpu.memory_space<vmem>>, %arg4: memref<16x9xf32, #tpu.memory_space<vmem>>, %arg5: memref<16x1xf32, #tpu.memory_space<vmem>>, %arg6: memref<16x1xf32, #tpu.memory_space<vmem>>, %arg7: memref<16x1xf32, #tpu.memory_space<vmem>>, %arg8: memref<16x16xf32, #tpu.memory_space<vmem>>, %arg9: memref<16x1xf32, #tpu.memory_space<vmem>>, %arg10: memref<16x1xf32, #tpu.memory_space<vmem>>, %arg11: memref<16x1xf32, #tpu.memory_space<vmem>>, %arg12: memref<16x9xf32, #tpu.memory_space<vmem>>, %arg13: memref<16x1xf32, #tpu.memory_space<vmem>>, %arg14: memref<16x1xf32, #tpu.memory_space<vmem>>, %arg15: memref<16x1xf32, #tpu.memory_space<vmem>>, %arg16: memref<16x512xf32, #tpu.memory_space<vmem>>) attributes {dimension_semantics = [#tpu.dimension_semantics<arbitrary>], iteration_bounds = array<i64: 1>, scalar_prefetch = 0 : i64, scratch_operands = 0 : i64, tpu.core_type = #tpu.core_type<tc>, window_params = [{pipeline_mode = #tpu.pipeline_mode<synchronous>, transform_indices = @transform_0, window_bounds = array<i64: 16, 512>}, {pipeline_mode = #tpu.pipeline_mode<synchronous>, transform_indices = @transform_1, window_bounds = array<i64: 1, 512>}, {pipeline_mode = #tpu.pipeline_mode<synchronous>, transform_indices = @transform_2, window_bounds = array<i64: 1, 512>}, {pipeline_mode = #tpu.pipeline_mode<synchronous>, transform_indices = @transform_3, window_bounds = array<i64: 16, 9>}, {pipeline_mode = #tpu.pipeline_mode<synchronous>, transform_indices = @transform_4, window_bounds = array<i64: 16, 1>}, {pipeline_mode = #tpu.pipeline_mode<synchronous>, transform_indices = @transform_5, window_bounds = array<i64: 16, 1>}, {pipeline_mode = #tpu.pipeline_mode<synchronous>, transform_indices = @transform_6, window_bounds = array<i64: 16, 1>}, {pipeline_mode = #tpu.pipeline_mode<synchronous>, transform_indices = @transform_7, window_bounds = array<i64: 16, 16>}, {pipeline_mode = #tpu.pipeline_mode<synchronous>, transform_indices = @transform_8, window_bounds = array<i64: 16, 1>}, {pipeline_mode = #tpu.pipeline_mode<synchronous>, transform_indices = @transform_9, window_bounds = array<i64: 16, 1>}, {pipeline_mode = #tpu.pipeline_mode<synchronous>, transform_indices = @transform_10, window_bounds = array<i64: 16, 1>}, {pipeline_mode = #tpu.pipeline_mode<synchronous>, transform_indices = @transform_11, window_bounds = array<i64: 16, 9>}, {pipeline_mode = #tpu.pipeline_mode<synchronous>, transform_indices = @transform_12, window_bounds = array<i64: 16, 1>}, {pipeline_mode = #tpu.pipeline_mode<synchronous>, transform_indices = @transform_13, window_bounds = array<i64: 16, 1>}, {pipeline_mode = #tpu.pipeline_mode<synchronous>, transform_indices = @transform_14, window_bounds = array<i64: 16, 1>}, {pipeline_mode = #tpu.pipeline_mode<synchronous>, transform_indices = @transform_15, window_bounds = array<i64: 16, 512>}]} {
    %c0 = arith.constant 0 : index
    %c0_0 = arith.constant 0 : index
    %0 = vector.load %arg1[%c0, %c0_0] : memref<16x512xf32, #tpu.memory_space<vmem>>, vector<16x512xf32>
    %c0_1 = arith.constant 0 : index
    %c0_2 = arith.constant 0 : index
    %1 = vector.load %arg2[%c0_1, %c0_2] : memref<1x512xi32, #tpu.memory_space<vmem>>, vector<1x512xi32>
    %c0_3 = arith.constant 0 : index
    %c0_4 = arith.constant 0 : index
    %2 = vector.load %arg3[%c0_3, %c0_4] : memref<1x512xi32, #tpu.memory_space<vmem>>, vector<1x512xi32>
    %c-1_i32 = arith.constant -1 : i32
    %3 = vector.broadcast %c-1_i32 : i32 to vector<1x512xi32>
    %4 = arith.addi %1, %3 : vector<1x512xi32>
    %c0_i32 = arith.constant 0 : i32
    %5 = vector.broadcast %c0_i32 : i32 to vector<1x512xi32>
    %6 = arith.cmpi sge, %4, %5 : vector<1x512xi32>
    %c-1_i32_5 = arith.constant -1 : i32
    %7 = vector.broadcast %c-1_i32_5 : i32 to vector<1x512xi32>
    %8 = arith.addi %1, %7 : vector<1x512xi32>
    %c16_i32 = arith.constant 16 : i32
    %9 = vector.broadcast %c16_i32 : i32 to vector<1x512xi32>
    %10 = arith.cmpi slt, %8, %9 : vector<1x512xi32>
    %11 = arith.andi %6, %10 : vector<1x512xi1>
    %c-1_i32_6 = arith.constant -1 : i32
    %12 = vector.broadcast %c-1_i32_6 : i32 to vector<1x512xi32>
    %13 = arith.addi %2, %12 : vector<1x512xi32>
    %c0_i32_7 = arith.constant 0 : i32
    %14 = vector.broadcast %c0_i32_7 : i32 to vector<1x512xi32>
    %15 = arith.cmpi sge, %13, %14 : vector<1x512xi32>
    %16 = arith.andi %11, %15 : vector<1x512xi1>
    %c-1_i32_8 = arith.constant -1 : i32
    %17 = vector.broadcast %c-1_i32_8 : i32 to vector<1x512xi32>
    %18 = arith.addi %2, %17 : vector<1x512xi32>
    %c16_i32_9 = arith.constant 16 : i32
    %19 = vector.broadcast %c16_i32_9 : i32 to vector<1x512xi32>
    %20 = arith.cmpi slt, %18, %19 : vector<1x512xi32>
    %21 = arith.andi %16, %20 : vector<1x512xi1>
    %c-1_i32_10 = arith.constant -1 : i32
    %22 = vector.broadcast %c-1_i32_10 : i32 to vector<1x512xi32>
    %23 = arith.addi %1, %22 : vector<1x512xi32>
    %c0_i32_11 = arith.constant 0 : i32
    %24 = vector.broadcast %c0_i32_11 : i32 to vector<1x512xi32>
    %25 = arith.cmpi sge, %23, %24 : vector<1x512xi32>
    %c-1_i32_12 = arith.constant -1 : i32
    %26 = vector.broadcast %c-1_i32_12 : i32 to vector<1x512xi32>
    %27 = arith.addi %1, %26 : vector<1x512xi32>
    %c16_i32_13 = arith.constant 16 : i32
    %28 = vector.broadcast %c16_i32_13 : i32 to vector<1x512xi32>
    %29 = arith.cmpi slt, %27, %28 : vector<1x512xi32>
    %30 = arith.andi %25, %29 : vector<1x512xi1>
    %c0_i32_14 = arith.constant 0 : i32
    %31 = vector.broadcast %c0_i32_14 : i32 to vector<1x512xi32>
    %32 = arith.addi %2, %31 : vector<1x512xi32>
    %c0_i32_15 = arith.constant 0 : i32
    %33 = vector.broadcast %c0_i32_15 : i32 to vector<1x512xi32>
    %34 = arith.cmpi sge, %32, %33 : vector<1x512xi32>
    %35 = arith.andi %30, %34 : vector<1x512xi1>
    %c0_i32_16 = arith.constant 0 : i32
    %36 = vector.broadcast %c0_i32_16 : i32 to vector<1x512xi32>
    %37 = arith.addi %2, %36 : vector<1x512xi32>
    %c16_i32_17 = arith.constant 16 : i32
    %38 = vector.broadcast %c16_i32_17 : i32 to vector<1x512xi32>
    %39 = arith.cmpi slt, %37, %38 : vector<1x512xi32>
    %40 = arith.andi %35, %39 : vector<1x512xi1>
    %c-1_i32_18 = arith.constant -1 : i32
    %41 = vector.broadcast %c-1_i32_18 : i32 to vector<1x512xi32>
    %42 = arith.addi %1, %41 : vector<1x512xi32>
    %c0_i32_19 = arith.constant 0 : i32
    %43 = vector.broadcast %c0_i32_19 : i32 to vector<1x512xi32>
    %44 = arith.cmpi sge, %42, %43 : vector<1x512xi32>
    %c-1_i32_20 = arith.constant -1 : i32
    %45 = vector.broadcast %c-1_i32_20 : i32 to vector<1x512xi32>
    %46 = arith.addi %1, %45 : vector<1x512xi32>
    %c16_i32_21 = arith.constant 16 : i32
    %47 = vector.broadcast %c16_i32_21 : i32 to vector<1x512xi32>
    %48 = arith.cmpi slt, %46, %47 : vector<1x512xi32>
    %49 = arith.andi %44, %48 : vector<1x512xi1>
    %c1_i32 = arith.constant 1 : i32
    %50 = vector.broadcast %c1_i32 : i32 to vector<1x512xi32>
    %51 = arith.addi %2, %50 : vector<1x512xi32>
    %c0_i32_22 = arith.constant 0 : i32
    %52 = vector.broadcast %c0_i32_22 : i32 to vector<1x512xi32>
    %53 = arith.cmpi sge, %51, %52 : vector<1x512xi32>
    %54 = arith.andi %49, %53 : vector<1x512xi1>
    %c1_i32_23 = arith.constant 1 : i32
    %55 = vector.broadcast %c1_i32_23 : i32 to vector<1x512xi32>
    %56 = arith.addi %2, %55 : vector<1x512xi32>
    %c16_i32_24 = arith.constant 16 : i32
    %57 = vector.broadcast %c16_i32_24 : i32 to vector<1x512xi32>
    %58 = arith.cmpi slt, %56, %57 : vector<1x512xi32>
    %59 = arith.andi %54, %58 : vector<1x512xi1>
    %c0_i32_25 = arith.constant 0 : i32
    %60 = vector.broadcast %c0_i32_25 : i32 to vector<1x512xi32>
    %61 = arith.addi %1, %60 : vector<1x512xi32>
    %c0_i32_26 = arith.constant 0 : i32
    %62 = vector.broadcast %c0_i32_26 : i32 to vector<1x512xi32>
    %63 = arith.cmpi sge, %61, %62 : vector<1x512xi32>
    %c0_i32_27 = arith.constant 0 : i32
    %64 = vector.broadcast %c0_i32_27 : i32 to vector<1x512xi32>
    %65 = arith.addi %1, %64 : vector<1x512xi32>
    %c16_i32_28 = arith.constant 16 : i32
    %66 = vector.broadcast %c16_i32_28 : i32 to vector<1x512xi32>
    %67 = arith.cmpi slt, %65, %66 : vector<1x512xi32>
    %68 = arith.andi %63, %67 : vector<1x512xi1>
    %c-1_i32_29 = arith.constant -1 : i32
    %69 = vector.broadcast %c-1_i32_29 : i32 to vector<1x512xi32>
    %70 = arith.addi %2, %69 : vector<1x512xi32>
    %c0_i32_30 = arith.constant 0 : i32
    %71 = vector.broadcast %c0_i32_30 : i32 to vector<1x512xi32>
    %72 = arith.cmpi sge, %70, %71 : vector<1x512xi32>
    %73 = arith.andi %68, %72 : vector<1x512xi1>
    %c-1_i32_31 = arith.constant -1 : i32
    %74 = vector.broadcast %c-1_i32_31 : i32 to vector<1x512xi32>
    %75 = arith.addi %2, %74 : vector<1x512xi32>
    %c16_i32_32 = arith.constant 16 : i32
    %76 = vector.broadcast %c16_i32_32 : i32 to vector<1x512xi32>
    %77 = arith.cmpi slt, %75, %76 : vector<1x512xi32>
    %78 = arith.andi %73, %77 : vector<1x512xi1>
    %c0_i32_33 = arith.constant 0 : i32
    %79 = vector.broadcast %c0_i32_33 : i32 to vector<1x512xi32>
    %80 = arith.addi %1, %79 : vector<1x512xi32>
    %c0_i32_34 = arith.constant 0 : i32
    %81 = vector.broadcast %c0_i32_34 : i32 to vector<1x512xi32>
    %82 = arith.cmpi sge, %80, %81 : vector<1x512xi32>
    %c0_i32_35 = arith.constant 0 : i32
    %83 = vector.broadcast %c0_i32_35 : i32 to vector<1x512xi32>
    %84 = arith.addi %1, %83 : vector<1x512xi32>
    %c16_i32_36 = arith.constant 16 : i32
    %85 = vector.broadcast %c16_i32_36 : i32 to vector<1x512xi32>
    %86 = arith.cmpi slt, %84, %85 : vector<1x512xi32>
    %87 = arith.andi %82, %86 : vector<1x512xi1>
    %c0_i32_37 = arith.constant 0 : i32
    %88 = vector.broadcast %c0_i32_37 : i32 to vector<1x512xi32>
    %89 = arith.addi %2, %88 : vector<1x512xi32>
    %c0_i32_38 = arith.constant 0 : i32
    %90 = vector.broadcast %c0_i32_38 : i32 to vector<1x512xi32>
    %91 = arith.cmpi sge, %89, %90 : vector<1x512xi32>
    %92 = arith.andi %87, %91 : vector<1x512xi1>
    %c0_i32_39 = arith.constant 0 : i32
    %93 = vector.broadcast %c0_i32_39 : i32 to vector<1x512xi32>
    %94 = arith.addi %2, %93 : vector<1x512xi32>
    %c16_i32_40 = arith.constant 16 : i32
    %95 = vector.broadcast %c16_i32_40 : i32 to vector<1x512xi32>
    %96 = arith.cmpi slt, %94, %95 : vector<1x512xi32>
    %97 = arith.andi %92, %96 : vector<1x512xi1>
    %c0_i32_41 = arith.constant 0 : i32
    %98 = vector.broadcast %c0_i32_41 : i32 to vector<1x512xi32>
    %99 = arith.addi %1, %98 : vector<1x512xi32>
    %c0_i32_42 = arith.constant 0 : i32
    %100 = vector.broadcast %c0_i32_42 : i32 to vector<1x512xi32>
    %101 = arith.cmpi sge, %99, %100 : vector<1x512xi32>
    %c0_i32_43 = arith.constant 0 : i32
    %102 = vector.broadcast %c0_i32_43 : i32 to vector<1x512xi32>
    %103 = arith.addi %1, %102 : vector<1x512xi32>
    %c16_i32_44 = arith.constant 16 : i32
    %104 = vector.broadcast %c16_i32_44 : i32 to vector<1x512xi32>
    %105 = arith.cmpi slt, %103, %104 : vector<1x512xi32>
    %106 = arith.andi %101, %105 : vector<1x512xi1>
    %c1_i32_45 = arith.constant 1 : i32
    %107 = vector.broadcast %c1_i32_45 : i32 to vector<1x512xi32>
    %108 = arith.addi %2, %107 : vector<1x512xi32>
    %c0_i32_46 = arith.constant 0 : i32
    %109 = vector.broadcast %c0_i32_46 : i32 to vector<1x512xi32>
    %110 = arith.cmpi sge, %108, %109 : vector<1x512xi32>
    %111 = arith.andi %106, %110 : vector<1x512xi1>
    %c1_i32_47 = arith.constant 1 : i32
    %112 = vector.broadcast %c1_i32_47 : i32 to vector<1x512xi32>
    %113 = arith.addi %2, %112 : vector<1x512xi32>
    %c16_i32_48 = arith.constant 16 : i32
    %114 = vector.broadcast %c16_i32_48 : i32 to vector<1x512xi32>
    %115 = arith.cmpi slt, %113, %114 : vector<1x512xi32>
    %116 = arith.andi %111, %115 : vector<1x512xi1>
    %c1_i32_49 = arith.constant 1 : i32
    %117 = vector.broadcast %c1_i32_49 : i32 to vector<1x512xi32>
    %118 = arith.addi %1, %117 : vector<1x512xi32>
    %c0_i32_50 = arith.constant 0 : i32
    %119 = vector.broadcast %c0_i32_50 : i32 to vector<1x512xi32>
    %120 = arith.cmpi sge, %118, %119 : vector<1x512xi32>
    %c1_i32_51 = arith.constant 1 : i32
    %121 = vector.broadcast %c1_i32_51 : i32 to vector<1x512xi32>
    %122 = arith.addi %1, %121 : vector<1x512xi32>
    %c16_i32_52 = arith.constant 16 : i32
    %123 = vector.broadcast %c16_i32_52 : i32 to vector<1x512xi32>
    %124 = arith.cmpi slt, %122, %123 : vector<1x512xi32>
    %125 = arith.andi %120, %124 : vector<1x512xi1>
    %c-1_i32_53 = arith.constant -1 : i32
    %126 = vector.broadcast %c-1_i32_53 : i32 to vector<1x512xi32>
    %127 = arith.addi %2, %126 : vector<1x512xi32>
    %c0_i32_54 = arith.constant 0 : i32
    %128 = vector.broadcast %c0_i32_54 : i32 to vector<1x512xi32>
    %129 = arith.cmpi sge, %127, %128 : vector<1x512xi32>
    %130 = arith.andi %125, %129 : vector<1x512xi1>
    %c-1_i32_55 = arith.constant -1 : i32
    %131 = vector.broadcast %c-1_i32_55 : i32 to vector<1x512xi32>
    %132 = arith.addi %2, %131 : vector<1x512xi32>
    %c16_i32_56 = arith.constant 16 : i32
    %133 = vector.broadcast %c16_i32_56 : i32 to vector<1x512xi32>
    %134 = arith.cmpi slt, %132, %133 : vector<1x512xi32>
    %135 = arith.andi %130, %134 : vector<1x512xi1>
    %c1_i32_57 = arith.constant 1 : i32
    %136 = vector.broadcast %c1_i32_57 : i32 to vector<1x512xi32>
    %137 = arith.addi %1, %136 : vector<1x512xi32>
    %c0_i32_58 = arith.constant 0 : i32
    %138 = vector.broadcast %c0_i32_58 : i32 to vector<1x512xi32>
    %139 = arith.cmpi sge, %137, %138 : vector<1x512xi32>
    %c1_i32_59 = arith.constant 1 : i32
    %140 = vector.broadcast %c1_i32_59 : i32 to vector<1x512xi32>
    %141 = arith.addi %1, %140 : vector<1x512xi32>
    %c16_i32_60 = arith.constant 16 : i32
    %142 = vector.broadcast %c16_i32_60 : i32 to vector<1x512xi32>
    %143 = arith.cmpi slt, %141, %142 : vector<1x512xi32>
    %144 = arith.andi %139, %143 : vector<1x512xi1>
    %c0_i32_61 = arith.constant 0 : i32
    %145 = vector.broadcast %c0_i32_61 : i32 to vector<1x512xi32>
    %146 = arith.addi %2, %145 : vector<1x512xi32>
    %c0_i32_62 = arith.constant 0 : i32
    %147 = vector.broadcast %c0_i32_62 : i32 to vector<1x512xi32>
    %148 = arith.cmpi sge, %146, %147 : vector<1x512xi32>
    %149 = arith.andi %144, %148 : vector<1x512xi1>
    %c0_i32_63 = arith.constant 0 : i32
    %150 = vector.broadcast %c0_i32_63 : i32 to vector<1x512xi32>
    %151 = arith.addi %2, %150 : vector<1x512xi32>
    %c16_i32_64 = arith.constant 16 : i32
    %152 = vector.broadcast %c16_i32_64 : i32 to vector<1x512xi32>
    %153 = arith.cmpi slt, %151, %152 : vector<1x512xi32>
    %154 = arith.andi %149, %153 : vector<1x512xi1>
    %c1_i32_65 = arith.constant 1 : i32
    %155 = vector.broadcast %c1_i32_65 : i32 to vector<1x512xi32>
    %156 = arith.addi %1, %155 : vector<1x512xi32>
    %c0_i32_66 = arith.constant 0 : i32
    %157 = vector.broadcast %c0_i32_66 : i32 to vector<1x512xi32>
    %158 = arith.cmpi sge, %156, %157 : vector<1x512xi32>
    %c1_i32_67 = arith.constant 1 : i32
    %159 = vector.broadcast %c1_i32_67 : i32 to vector<1x512xi32>
    %160 = arith.addi %1, %159 : vector<1x512xi32>
    %c16_i32_68 = arith.constant 16 : i32
    %161 = vector.broadcast %c16_i32_68 : i32 to vector<1x512xi32>
    %162 = arith.cmpi slt, %160, %161 : vector<1x512xi32>
    %163 = arith.andi %158, %162 : vector<1x512xi1>
    %c1_i32_69 = arith.constant 1 : i32
    %164 = vector.broadcast %c1_i32_69 : i32 to vector<1x512xi32>
    %165 = arith.addi %2, %164 : vector<1x512xi32>
    %c0_i32_70 = arith.constant 0 : i32
    %166 = vector.broadcast %c0_i32_70 : i32 to vector<1x512xi32>
    %167 = arith.cmpi sge, %165, %166 : vector<1x512xi32>
    %168 = arith.andi %163, %167 : vector<1x512xi1>
    %c1_i32_71 = arith.constant 1 : i32
    %169 = vector.broadcast %c1_i32_71 : i32 to vector<1x512xi32>
    %170 = arith.addi %2, %169 : vector<1x512xi32>
    %c16_i32_72 = arith.constant 16 : i32
    %171 = vector.broadcast %c16_i32_72 : i32 to vector<1x512xi32>
    %172 = arith.cmpi slt, %170, %171 : vector<1x512xi32>
    %173 = arith.andi %168, %172 : vector<1x512xi1>
    %c0_73 = arith.constant 0 : index
    %c0_74 = arith.constant 0 : index
    %174 = vector.load %arg4[%c0_73, %c0_74] : memref<16x9xf32, #tpu.memory_space<vmem>>, vector<16x9xf32>
    %cst = arith.constant 0.000000e+00 : f32
    %175 = vector.broadcast %cst : f32 to vector<16x512xf32>
    %c17_i32 = arith.constant 17 : i32
    %176 = tpu.dynamic_rotate %0 by %c17_i32 dim 1 : vector<16x512xf32>, i32 -> vector<16x512xf32>
    %177 = vector.extract_strided_slice %174 {offsets = [0, 0], sizes = [16, 1], strides = [1, 1]} : vector<16x9xf32> to vector<16x1xf32>
    %cst_75 = arith.constant 0.000000e+00 : f32
    %178 = vector.shape_cast %21 : vector<1x512xi1> to vector<1x512xi1>
    %179 = vector.broadcast %178 : vector<1x512xi1> to vector<16x512xi1>
    %180 = vector.broadcast %cst_75 : f32 to vector<16x512xf32>
    %181 = arith.select %179, %176, %180 : vector<16x512xi1>, vector<16x512xf32>
    %182 = vector.broadcast %177 : vector<16x1xf32> to vector<16x512xf32>
    %183 = arith.mulf %182, %181 : vector<16x512xf32>
    %184 = arith.addf %175, %183 : vector<16x512xf32>
    %c16_i32_76 = arith.constant 16 : i32
    %185 = tpu.dynamic_rotate %0 by %c16_i32_76 dim 1 : vector<16x512xf32>, i32 -> vector<16x512xf32>
    %186 = vector.extract_strided_slice %174 {offsets = [0, 1], sizes = [16, 1], strides = [1, 1]} : vector<16x9xf32> to vector<16x1xf32>
    %cst_77 = arith.constant 0.000000e+00 : f32
    %187 = vector.shape_cast %40 : vector<1x512xi1> to vector<1x512xi1>
    %188 = vector.broadcast %187 : vector<1x512xi1> to vector<16x512xi1>
    %189 = vector.broadcast %cst_77 : f32 to vector<16x512xf32>
    %190 = arith.select %188, %185, %189 : vector<16x512xi1>, vector<16x512xf32>
    %191 = vector.broadcast %186 : vector<16x1xf32> to vector<16x512xf32>
    %192 = arith.mulf %191, %190 : vector<16x512xf32>
    %193 = arith.addf %184, %192 : vector<16x512xf32>
    %c15_i32 = arith.constant 15 : i32
    %194 = tpu.dynamic_rotate %0 by %c15_i32 dim 1 : vector<16x512xf32>, i32 -> vector<16x512xf32>
    %195 = vector.extract_strided_slice %174 {offsets = [0, 2], sizes = [16, 1], strides = [1, 1]} : vector<16x9xf32> to vector<16x1xf32>
    %cst_78 = arith.constant 0.000000e+00 : f32
    %196 = vector.shape_cast %59 : vector<1x512xi1> to vector<1x512xi1>
    %197 = vector.broadcast %196 : vector<1x512xi1> to vector<16x512xi1>
    %198 = vector.broadcast %cst_78 : f32 to vector<16x512xf32>
    %199 = arith.select %197, %194, %198 : vector<16x512xi1>, vector<16x512xf32>
    %200 = vector.broadcast %195 : vector<16x1xf32> to vector<16x512xf32>
    %201 = arith.mulf %200, %199 : vector<16x512xf32>
    %202 = arith.addf %193, %201 : vector<16x512xf32>
    %c1_i32_79 = arith.constant 1 : i32
    %203 = tpu.dynamic_rotate %0 by %c1_i32_79 dim 1 : vector<16x512xf32>, i32 -> vector<16x512xf32>
    %204 = vector.extract_strided_slice %174 {offsets = [0, 3], sizes = [16, 1], strides = [1, 1]} : vector<16x9xf32> to vector<16x1xf32>
    %cst_80 = arith.constant 0.000000e+00 : f32
    %205 = vector.shape_cast %78 : vector<1x512xi1> to vector<1x512xi1>
    %206 = vector.broadcast %205 : vector<1x512xi1> to vector<16x512xi1>
    %207 = vector.broadcast %cst_80 : f32 to vector<16x512xf32>
    %208 = arith.select %206, %203, %207 : vector<16x512xi1>, vector<16x512xf32>
    %209 = vector.broadcast %204 : vector<16x1xf32> to vector<16x512xf32>
    %210 = arith.mulf %209, %208 : vector<16x512xf32>
    %211 = arith.addf %202, %210 : vector<16x512xf32>
    %212 = vector.extract_strided_slice %174 {offsets = [0, 4], sizes = [16, 1], strides = [1, 1]} : vector<16x9xf32> to vector<16x1xf32>
    %cst_81 = arith.constant 0.000000e+00 : f32
    %213 = vector.shape_cast %97 : vector<1x512xi1> to vector<1x512xi1>
    %214 = vector.broadcast %213 : vector<1x512xi1> to vector<16x512xi1>
    %215 = vector.broadcast %cst_81 : f32 to vector<16x512xf32>
    %216 = arith.select %214, %0, %215 : vector<16x512xi1>, vector<16x512xf32>
    %217 = vector.broadcast %212 : vector<16x1xf32> to vector<16x512xf32>
    %218 = arith.mulf %217, %216 : vector<16x512xf32>
    %219 = arith.addf %211, %218 : vector<16x512xf32>
    %c511_i32 = arith.constant 511 : i32
    %220 = tpu.dynamic_rotate %0 by %c511_i32 dim 1 : vector<16x512xf32>, i32 -> vector<16x512xf32>
    %221 = vector.extract_strided_slice %174 {offsets = [0, 5], sizes = [16, 1], strides = [1, 1]} : vector<16x9xf32> to vector<16x1xf32>
    %cst_82 = arith.constant 0.000000e+00 : f32
    %222 = vector.shape_cast %116 : vector<1x512xi1> to vector<1x512xi1>
    %223 = vector.broadcast %222 : vector<1x512xi1> to vector<16x512xi1>
    %224 = vector.broadcast %cst_82 : f32 to vector<16x512xf32>
    %225 = arith.select %223, %220, %224 : vector<16x512xi1>, vector<16x512xf32>
    %226 = vector.broadcast %221 : vector<16x1xf32> to vector<16x512xf32>
    %227 = arith.mulf %226, %225 : vector<16x512xf32>
    %228 = arith.addf %219, %227 : vector<16x512xf32>
    %c497_i32 = arith.constant 497 : i32
    %229 = tpu.dynamic_rotate %0 by %c497_i32 dim 1 : vector<16x512xf32>, i32 -> vector<16x512xf32>
    %230 = vector.extract_strided_slice %174 {offsets = [0, 6], sizes = [16, 1], strides = [1, 1]} : vector<16x9xf32> to vector<16x1xf32>
    %cst_83 = arith.constant 0.000000e+00 : f32
    %231 = vector.shape_cast %135 : vector<1x512xi1> to vector<1x512xi1>
    %232 = vector.broadcast %231 : vector<1x512xi1> to vector<16x512xi1>
    %233 = vector.broadcast %cst_83 : f32 to vector<16x512xf32>
    %234 = arith.select %232, %229, %233 : vector<16x512xi1>, vector<16x512xf32>
    %235 = vector.broadcast %230 : vector<16x1xf32> to vector<16x512xf32>
    %236 = arith.mulf %235, %234 : vector<16x512xf32>
    %237 = arith.addf %228, %236 : vector<16x512xf32>
    %c496_i32 = arith.constant 496 : i32
    %238 = tpu.dynamic_rotate %0 by %c496_i32 dim 1 : vector<16x512xf32>, i32 -> vector<16x512xf32>
    %239 = vector.extract_strided_slice %174 {offsets = [0, 7], sizes = [16, 1], strides = [1, 1]} : vector<16x9xf32> to vector<16x1xf32>
    %cst_84 = arith.constant 0.000000e+00 : f32
    %240 = vector.shape_cast %154 : vector<1x512xi1> to vector<1x512xi1>
    %241 = vector.broadcast %240 : vector<1x512xi1> to vector<16x512xi1>
    %242 = vector.broadcast %cst_84 : f32 to vector<16x512xf32>
    %243 = arith.select %241, %238, %242 : vector<16x512xi1>, vector<16x512xf32>
    %244 = vector.broadcast %239 : vector<16x1xf32> to vector<16x512xf32>
    %245 = arith.mulf %244, %243 : vector<16x512xf32>
    %246 = arith.addf %237, %245 : vector<16x512xf32>
    %c495_i32 = arith.constant 495 : i32
    %247 = tpu.dynamic_rotate %0 by %c495_i32 dim 1 : vector<16x512xf32>, i32 -> vector<16x512xf32>
    %248 = vector.extract_strided_slice %174 {offsets = [0, 8], sizes = [16, 1], strides = [1, 1]} : vector<16x9xf32> to vector<16x1xf32>
    %cst_85 = arith.constant 0.000000e+00 : f32
    %249 = vector.shape_cast %173 : vector<1x512xi1> to vector<1x512xi1>
    %250 = vector.broadcast %249 : vector<1x512xi1> to vector<16x512xi1>
    %251 = vector.broadcast %cst_85 : f32 to vector<16x512xf32>
    %252 = arith.select %250, %247, %251 : vector<16x512xi1>, vector<16x512xf32>
    %253 = vector.broadcast %248 : vector<16x1xf32> to vector<16x512xf32>
    %254 = arith.mulf %253, %252 : vector<16x512xf32>
    %255 = arith.addf %246, %254 : vector<16x512xf32>
    %c0_86 = arith.constant 0 : index
    %c0_87 = arith.constant 0 : index
    %256 = vector.load %arg5[%c0_86, %c0_87] : memref<16x1xf32, #tpu.memory_space<vmem>>, vector<16x1xf32>
    %257 = vector.broadcast %256 : vector<16x1xf32> to vector<16x512xf32>
    %258 = arith.addf %255, %257 : vector<16x512xf32>
    %cst_88 = arith.constant dense<0.000000e+00> : vector<16xf32>
    %259 = vector.multi_reduction <add>, %258, %cst_88 [1] : vector<16x512xf32> to vector<16xf32>
    %260 = vector.shape_cast %259 : vector<16xf32> to vector<16x1xf32>
    %cst_89 = arith.constant 0.001953125 : f32
    %261 = vector.broadcast %cst_89 : f32 to vector<16x1xf32>
    %262 = arith.mulf %260, %261 : vector<16x1xf32>
    %263 = arith.mulf %258, %258 : vector<16x512xf32>
    %cst_90 = arith.constant dense<0.000000e+00> : vector<16xf32>
    %264 = vector.multi_reduction <add>, %263, %cst_90 [1] : vector<16x512xf32> to vector<16xf32>
    %265 = vector.shape_cast %264 : vector<16xf32> to vector<16x1xf32>
    %cst_91 = arith.constant 0.001953125 : f32
    %266 = vector.broadcast %cst_91 : f32 to vector<16x1xf32>
    %267 = arith.mulf %265, %266 : vector<16x1xf32>
    %268 = arith.mulf %262, %262 : vector<16x1xf32>
    %269 = arith.subf %267, %268 : vector<16x1xf32>
    %c0_92 = arith.constant 0 : index
    %c0_93 = arith.constant 0 : index
    %270 = vector.load %arg6[%c0_92, %c0_93] : memref<16x1xf32, #tpu.memory_space<vmem>>, vector<16x1xf32>
    %cst_94 = arith.constant 9.99999974E-6 : f32
    %271 = vector.broadcast %cst_94 : f32 to vector<16x1xf32>
    %272 = arith.addf %269, %271 : vector<16x1xf32>
    %273 = math.rsqrt %272 : vector<16x1xf32>
    %274 = arith.mulf %270, %273 : vector<16x1xf32>
    %c0_95 = arith.constant 0 : index
    %c0_96 = arith.constant 0 : index
    %275 = vector.load %arg7[%c0_95, %c0_96] : memref<16x1xf32, #tpu.memory_space<vmem>>, vector<16x1xf32>
    %276 = arith.mulf %262, %274 : vector<16x1xf32>
    %277 = arith.subf %275, %276 : vector<16x1xf32>
    %c0_97 = arith.constant 0 : index
    %c0_98 = arith.constant 0 : index
    %278 = vector.load %arg8[%c0_97, %c0_98] : memref<16x16xf32, #tpu.memory_space<vmem>>, vector<16x16xf32>
    %cst_99 = arith.constant 0.000000e+00 : f32
    %279 = vector.broadcast %cst_99 : f32 to vector<16x512xf32>
    %c0_100 = arith.constant 0 : index
    %c0_101 = arith.constant 0 : index
    %280 = vector.load %arg9[%c0_100, %c0_101] : memref<16x1xf32, #tpu.memory_space<vmem>>, vector<16x1xf32>
    %281 = vector.extract_strided_slice %278 {offsets = [0, 0], sizes = [16, 1], strides = [1, 1]} : vector<16x16xf32> to vector<16x1xf32>
    %282 = vector.extract_strided_slice %274 {offsets = [0, 0], sizes = [1, 1], strides = [1, 1]} : vector<16x1xf32> to vector<1x1xf32>
    %283 = vector.broadcast %282 : vector<1x1xf32> to vector<16x1xf32>
    %284 = arith.mulf %281, %283 : vector<16x1xf32>
    %285 = vector.extract_strided_slice %258 {offsets = [0, 0], sizes = [1, 512], strides = [1, 1]} : vector<16x512xf32> to vector<1x512xf32>
    %286 = vector.broadcast %284 : vector<16x1xf32> to vector<16x512xf32>
    %287 = vector.broadcast %285 : vector<1x512xf32> to vector<16x512xf32>
    %288 = arith.mulf %286, %287 : vector<16x512xf32>
    %289 = arith.addf %279, %288 : vector<16x512xf32>
    %290 = vector.extract_strided_slice %277 {offsets = [0, 0], sizes = [1, 1], strides = [1, 1]} : vector<16x1xf32> to vector<1x1xf32>
    %291 = vector.broadcast %290 : vector<1x1xf32> to vector<16x1xf32>
    %292 = arith.mulf %281, %291 : vector<16x1xf32>
    %293 = arith.addf %280, %292 : vector<16x1xf32>
    %294 = vector.extract_strided_slice %278 {offsets = [0, 1], sizes = [16, 1], strides = [1, 1]} : vector<16x16xf32> to vector<16x1xf32>
    %295 = vector.extract_strided_slice %274 {offsets = [1, 0], sizes = [1, 1], strides = [1, 1]} : vector<16x1xf32> to vector<1x1xf32>
    %296 = vector.broadcast %295 : vector<1x1xf32> to vector<16x1xf32>
    %297 = arith.mulf %294, %296 : vector<16x1xf32>
    %298 = vector.extract_strided_slice %258 {offsets = [1, 0], sizes = [1, 512], strides = [1, 1]} : vector<16x512xf32> to vector<1x512xf32>
    %299 = vector.broadcast %297 : vector<16x1xf32> to vector<16x512xf32>
    %300 = vector.broadcast %298 : vector<1x512xf32> to vector<16x512xf32>
    %301 = arith.mulf %299, %300 : vector<16x512xf32>
    %302 = arith.addf %289, %301 : vector<16x512xf32>
    %303 = vector.extract_strided_slice %277 {offsets = [1, 0], sizes = [1, 1], strides = [1, 1]} : vector<16x1xf32> to vector<1x1xf32>
    %304 = vector.broadcast %303 : vector<1x1xf32> to vector<16x1xf32>
    %305 = arith.mulf %294, %304 : vector<16x1xf32>
    %306 = arith.addf %293, %305 : vector<16x1xf32>
    %307 = vector.extract_strided_slice %278 {offsets = [0, 2], sizes = [16, 1], strides = [1, 1]} : vector<16x16xf32> to vector<16x1xf32>
    %308 = vector.extract_strided_slice %274 {offsets = [2, 0], sizes = [1, 1], strides = [1, 1]} : vector<16x1xf32> to vector<1x1xf32>
    %309 = vector.broadcast %308 : vector<1x1xf32> to vector<16x1xf32>
    %310 = arith.mulf %307, %309 : vector<16x1xf32>
    %311 = vector.extract_strided_slice %258 {offsets = [2, 0], sizes = [1, 512], strides = [1, 1]} : vector<16x512xf32> to vector<1x512xf32>
    %312 = vector.broadcast %310 : vector<16x1xf32> to vector<16x512xf32>
    %313 = vector.broadcast %311 : vector<1x512xf32> to vector<16x512xf32>
    %314 = arith.mulf %312, %313 : vector<16x512xf32>
    %315 = arith.addf %302, %314 : vector<16x512xf32>
    %316 = vector.extract_strided_slice %277 {offsets = [2, 0], sizes = [1, 1], strides = [1, 1]} : vector<16x1xf32> to vector<1x1xf32>
    %317 = vector.broadcast %316 : vector<1x1xf32> to vector<16x1xf32>
    %318 = arith.mulf %307, %317 : vector<16x1xf32>
    %319 = arith.addf %306, %318 : vector<16x1xf32>
    %320 = vector.extract_strided_slice %278 {offsets = [0, 3], sizes = [16, 1], strides = [1, 1]} : vector<16x16xf32> to vector<16x1xf32>
    %321 = vector.extract_strided_slice %274 {offsets = [3, 0], sizes = [1, 1], strides = [1, 1]} : vector<16x1xf32> to vector<1x1xf32>
    %322 = vector.broadcast %321 : vector<1x1xf32> to vector<16x1xf32>
    %323 = arith.mulf %320, %322 : vector<16x1xf32>
    %324 = vector.extract_strided_slice %258 {offsets = [3, 0], sizes = [1, 512], strides = [1, 1]} : vector<16x512xf32> to vector<1x512xf32>
    %325 = vector.broadcast %323 : vector<16x1xf32> to vector<16x512xf32>
    %326 = vector.broadcast %324 : vector<1x512xf32> to vector<16x512xf32>
    %327 = arith.mulf %325, %326 : vector<16x512xf32>
    %328 = arith.addf %315, %327 : vector<16x512xf32>
    %329 = vector.extract_strided_slice %277 {offsets = [3, 0], sizes = [1, 1], strides = [1, 1]} : vector<16x1xf32> to vector<1x1xf32>
    %330 = vector.broadcast %329 : vector<1x1xf32> to vector<16x1xf32>
    %331 = arith.mulf %320, %330 : vector<16x1xf32>
    %332 = arith.addf %319, %331 : vector<16x1xf32>
    %333 = vector.extract_strided_slice %278 {offsets = [0, 4], sizes = [16, 1], strides = [1, 1]} : vector<16x16xf32> to vector<16x1xf32>
    %334 = vector.extract_strided_slice %274 {offsets = [4, 0], sizes = [1, 1], strides = [1, 1]} : vector<16x1xf32> to vector<1x1xf32>
    %335 = vector.broadcast %334 : vector<1x1xf32> to vector<16x1xf32>
    %336 = arith.mulf %333, %335 : vector<16x1xf32>
    %337 = vector.extract_strided_slice %258 {offsets = [4, 0], sizes = [1, 512], strides = [1, 1]} : vector<16x512xf32> to vector<1x512xf32>
    %338 = vector.broadcast %336 : vector<16x1xf32> to vector<16x512xf32>
    %339 = vector.broadcast %337 : vector<1x512xf32> to vector<16x512xf32>
    %340 = arith.mulf %338, %339 : vector<16x512xf32>
    %341 = arith.addf %328, %340 : vector<16x512xf32>
    %342 = vector.extract_strided_slice %277 {offsets = [4, 0], sizes = [1, 1], strides = [1, 1]} : vector<16x1xf32> to vector<1x1xf32>
    %343 = vector.broadcast %342 : vector<1x1xf32> to vector<16x1xf32>
    %344 = arith.mulf %333, %343 : vector<16x1xf32>
    %345 = arith.addf %332, %344 : vector<16x1xf32>
    %346 = vector.extract_strided_slice %278 {offsets = [0, 5], sizes = [16, 1], strides = [1, 1]} : vector<16x16xf32> to vector<16x1xf32>
    %347 = vector.extract_strided_slice %274 {offsets = [5, 0], sizes = [1, 1], strides = [1, 1]} : vector<16x1xf32> to vector<1x1xf32>
    %348 = vector.broadcast %347 : vector<1x1xf32> to vector<16x1xf32>
    %349 = arith.mulf %346, %348 : vector<16x1xf32>
    %350 = vector.extract_strided_slice %258 {offsets = [5, 0], sizes = [1, 512], strides = [1, 1]} : vector<16x512xf32> to vector<1x512xf32>
    %351 = vector.broadcast %349 : vector<16x1xf32> to vector<16x512xf32>
    %352 = vector.broadcast %350 : vector<1x512xf32> to vector<16x512xf32>
    %353 = arith.mulf %351, %352 : vector<16x512xf32>
    %354 = arith.addf %341, %353 : vector<16x512xf32>
    %355 = vector.extract_strided_slice %277 {offsets = [5, 0], sizes = [1, 1], strides = [1, 1]} : vector<16x1xf32> to vector<1x1xf32>
    %356 = vector.broadcast %355 : vector<1x1xf32> to vector<16x1xf32>
    %357 = arith.mulf %346, %356 : vector<16x1xf32>
    %358 = arith.addf %345, %357 : vector<16x1xf32>
    %359 = vector.extract_strided_slice %278 {offsets = [0, 6], sizes = [16, 1], strides = [1, 1]} : vector<16x16xf32> to vector<16x1xf32>
    %360 = vector.extract_strided_slice %274 {offsets = [6, 0], sizes = [1, 1], strides = [1, 1]} : vector<16x1xf32> to vector<1x1xf32>
    %361 = vector.broadcast %360 : vector<1x1xf32> to vector<16x1xf32>
    %362 = arith.mulf %359, %361 : vector<16x1xf32>
    %363 = vector.extract_strided_slice %258 {offsets = [6, 0], sizes = [1, 512], strides = [1, 1]} : vector<16x512xf32> to vector<1x512xf32>
    %364 = vector.broadcast %362 : vector<16x1xf32> to vector<16x512xf32>
    %365 = vector.broadcast %363 : vector<1x512xf32> to vector<16x512xf32>
    %366 = arith.mulf %364, %365 : vector<16x512xf32>
    %367 = arith.addf %354, %366 : vector<16x512xf32>
    %368 = vector.extract_strided_slice %277 {offsets = [6, 0], sizes = [1, 1], strides = [1, 1]} : vector<16x1xf32> to vector<1x1xf32>
    %369 = vector.broadcast %368 : vector<1x1xf32> to vector<16x1xf32>
    %370 = arith.mulf %359, %369 : vector<16x1xf32>
    %371 = arith.addf %358, %370 : vector<16x1xf32>
    %372 = vector.extract_strided_slice %278 {offsets = [0, 7], sizes = [16, 1], strides = [1, 1]} : vector<16x16xf32> to vector<16x1xf32>
    %373 = vector.extract_strided_slice %274 {offsets = [7, 0], sizes = [1, 1], strides = [1, 1]} : vector<16x1xf32> to vector<1x1xf32>
    %374 = vector.broadcast %373 : vector<1x1xf32> to vector<16x1xf32>
    %375 = arith.mulf %372, %374 : vector<16x1xf32>
    %376 = vector.extract_strided_slice %258 {offsets = [7, 0], sizes = [1, 512], strides = [1, 1]} : vector<16x512xf32> to vector<1x512xf32>
    %377 = vector.broadcast %375 : vector<16x1xf32> to vector<16x512xf32>
    %378 = vector.broadcast %376 : vector<1x512xf32> to vector<16x512xf32>
    %379 = arith.mulf %377, %378 : vector<16x512xf32>
    %380 = arith.addf %367, %379 : vector<16x512xf32>
    %381 = vector.extract_strided_slice %277 {offsets = [7, 0], sizes = [1, 1], strides = [1, 1]} : vector<16x1xf32> to vector<1x1xf32>
    %382 = vector.broadcast %381 : vector<1x1xf32> to vector<16x1xf32>
    %383 = arith.mulf %372, %382 : vector<16x1xf32>
    %384 = arith.addf %371, %383 : vector<16x1xf32>
    %385 = vector.extract_strided_slice %278 {offsets = [0, 8], sizes = [16, 1], strides = [1, 1]} : vector<16x16xf32> to vector<16x1xf32>
    %386 = vector.extract_strided_slice %274 {offsets = [8, 0], sizes = [1, 1], strides = [1, 1]} : vector<16x1xf32> to vector<1x1xf32>
    %387 = vector.broadcast %386 : vector<1x1xf32> to vector<16x1xf32>
    %388 = arith.mulf %385, %387 : vector<16x1xf32>
    %389 = vector.extract_strided_slice %258 {offsets = [8, 0], sizes = [1, 512], strides = [1, 1]} : vector<16x512xf32> to vector<1x512xf32>
    %390 = vector.broadcast %388 : vector<16x1xf32> to vector<16x512xf32>
    %391 = vector.broadcast %389 : vector<1x512xf32> to vector<16x512xf32>
    %392 = arith.mulf %390, %391 : vector<16x512xf32>
    %393 = arith.addf %380, %392 : vector<16x512xf32>
    %394 = vector.extract_strided_slice %277 {offsets = [8, 0], sizes = [1, 1], strides = [1, 1]} : vector<16x1xf32> to vector<1x1xf32>
    %395 = vector.broadcast %394 : vector<1x1xf32> to vector<16x1xf32>
    %396 = arith.mulf %385, %395 : vector<16x1xf32>
    %397 = arith.addf %384, %396 : vector<16x1xf32>
    %398 = vector.extract_strided_slice %278 {offsets = [0, 9], sizes = [16, 1], strides = [1, 1]} : vector<16x16xf32> to vector<16x1xf32>
    %399 = vector.extract_strided_slice %274 {offsets = [9, 0], sizes = [1, 1], strides = [1, 1]} : vector<16x1xf32> to vector<1x1xf32>
    %400 = vector.broadcast %399 : vector<1x1xf32> to vector<16x1xf32>
    %401 = arith.mulf %398, %400 : vector<16x1xf32>
    %402 = vector.extract_strided_slice %258 {offsets = [9, 0], sizes = [1, 512], strides = [1, 1]} : vector<16x512xf32> to vector<1x512xf32>
    %403 = vector.broadcast %401 : vector<16x1xf32> to vector<16x512xf32>
    %404 = vector.broadcast %402 : vector<1x512xf32> to vector<16x512xf32>
    %405 = arith.mulf %403, %404 : vector<16x512xf32>
    %406 = arith.addf %393, %405 : vector<16x512xf32>
    %407 = vector.extract_strided_slice %277 {offsets = [9, 0], sizes = [1, 1], strides = [1, 1]} : vector<16x1xf32> to vector<1x1xf32>
    %408 = vector.broadcast %407 : vector<1x1xf32> to vector<16x1xf32>
    %409 = arith.mulf %398, %408 : vector<16x1xf32>
    %410 = arith.addf %397, %409 : vector<16x1xf32>
    %411 = vector.extract_strided_slice %278 {offsets = [0, 10], sizes = [16, 1], strides = [1, 1]} : vector<16x16xf32> to vector<16x1xf32>
    %412 = vector.extract_strided_slice %274 {offsets = [10, 0], sizes = [1, 1], strides = [1, 1]} : vector<16x1xf32> to vector<1x1xf32>
    %413 = vector.broadcast %412 : vector<1x1xf32> to vector<16x1xf32>
    %414 = arith.mulf %411, %413 : vector<16x1xf32>
    %415 = vector.extract_strided_slice %258 {offsets = [10, 0], sizes = [1, 512], strides = [1, 1]} : vector<16x512xf32> to vector<1x512xf32>
    %416 = vector.broadcast %414 : vector<16x1xf32> to vector<16x512xf32>
    %417 = vector.broadcast %415 : vector<1x512xf32> to vector<16x512xf32>
    %418 = arith.mulf %416, %417 : vector<16x512xf32>
    %419 = arith.addf %406, %418 : vector<16x512xf32>
    %420 = vector.extract_strided_slice %277 {offsets = [10, 0], sizes = [1, 1], strides = [1, 1]} : vector<16x1xf32> to vector<1x1xf32>
    %421 = vector.broadcast %420 : vector<1x1xf32> to vector<16x1xf32>
    %422 = arith.mulf %411, %421 : vector<16x1xf32>
    %423 = arith.addf %410, %422 : vector<16x1xf32>
    %424 = vector.extract_strided_slice %278 {offsets = [0, 11], sizes = [16, 1], strides = [1, 1]} : vector<16x16xf32> to vector<16x1xf32>
    %425 = vector.extract_strided_slice %274 {offsets = [11, 0], sizes = [1, 1], strides = [1, 1]} : vector<16x1xf32> to vector<1x1xf32>
    %426 = vector.broadcast %425 : vector<1x1xf32> to vector<16x1xf32>
    %427 = arith.mulf %424, %426 : vector<16x1xf32>
    %428 = vector.extract_strided_slice %258 {offsets = [11, 0], sizes = [1, 512], strides = [1, 1]} : vector<16x512xf32> to vector<1x512xf32>
    %429 = vector.broadcast %427 : vector<16x1xf32> to vector<16x512xf32>
    %430 = vector.broadcast %428 : vector<1x512xf32> to vector<16x512xf32>
    %431 = arith.mulf %429, %430 : vector<16x512xf32>
    %432 = arith.addf %419, %431 : vector<16x512xf32>
    %433 = vector.extract_strided_slice %277 {offsets = [11, 0], sizes = [1, 1], strides = [1, 1]} : vector<16x1xf32> to vector<1x1xf32>
    %434 = vector.broadcast %433 : vector<1x1xf32> to vector<16x1xf32>
    %435 = arith.mulf %424, %434 : vector<16x1xf32>
    %436 = arith.addf %423, %435 : vector<16x1xf32>
    %437 = vector.extract_strided_slice %278 {offsets = [0, 12], sizes = [16, 1], strides = [1, 1]} : vector<16x16xf32> to vector<16x1xf32>
    %438 = vector.extract_strided_slice %274 {offsets = [12, 0], sizes = [1, 1], strides = [1, 1]} : vector<16x1xf32> to vector<1x1xf32>
    %439 = vector.broadcast %438 : vector<1x1xf32> to vector<16x1xf32>
    %440 = arith.mulf %437, %439 : vector<16x1xf32>
    %441 = vector.extract_strided_slice %258 {offsets = [12, 0], sizes = [1, 512], strides = [1, 1]} : vector<16x512xf32> to vector<1x512xf32>
    %442 = vector.broadcast %440 : vector<16x1xf32> to vector<16x512xf32>
    %443 = vector.broadcast %441 : vector<1x512xf32> to vector<16x512xf32>
    %444 = arith.mulf %442, %443 : vector<16x512xf32>
    %445 = arith.addf %432, %444 : vector<16x512xf32>
    %446 = vector.extract_strided_slice %277 {offsets = [12, 0], sizes = [1, 1], strides = [1, 1]} : vector<16x1xf32> to vector<1x1xf32>
    %447 = vector.broadcast %446 : vector<1x1xf32> to vector<16x1xf32>
    %448 = arith.mulf %437, %447 : vector<16x1xf32>
    %449 = arith.addf %436, %448 : vector<16x1xf32>
    %450 = vector.extract_strided_slice %278 {offsets = [0, 13], sizes = [16, 1], strides = [1, 1]} : vector<16x16xf32> to vector<16x1xf32>
    %451 = vector.extract_strided_slice %274 {offsets = [13, 0], sizes = [1, 1], strides = [1, 1]} : vector<16x1xf32> to vector<1x1xf32>
    %452 = vector.broadcast %451 : vector<1x1xf32> to vector<16x1xf32>
    %453 = arith.mulf %450, %452 : vector<16x1xf32>
    %454 = vector.extract_strided_slice %258 {offsets = [13, 0], sizes = [1, 512], strides = [1, 1]} : vector<16x512xf32> to vector<1x512xf32>
    %455 = vector.broadcast %453 : vector<16x1xf32> to vector<16x512xf32>
    %456 = vector.broadcast %454 : vector<1x512xf32> to vector<16x512xf32>
    %457 = arith.mulf %455, %456 : vector<16x512xf32>
    %458 = arith.addf %445, %457 : vector<16x512xf32>
    %459 = vector.extract_strided_slice %277 {offsets = [13, 0], sizes = [1, 1], strides = [1, 1]} : vector<16x1xf32> to vector<1x1xf32>
    %460 = vector.broadcast %459 : vector<1x1xf32> to vector<16x1xf32>
    %461 = arith.mulf %450, %460 : vector<16x1xf32>
    %462 = arith.addf %449, %461 : vector<16x1xf32>
    %463 = vector.extract_strided_slice %278 {offsets = [0, 14], sizes = [16, 1], strides = [1, 1]} : vector<16x16xf32> to vector<16x1xf32>
    %464 = vector.extract_strided_slice %274 {offsets = [14, 0], sizes = [1, 1], strides = [1, 1]} : vector<16x1xf32> to vector<1x1xf32>
    %465 = vector.broadcast %464 : vector<1x1xf32> to vector<16x1xf32>
    %466 = arith.mulf %463, %465 : vector<16x1xf32>
    %467 = vector.extract_strided_slice %258 {offsets = [14, 0], sizes = [1, 512], strides = [1, 1]} : vector<16x512xf32> to vector<1x512xf32>
    %468 = vector.broadcast %466 : vector<16x1xf32> to vector<16x512xf32>
    %469 = vector.broadcast %467 : vector<1x512xf32> to vector<16x512xf32>
    %470 = arith.mulf %468, %469 : vector<16x512xf32>
    %471 = arith.addf %458, %470 : vector<16x512xf32>
    %472 = vector.extract_strided_slice %277 {offsets = [14, 0], sizes = [1, 1], strides = [1, 1]} : vector<16x1xf32> to vector<1x1xf32>
    %473 = vector.broadcast %472 : vector<1x1xf32> to vector<16x1xf32>
    %474 = arith.mulf %463, %473 : vector<16x1xf32>
    %475 = arith.addf %462, %474 : vector<16x1xf32>
    %476 = vector.extract_strided_slice %278 {offsets = [0, 15], sizes = [16, 1], strides = [1, 1]} : vector<16x16xf32> to vector<16x1xf32>
    %477 = vector.extract_strided_slice %274 {offsets = [15, 0], sizes = [1, 1], strides = [1, 1]} : vector<16x1xf32> to vector<1x1xf32>
    %478 = vector.broadcast %477 : vector<1x1xf32> to vector<16x1xf32>
    %479 = arith.mulf %476, %478 : vector<16x1xf32>
    %480 = vector.extract_strided_slice %258 {offsets = [15, 0], sizes = [1, 512], strides = [1, 1]} : vector<16x512xf32> to vector<1x512xf32>
    %481 = vector.broadcast %479 : vector<16x1xf32> to vector<16x512xf32>
    %482 = vector.broadcast %480 : vector<1x512xf32> to vector<16x512xf32>
    %483 = arith.mulf %481, %482 : vector<16x512xf32>
    %484 = arith.addf %471, %483 : vector<16x512xf32>
    %485 = vector.extract_strided_slice %277 {offsets = [15, 0], sizes = [1, 1], strides = [1, 1]} : vector<16x1xf32> to vector<1x1xf32>
    %486 = vector.broadcast %485 : vector<1x1xf32> to vector<16x1xf32>
    %487 = arith.mulf %476, %486 : vector<16x1xf32>
    %488 = arith.addf %475, %487 : vector<16x1xf32>
    %489 = vector.broadcast %488 : vector<16x1xf32> to vector<16x512xf32>
    %490 = arith.addf %484, %489 : vector<16x512xf32>
    %cst_102 = arith.constant dense<0.000000e+00> : vector<16xf32>
    %491 = vector.multi_reduction <add>, %490, %cst_102 [1] : vector<16x512xf32> to vector<16xf32>
    %492 = vector.shape_cast %491 : vector<16xf32> to vector<16x1xf32>
    %cst_103 = arith.constant 0.001953125 : f32
    %493 = vector.broadcast %cst_103 : f32 to vector<16x1xf32>
    %494 = arith.mulf %492, %493 : vector<16x1xf32>
    %495 = arith.mulf %490, %490 : vector<16x512xf32>
    %cst_104 = arith.constant dense<0.000000e+00> : vector<16xf32>
    %496 = vector.multi_reduction <add>, %495, %cst_104 [1] : vector<16x512xf32> to vector<16xf32>
    %497 = vector.shape_cast %496 : vector<16xf32> to vector<16x1xf32>
    %cst_105 = arith.constant 0.001953125 : f32
    %498 = vector.broadcast %cst_105 : f32 to vector<16x1xf32>
    %499 = arith.mulf %497, %498 : vector<16x1xf32>
    %500 = arith.mulf %494, %494 : vector<16x1xf32>
    %501 = arith.subf %499, %500 : vector<16x1xf32>
    %502 = vector.broadcast %494 : vector<16x1xf32> to vector<16x512xf32>
    %503 = arith.subf %490, %502 : vector<16x512xf32>
    %c0_106 = arith.constant 0 : index
    %c0_107 = arith.constant 0 : index
    %504 = vector.load %arg10[%c0_106, %c0_107] : memref<16x1xf32, #tpu.memory_space<vmem>>, vector<16x1xf32>
    %cst_108 = arith.constant 9.99999974E-6 : f32
    %505 = vector.broadcast %cst_108 : f32 to vector<16x1xf32>
    %506 = arith.addf %501, %505 : vector<16x1xf32>
    %507 = math.rsqrt %506 : vector<16x1xf32>
    %508 = arith.mulf %504, %507 : vector<16x1xf32>
    %509 = vector.broadcast %508 : vector<16x1xf32> to vector<16x512xf32>
    %510 = arith.mulf %503, %509 : vector<16x512xf32>
    %c0_109 = arith.constant 0 : index
    %c0_110 = arith.constant 0 : index
    %511 = vector.load %arg11[%c0_109, %c0_110] : memref<16x1xf32, #tpu.memory_space<vmem>>, vector<16x1xf32>
    %512 = vector.broadcast %511 : vector<16x1xf32> to vector<16x512xf32>
    %513 = arith.addf %510, %512 : vector<16x512xf32>
    %514 = arith.addf %513, %0 : vector<16x512xf32>
    %cst_111 = arith.constant 0.000000e+00 : f32
    %515 = vector.broadcast %cst_111 : f32 to vector<16x512xf32>
    %516 = arith.maximumf %514, %515 : vector<16x512xf32>
    %c0_112 = arith.constant 0 : index
    %c0_113 = arith.constant 0 : index
    %517 = vector.load %arg12[%c0_112, %c0_113] : memref<16x9xf32, #tpu.memory_space<vmem>>, vector<16x9xf32>
    %cst_114 = arith.constant 0.000000e+00 : f32
    %518 = vector.broadcast %cst_114 : f32 to vector<16x512xf32>
    %c17_i32_115 = arith.constant 17 : i32
    %519 = tpu.dynamic_rotate %516 by %c17_i32_115 dim 1 : vector<16x512xf32>, i32 -> vector<16x512xf32>
    %520 = vector.extract_strided_slice %517 {offsets = [0, 0], sizes = [16, 1], strides = [1, 1]} : vector<16x9xf32> to vector<16x1xf32>
    %cst_116 = arith.constant 0.000000e+00 : f32
    %521 = vector.shape_cast %21 : vector<1x512xi1> to vector<1x512xi1>
    %522 = vector.broadcast %521 : vector<1x512xi1> to vector<16x512xi1>
    %523 = vector.broadcast %cst_116 : f32 to vector<16x512xf32>
    %524 = arith.select %522, %519, %523 : vector<16x512xi1>, vector<16x512xf32>
    %525 = vector.broadcast %520 : vector<16x1xf32> to vector<16x512xf32>
    %526 = arith.mulf %525, %524 : vector<16x512xf32>
    %527 = arith.addf %518, %526 : vector<16x512xf32>
    %c16_i32_117 = arith.constant 16 : i32
    %528 = tpu.dynamic_rotate %516 by %c16_i32_117 dim 1 : vector<16x512xf32>, i32 -> vector<16x512xf32>
    %529 = vector.extract_strided_slice %517 {offsets = [0, 1], sizes = [16, 1], strides = [1, 1]} : vector<16x9xf32> to vector<16x1xf32>
    %cst_118 = arith.constant 0.000000e+00 : f32
    %530 = vector.shape_cast %40 : vector<1x512xi1> to vector<1x512xi1>
    %531 = vector.broadcast %530 : vector<1x512xi1> to vector<16x512xi1>
    %532 = vector.broadcast %cst_118 : f32 to vector<16x512xf32>
    %533 = arith.select %531, %528, %532 : vector<16x512xi1>, vector<16x512xf32>
    %534 = vector.broadcast %529 : vector<16x1xf32> to vector<16x512xf32>
    %535 = arith.mulf %534, %533 : vector<16x512xf32>
    %536 = arith.addf %527, %535 : vector<16x512xf32>
    %c15_i32_119 = arith.constant 15 : i32
    %537 = tpu.dynamic_rotate %516 by %c15_i32_119 dim 1 : vector<16x512xf32>, i32 -> vector<16x512xf32>
    %538 = vector.extract_strided_slice %517 {offsets = [0, 2], sizes = [16, 1], strides = [1, 1]} : vector<16x9xf32> to vector<16x1xf32>
    %cst_120 = arith.constant 0.000000e+00 : f32
    %539 = vector.shape_cast %59 : vector<1x512xi1> to vector<1x512xi1>
    %540 = vector.broadcast %539 : vector<1x512xi1> to vector<16x512xi1>
    %541 = vector.broadcast %cst_120 : f32 to vector<16x512xf32>
    %542 = arith.select %540, %537, %541 : vector<16x512xi1>, vector<16x512xf32>
    %543 = vector.broadcast %538 : vector<16x1xf32> to vector<16x512xf32>
    %544 = arith.mulf %543, %542 : vector<16x512xf32>
    %545 = arith.addf %536, %544 : vector<16x512xf32>
    %c1_i32_121 = arith.constant 1 : i32
    %546 = tpu.dynamic_rotate %516 by %c1_i32_121 dim 1 : vector<16x512xf32>, i32 -> vector<16x512xf32>
    %547 = vector.extract_strided_slice %517 {offsets = [0, 3], sizes = [16, 1], strides = [1, 1]} : vector<16x9xf32> to vector<16x1xf32>
    %cst_122 = arith.constant 0.000000e+00 : f32
    %548 = vector.shape_cast %78 : vector<1x512xi1> to vector<1x512xi1>
    %549 = vector.broadcast %548 : vector<1x512xi1> to vector<16x512xi1>
    %550 = vector.broadcast %cst_122 : f32 to vector<16x512xf32>
    %551 = arith.select %549, %546, %550 : vector<16x512xi1>, vector<16x512xf32>
    %552 = vector.broadcast %547 : vector<16x1xf32> to vector<16x512xf32>
    %553 = arith.mulf %552, %551 : vector<16x512xf32>
    %554 = arith.addf %545, %553 : vector<16x512xf32>
    %555 = vector.extract_strided_slice %517 {offsets = [0, 4], sizes = [16, 1], strides = [1, 1]} : vector<16x9xf32> to vector<16x1xf32>
    %cst_123 = arith.constant 0.000000e+00 : f32
    %556 = vector.shape_cast %97 : vector<1x512xi1> to vector<1x512xi1>
    %557 = vector.broadcast %556 : vector<1x512xi1> to vector<16x512xi1>
    %558 = vector.broadcast %cst_123 : f32 to vector<16x512xf32>
    %559 = arith.select %557, %516, %558 : vector<16x512xi1>, vector<16x512xf32>
    %560 = vector.broadcast %555 : vector<16x1xf32> to vector<16x512xf32>
    %561 = arith.mulf %560, %559 : vector<16x512xf32>
    %562 = arith.addf %554, %561 : vector<16x512xf32>
    %c511_i32_124 = arith.constant 511 : i32
    %563 = tpu.dynamic_rotate %516 by %c511_i32_124 dim 1 : vector<16x512xf32>, i32 -> vector<16x512xf32>
    %564 = vector.extract_strided_slice %517 {offsets = [0, 5], sizes = [16, 1], strides = [1, 1]} : vector<16x9xf32> to vector<16x1xf32>
    %cst_125 = arith.constant 0.000000e+00 : f32
    %565 = vector.shape_cast %116 : vector<1x512xi1> to vector<1x512xi1>
    %566 = vector.broadcast %565 : vector<1x512xi1> to vector<16x512xi1>
    %567 = vector.broadcast %cst_125 : f32 to vector<16x512xf32>
    %568 = arith.select %566, %563, %567 : vector<16x512xi1>, vector<16x512xf32>
    %569 = vector.broadcast %564 : vector<16x1xf32> to vector<16x512xf32>
    %570 = arith.mulf %569, %568 : vector<16x512xf32>
    %571 = arith.addf %562, %570 : vector<16x512xf32>
    %c497_i32_126 = arith.constant 497 : i32
    %572 = tpu.dynamic_rotate %516 by %c497_i32_126 dim 1 : vector<16x512xf32>, i32 -> vector<16x512xf32>
    %573 = vector.extract_strided_slice %517 {offsets = [0, 6], sizes = [16, 1], strides = [1, 1]} : vector<16x9xf32> to vector<16x1xf32>
    %cst_127 = arith.constant 0.000000e+00 : f32
    %574 = vector.shape_cast %135 : vector<1x512xi1> to vector<1x512xi1>
    %575 = vector.broadcast %574 : vector<1x512xi1> to vector<16x512xi1>
    %576 = vector.broadcast %cst_127 : f32 to vector<16x512xf32>
    %577 = arith.select %575, %572, %576 : vector<16x512xi1>, vector<16x512xf32>
    %578 = vector.broadcast %573 : vector<16x1xf32> to vector<16x512xf32>
    %579 = arith.mulf %578, %577 : vector<16x512xf32>
    %580 = arith.addf %571, %579 : vector<16x512xf32>
    %c496_i32_128 = arith.constant 496 : i32
    %581 = tpu.dynamic_rotate %516 by %c496_i32_128 dim 1 : vector<16x512xf32>, i32 -> vector<16x512xf32>
    %582 = vector.extract_strided_slice %517 {offsets = [0, 7], sizes = [16, 1], strides = [1, 1]} : vector<16x9xf32> to vector<16x1xf32>
    %cst_129 = arith.constant 0.000000e+00 : f32
    %583 = vector.shape_cast %154 : vector<1x512xi1> to vector<1x512xi1>
    %584 = vector.broadcast %583 : vector<1x512xi1> to vector<16x512xi1>
    %585 = vector.broadcast %cst_129 : f32 to vector<16x512xf32>
    %586 = arith.select %584, %581, %585 : vector<16x512xi1>, vector<16x512xf32>
    %587 = vector.broadcast %582 : vector<16x1xf32> to vector<16x512xf32>
    %588 = arith.mulf %587, %586 : vector<16x512xf32>
    %589 = arith.addf %580, %588 : vector<16x512xf32>
    %c495_i32_130 = arith.constant 495 : i32
    %590 = tpu.dynamic_rotate %516 by %c495_i32_130 dim 1 : vector<16x512xf32>, i32 -> vector<16x512xf32>
    %591 = vector.extract_strided_slice %517 {offsets = [0, 8], sizes = [16, 1], strides = [1, 1]} : vector<16x9xf32> to vector<16x1xf32>
    %cst_131 = arith.constant 0.000000e+00 : f32
    %592 = vector.shape_cast %173 : vector<1x512xi1> to vector<1x512xi1>
    %593 = vector.broadcast %592 : vector<1x512xi1> to vector<16x512xi1>
    %594 = vector.broadcast %cst_131 : f32 to vector<16x512xf32>
    %595 = arith.select %593, %590, %594 : vector<16x512xi1>, vector<16x512xf32>
    %596 = vector.broadcast %591 : vector<16x1xf32> to vector<16x512xf32>
    %597 = arith.mulf %596, %595 : vector<16x512xf32>
    %598 = arith.addf %589, %597 : vector<16x512xf32>
    %c0_132 = arith.constant 0 : index
    %c0_133 = arith.constant 0 : index
    %599 = vector.load %arg13[%c0_132, %c0_133] : memref<16x1xf32, #tpu.memory_space<vmem>>, vector<16x1xf32>
    %600 = vector.broadcast %599 : vector<16x1xf32> to vector<16x512xf32>
    %601 = arith.addf %598, %600 : vector<16x512xf32>
    %cst_134 = arith.constant dense<0.000000e+00> : vector<16xf32>
    %602 = vector.multi_reduction <add>, %601, %cst_134 [1] : vector<16x512xf32> to vector<16xf32>
    %603 = vector.shape_cast %602 : vector<16xf32> to vector<16x1xf32>
    %cst_135 = arith.constant 0.001953125 : f32
    %604 = vector.broadcast %cst_135 : f32 to vector<16x1xf32>
    %605 = arith.mulf %603, %604 : vector<16x1xf32>
    %606 = arith.mulf %601, %601 : vector<16x512xf32>
    %cst_136 = arith.constant dense<0.000000e+00> : vector<16xf32>
    %607 = vector.multi_reduction <add>, %606, %cst_136 [1] : vector<16x512xf32> to vector<16xf32>
    %608 = vector.shape_cast %607 : vector<16xf32> to vector<16x1xf32>
    %cst_137 = arith.constant 0.001953125 : f32
    %609 = vector.broadcast %cst_137 : f32 to vector<16x1xf32>
    %610 = arith.mulf %608, %609 : vector<16x1xf32>
    %611 = arith.mulf %605, %605 : vector<16x1xf32>
    %612 = arith.subf %610, %611 : vector<16x1xf32>
    %613 = vector.broadcast %605 : vector<16x1xf32> to vector<16x512xf32>
    %614 = arith.subf %601, %613 : vector<16x512xf32>
    %c0_138 = arith.constant 0 : index
    %c0_139 = arith.constant 0 : index
    %615 = vector.load %arg14[%c0_138, %c0_139] : memref<16x1xf32, #tpu.memory_space<vmem>>, vector<16x1xf32>
    %cst_140 = arith.constant 9.99999974E-6 : f32
    %616 = vector.broadcast %cst_140 : f32 to vector<16x1xf32>
    %617 = arith.addf %612, %616 : vector<16x1xf32>
    %618 = math.rsqrt %617 : vector<16x1xf32>
    %619 = arith.mulf %615, %618 : vector<16x1xf32>
    %620 = vector.broadcast %619 : vector<16x1xf32> to vector<16x512xf32>
    %621 = arith.mulf %614, %620 : vector<16x512xf32>
    %c0_141 = arith.constant 0 : index
    %c0_142 = arith.constant 0 : index
    %622 = vector.load %arg15[%c0_141, %c0_142] : memref<16x1xf32, #tpu.memory_space<vmem>>, vector<16x1xf32>
    %623 = vector.broadcast %622 : vector<16x1xf32> to vector<16x512xf32>
    %624 = arith.addf %621, %623 : vector<16x512xf32>
    %625 = arith.addf %624, %516 : vector<16x512xf32>
    %626 = arith.addf %625, %0 : vector<16x512xf32>
    %cst_143 = arith.constant 0.000000e+00 : f32
    %627 = vector.broadcast %cst_143 : f32 to vector<16x512xf32>
    %628 = arith.maximumf %626, %627 : vector<16x512xf32>
    %c0_144 = arith.constant 0 : index
    %c0_145 = arith.constant 0 : index
    %629 = vector.load %arg16[%c0_144, %c0_145] : memref<16x512xf32, #tpu.memory_space<vmem>>, vector<16x512xf32>
    tpu.vector_store %arg16[%c0_144, %c0_145], %628 {strides = array<i32>} : memref<16x512xf32, #tpu.memory_space<vmem>>, vector<16x512xf32>,
    return
  }
  func.func @transform_0(%arg0: i32) -> (i32, i32) {
    %c0_i32 = arith.constant 0 : i32
    %c0_i32_0 = arith.constant 0 : i32
    %c0_i32_1 = arith.constant 0 : i32
    return %c0_i32, %c0_i32_0 : i32, i32
  }
  func.func @transform_1(%arg0: i32) -> (i32, i32) {
    %c0_i32 = arith.constant 0 : i32
    %c0_i32_0 = arith.constant 0 : i32
    %c0_i32_1 = arith.constant 0 : i32
    return %c0_i32, %c0_i32_0 : i32, i32
  }
  func.func @transform_2(%arg0: i32) -> (i32, i32) {
    %c0_i32 = arith.constant 0 : i32
    %c0_i32_0 = arith.constant 0 : i32
    %c0_i32_1 = arith.constant 0 : i32
    return %c0_i32, %c0_i32_0 : i32, i32
  }
  func.func @transform_3(%arg0: i32) -> (i32, i32) {
    %c0_i32 = arith.constant 0 : i32
    %c0_i32_0 = arith.constant 0 : i32
    %c0_i32_1 = arith.constant 0 : i32
    return %c0_i32, %c0_i32_0 : i32, i32
  }
  func.func @transform_4(%arg0: i32) -> (i32, i32) {
    %c0_i32 = arith.constant 0 : i32
    %c0_i32_0 = arith.constant 0 : i32
    %c0_i32_1 = arith.constant 0 : i32
    return %c0_i32, %c0_i32_0 : i32, i32
  }
  func.func @transform_5(%arg0: i32) -> (i32, i32) {
    %c0_i32 = arith.constant 0 : i32
    %c0_i32_0 = arith.constant 0 : i32
    %c0_i32_1 = arith.constant 0 : i32
    return %c0_i32, %c0_i32_0 : i32, i32
  }
  func.func @transform_6(%arg0: i32) -> (i32, i32) {
    %c0_i32 = arith.constant 0 : i32
    %c0_i32_0 = arith.constant 0 : i32
    %c0_i32_1 = arith.constant 0 : i32
    return %c0_i32, %c0_i32_0 : i32, i32
  }
  func.func @transform_7(%arg0: i32) -> (i32, i32) {
    %c0_i32 = arith.constant 0 : i32
    %c0_i32_0 = arith.constant 0 : i32
    %c0_i32_1 = arith.constant 0 : i32
    return %c0_i32, %c0_i32_0 : i32, i32
  }
  func.func @transform_8(%arg0: i32) -> (i32, i32) {
    %c0_i32 = arith.constant 0 : i32
    %c0_i32_0 = arith.constant 0 : i32
    %c0_i32_1 = arith.constant 0 : i32
    return %c0_i32, %c0_i32_0 : i32, i32
  }
  func.func @transform_9(%arg0: i32) -> (i32, i32) {
    %c0_i32 = arith.constant 0 : i32
    %c0_i32_0 = arith.constant 0 : i32
    %c0_i32_1 = arith.constant 0 : i32
    return %c0_i32, %c0_i32_0 : i32, i32
  }
  func.func @transform_10(%arg0: i32) -> (i32, i32) {
    %c0_i32 = arith.constant 0 : i32
    %c0_i32_0 = arith.constant 0 : i32
    %c0_i32_1 = arith.constant 0 : i32
    return %c0_i32, %c0_i32_0 : i32, i32
  }
  func.func @transform_11(%arg0: i32) -> (i32, i32) {
    %c0_i32 = arith.constant 0 : i32
    %c0_i32_0 = arith.constant 0 : i32
    %c0_i32_1 = arith.constant 0 : i32
    return %c0_i32, %c0_i32_0 : i32, i32
  }
  func.func @transform_12(%arg0: i32) -> (i32, i32) {
    %c0_i32 = arith.constant 0 : i32
    %c0_i32_0 = arith.constant 0 : i32
    %c0_i32_1 = arith.constant 0 : i32
    return %c0_i32, %c0_i32_0 : i32, i32
  }
  func.func @transform_13(%arg0: i32) -> (i32, i32) {
    %c0_i32 = arith.constant 0 : i32
    %c0_i32_0 = arith.constant 0 : i32
    %c0_i32_1 = arith.constant 0 : i32
    return %c0_i32, %c0_i32_0 : i32, i32
  }
  func.func @transform_14(%arg0: i32) -> (i32, i32) {
    %c0_i32 = arith.constant 0 : i32
    %c0_i32_0 = arith.constant 0 : i32
    %c0_i32_1 = arith.constant 0 : i32
    return %c0_i32, %c0_i32_0 : i32, i32
  }
  func.func @transform_15(%arg0: i32) -> (i32, i32) {
    %c0_i32 = arith.constant 0 : i32
    %c0_i32_0 = arith.constant 0 : i32
    %c0_i32_1 = arith.constant 0 : i32
    return %c0_i32, %c0_i32_0 : i32, i32
  }
}

</mosaic_0001>

<llo_original>
// kernel: tpu_custom_call.1
$region0: #{tpu_custom_call.1}
  #allocation0 [shape = 'u32[]', space=smem, size = 0x4, offset = 0x4, fixed_abs, tag = 'smem constant byte address 0x4 - core index']
  #allocation1 [shape = 'u32[144,128]{1,0:T(1,128)}', space=vmem, size = 0x12000, scoped, tag = 'internal scratch']
  %s0 = inlined_call_operand.vmem [shape: f32[16,512], index: 0, kind: input, shape index: {}]
  %s1 = inlined_call_operand.vmem [shape: s32[1,512], index: 1, kind: input, shape index: {}]
  %s2 = inlined_call_operand.vmem [shape: s32[1,512], index: 2, kind: input, shape index: {}]
  %s3 = inlined_call_operand.vmem [shape: f32[16,9], index: 3, kind: input, shape index: {}]
  %s4 = inlined_call_operand.vmem [shape: f32[16,1], index: 4, kind: input, shape index: {}]
  %s5 = inlined_call_operand.vmem [shape: f32[16,1], index: 5, kind: input, shape index: {}]
  %s6 = inlined_call_operand.vmem [shape: f32[16,1], index: 6, kind: input, shape index: {}]
  %s7 = inlined_call_operand.vmem [shape: f32[16,16], index: 7, kind: input, shape index: {}]
  %s8 = inlined_call_operand.vmem [shape: f32[16,1], index: 8, kind: input, shape index: {}]
  %s9 = inlined_call_operand.vmem [shape: f32[16,1], index: 9, kind: input, shape index: {}]
  %s10 = inlined_call_operand.vmem [shape: f32[16,1], index: 10, kind: input, shape index: {}]
  %s11 = inlined_call_operand.vmem [shape: f32[16,9], index: 11, kind: input, shape index: {}]
  %s12 = inlined_call_operand.vmem [shape: f32[16,1], index: 12, kind: input, shape index: {}]
  %s13 = inlined_call_operand.vmem [shape: f32[16,1], index: 13, kind: input, shape index: {}]
  %s14 = inlined_call_operand.vmem [shape: f32[16,1], index: 14, kind: input, shape index: {}]
  %s15 = inlined_call_operand.hbm [shape: f32[16,512], index: 15, kind: output, shape index: {}]
  %s16 = sld [smem:[#allocation0]]
  $region70: #{tpu_custom_call.1} parent=0
    _
  %s18 = ssub.s32 1, %s16
  %s19 = scalar_select 0, %s18, %s16
  $region1: #{tpu_custom_call.1} parent=0
    #allocation2 [shape = 'u8[32768]{0}', space=vmem, size = 0x8000, scoped, tag = 'output window, operand 0, single buffered']
    #allocation3 [shape = 's32[1]{0}', space=sflag, size = 0x4, scoped, tag = 'scoped memory for tpu_custom_call.1']
    %20 = vsyncpa [#allocation3], 0
    // Predicated region
    $region2: #{tpu_custom_call.1} parent=1 // pred_check
      _
    $region3: #{tpu_custom_call.1} parent=1 // pred_check_branch
      %22 = sbr.rel (0) target = $region5
    $region4: #{tpu_custom_call.1} parent=1 // pred_region
      _
    $region5: #{tpu_custom_call.1} parent=1 // pred_fallthru
      _
    // Predicated region
    $region6: #{tpu_custom_call.1} parent=1 // pred_check
      _
    $region7: #{tpu_custom_call.1} parent=1 // pred_check_branch
      %24 = sbr.rel (0) target = $region9
    $region8: #{tpu_custom_call.1} parent=1 // pred_region
      _
    $region9: #{tpu_custom_call.1} parent=1 // pred_fallthru
      _
    // Predicated region
    $region10: #{tpu_custom_call.1} parent=1 // pred_check
      _
    $region11: #{tpu_custom_call.1} parent=1 // pred_check_branch
      %26 = sbr.rel (0) target = $region13
    $region12: #{tpu_custom_call.1} parent=1 // pred_region
      _
    $region13: #{tpu_custom_call.1} parent=1 // pred_fallthru
      _
    // Predicated region
    $region14: #{tpu_custom_call.1} parent=1 // pred_check
      _
    $region15: #{tpu_custom_call.1} parent=1 // pred_check_branch
      %28 = sbr.rel (0) target = $region17
    $region16: #{tpu_custom_call.1} parent=1 // pred_region
      _
    $region17: #{tpu_custom_call.1} parent=1 // pred_fallthru
      _
    // Predicated region
    $region18: #{tpu_custom_call.1} parent=1 // pred_check
      _
    $region19: #{tpu_custom_call.1} parent=1 // pred_check_branch
      %30 = sbr.rel (0) target = $region21
    $region20: #{tpu_custom_call.1} parent=1 // pred_region
      _
    $region21: #{tpu_custom_call.1} parent=1 // pred_fallthru
      _
    // Predicated region
    $region22: #{tpu_custom_call.1} parent=1 // pred_check
      _
    $region23: #{tpu_custom_call.1} parent=1 // pred_check_branch
      %32 = sbr.rel (0) target = $region25
    $region24: #{tpu_custom_call.1} parent=1 // pred_region
      _
    $region25: #{tpu_custom_call.1} parent=1 // pred_fallthru
      _
    // Predicated region
    $region26: #{tpu_custom_call.1} parent=1 // pred_check
      _
    $region27: #{tpu_custom_call.1} parent=1 // pred_check_branch
      %34 = sbr.rel (0) target = $region29
    $region28: #{tpu_custom_call.1} parent=1 // pred_region
      _
    $region29: #{tpu_custom_call.1} parent=1 // pred_fallthru
      _
    // Predicated region
    $region30: #{tpu_custom_call.1} parent=1 // pred_check
      _
    $region31: #{tpu_custom_call.1} parent=1 // pred_check_branch
      %36 = sbr.rel (0) target = $region33
    $region32: #{tpu_custom_call.1} parent=1 // pred_region
      _
    $region33: #{tpu_custom_call.1} parent=1 // pred_fallthru
      _
    // Predicated region
    $region34: #{tpu_custom_call.1} parent=1 // pred_check
      _
    $region35: #{tpu_custom_call.1} parent=1 // pred_check_branch
      %38 = sbr.rel (0) target = $region37
    $region36: #{tpu_custom_call.1} parent=1 // pred_region
      _
    $region37: #{tpu_custom_call.1} parent=1 // pred_fallthru
      _
    // Predicated region
    $region38: #{tpu_custom_call.1} parent=1 // pred_check
      _
    $region39: #{tpu_custom_call.1} parent=1 // pred_check_branch
      %40 = sbr.rel (0) target = $region41
    $region40: #{tpu_custom_call.1} parent=1 // pred_region
      _
    $region41: #{tpu_custom_call.1} parent=1 // pred_fallthru
      _
    // Predicated region
    $region42: #{tpu_custom_call.1} parent=1 // pred_check
      _
    $region43: #{tpu_custom_call.1} parent=1 // pred_check_branch
      %42 = sbr.rel (0) target = $region45
    $region44: #{tpu_custom_call.1} parent=1 // pred_region
      _
    $region45: #{tpu_custom_call.1} parent=1 // pred_fallthru
      _
    // Predicated region
    $region46: #{tpu_custom_call.1} parent=1 // pred_check
      _
    $region47: #{tpu_custom_call.1} parent=1 // pred_check_branch
      %44 = sbr.rel (0) target = $region49
    $region48: #{tpu_custom_call.1} parent=1 // pred_region
      _
    $region49: #{tpu_custom_call.1} parent=1 // pred_fallthru
      _
    // Predicated region
    $region50: #{tpu_custom_call.1} parent=1 // pred_check
      _
    $region51: #{tpu_custom_call.1} parent=1 // pred_check_branch
      %46 = sbr.rel (0) target = $region53
    $region52: #{tpu_custom_call.1} parent=1 // pred_region
      _
    $region53: #{tpu_custom_call.1} parent=1 // pred_fallthru
      _
    // Predicated region
    $region54: #{tpu_custom_call.1} parent=1 // pred_check
      _
    $region55: #{tpu_custom_call.1} parent=1 // pred_check_branch
      %48 = sbr.rel (0) target = $region57
    $region56: #{tpu_custom_call.1} parent=1 // pred_region
      _
    $region57: #{tpu_custom_call.1} parent=1 // pred_fallthru
      _
    // Predicated region
    $region58: #{tpu_custom_call.1} parent=1 // pred_check
      _
    $region59: #{tpu_custom_call.1} parent=1 // pred_check_branch
      %50 = sbr.rel (0) target = $region61
    $region60: #{tpu_custom_call.1} parent=1 // pred_region
      _
    $region61: #{tpu_custom_call.1} parent=1 // pred_fallthru
      _
    %v51 = vld [vmem:[%s0] sm:$0xff]
    %v52 = vld [vmem:[%s0 + $0x8] sm:$0xff]
    %v53 = vld [vmem:[%s0 + $0x10] sm:$0xff]
    %v54 = vld [vmem:[%s0 + $0x18] sm:$0xff]
    %v55 = vld [vmem:[%s0 + $0x20] sm:$0xff]
    %v56 = vld [vmem:[%s0 + $0x28] sm:$0xff]
    %v57 = vld [vmem:[%s0 + $0x30] sm:$0xff]
    %v58 = vld [vmem:[%s0 + $0x38] sm:$0xff]
    %v59 = vld [vmem:[%s1] sm:$0xf]
    %v60 = vld [vmem:[%s2] sm:$0xf]
    %v61 = vadd.s32 %v59, 4294967295
    %vm62 = vcmp.ge.s32.totalorder %v61, 0
    %vm63 = vcmp.lt.s32.totalorder %v61, 16
    %vm64 = vmand %vm62, %vm63
    %v65 = vadd.s32 %v60, 4294967295
    %vm66 = vcmp.ge.s32.totalorder %v65, 0
    %vm67 = vmand %vm64, %vm66
    %vm68 = vcmp.lt.s32.totalorder %v65, 16
    %vm69 = vmand %vm67, %vm68
    %vm70 = vcmp.ge.s32.totalorder %v60, 0
    %vm71 = vmand %vm64, %vm70
    %vm72 = vcmp.lt.s32.totalorder %v60, 16
    %vm73 = vmand %vm71, %vm72
    %v74 = vadd.s32 %v60, 1
    %vm75 = vcmp.ge.s32.totalorder %v74, 0
    %vm76 = vmand %vm64, %vm75
    %vm77 = vcmp.lt.s32.totalorder %v74, 16
    %vm78 = vmand %vm76, %vm77
    %vm79 = vcmp.ge.s32.totalorder %v59, 0
    %vm80 = vcmp.lt.s32.totalorder %v59, 16
    %vm81 = vmand %vm79, %vm80
    %vm82 = vmand %vm81, %vm66
    %vm83 = vmand %vm82, %vm68
    %vm84 = vmand %vm81, %vm70
    %vm85 = vmand %vm84, %vm72
    %vm86 = vmand %vm81, %vm75
    %vm87 = vmand %vm86, %vm77
    %v88 = vadd.s32 %v59, 1
    %vm89 = vcmp.ge.s32.totalorder %v88, 0
    %vm90 = vcmp.lt.s32.totalorder %v88, 16
    %vm91 = vmand %vm89, %vm90
    %vm92 = vmand %vm91, %vm66
    %vm93 = vmand %vm92, %vm68
    %vm94 = vmand %vm91, %vm70
    %vm95 = vmand %vm94, %vm72
    %vm96 = vmand %vm91, %vm75
    %vm97 = vmand %vm96, %vm77
    %v98 = vld [vmem:[%s3] sm:$0xff]
    %v99 = vld [vmem:[%s3 + $0x8] sm:$0xff]
    %100 = vrot.lane.b32.xlu0 %v51, 17
    %v101 = vpop.permute.xlu0 %100
    %102 = vrot.lane.b32.xlu0 %v55, 17
    %v103 = vpop.permute.xlu0 %102
    %104 = vrot.lane.b32.xlu0 %v52, 17
    %v105 = vpop.permute.xlu0 %104
    %106 = vrot.lane.b32.xlu0 %v56, 17
    %v107 = vpop.permute.xlu0 %106
    %108 = vrot.lane.b32.xlu0 %v53, 17
    %v109 = vpop.permute.xlu0 %108
    %110 = vrot.lane.b32.xlu0 %v57, 17
    %v111 = vpop.permute.xlu0 %110
    %112 = vrot.lane.b32.xlu0 %v54, 17
    %v113 = vpop.permute.xlu0 %112
    %114 = vrot.lane.b32.xlu0 %v58, 17
    %v115 = vpop.permute.xlu0 %114
    %v116 = vlaneseq
    %v117 = vand.u32 %v116, 127
    %vm118 = vcmp.lt.s32.totalorder %v117, 17
    %v119 = vsel %vm118, %v109, %v113
    %v120 = vsel %vm118, %v111, %v115
    %v121 = vsel %vm118, %v105, %v109
    %v122 = vsel %vm118, %v107, %v111
    %v123 = vsel %vm118, %v101, %v105
    %v124 = vsel %vm118, %v103, %v107
    %v125 = vsel %vm118, %v113, %v101
    %v126 = vsel %vm118, %v115, %v103
    %v127 = vsel %vm69, 1, 0
    %v128 = vlaneseq
    %v129 = vshrl.u32 %v128, 7
    %v130 = vsub.s32 0, %v129
    %v131 = vrot.slane %v127, %v130
    %v132 = vlaneseq
    %v133 = vshrl.u32 %v132, 7
    %v134 = vsub.s32 1, %v133
    %v135 = vrot.slane %v127, %v134
    %v136 = vlaneseq
    %v137 = vshrl.u32 %v136, 7
    %v138 = vsub.s32 2, %v137
    %v139 = vrot.slane %v127, %v138
    %v140 = vlaneseq
    %v141 = vshrl.u32 %v140, 7
    %v142 = vsub.s32 3, %v141
    %v143 = vrot.slane %v127, %v142
    %vm144 = vcmp.eq.s32.totalorder %v131, 1
    %vm145 = vcmp.eq.s32.totalorder %v135, 1
    %vm146 = vcmp.eq.s32.totalorder %v139, 1
    %vm147 = vcmp.eq.s32.totalorder %v143, 1
    %v148 = vsel %vm144, %v125, 0.0
    %v149 = vsel %vm145, %v123, 0.0
    %v150 = vsel %vm146, %v121, 0.0
    %v151 = vsel %vm147, %v119, 0.0
    %v152 = vsel %vm144, %v126, 0.0
    %v153 = vsel %vm145, %v124, 0.0
    %v154 = vsel %vm146, %v122, 0.0
    %v155 = vsel %vm147, %v120, 0.0
    %157 = vset.pattern.permute.xlu0 0
    %158 = vperm.xlu0 %157, %v98
    %v159 = vpop.permute.xlu0 %158
    %162 = vset.pattern.permute.xlu0 0
    %163 = vperm.xlu0 %162, %v99
    %v164 = vpop.permute.xlu0 %163
    %v166 = vmul.f32 %v159, %v148
    %v167 = vmul.f32 %v159, %v149
    %v168 = vmul.f32 %v159, %v150
    %v169 = vmul.f32 %v159, %v151
    %v170 = vmul.f32 %v164, %v152
    %v171 = vmul.f32 %v164, %v153
    %v172 = vmul.f32 %v164, %v154
    %v173 = vmul.f32 %v164, %v155
    %v174 = vadd.f32 %v166, 0.0
    %v175 = vadd.f32 %v167, 0.0
    %v176 = vadd.f32 %v168, 0.0
    %v177 = vadd.f32 %v169, 0.0
    %v178 = vadd.f32 %v170, 0.0
    %v179 = vadd.f32 %v171, 0.0
    %v180 = vadd.f32 %v172, 0.0
    %v181 = vadd.f32 %v173, 0.0
    %182 = vrot.lane.b32.xlu0 %v51, 16
    %v183 = vpop.permute.xlu0 %182
    %184 = vrot.lane.b32.xlu0 %v55, 16
    %v185 = vpop.permute.xlu0 %184
    %186 = vrot.lane.b32.xlu0 %v52, 16
    %v187 = vpop.permute.xlu0 %186
    %188 = vrot.lane.b32.xlu0 %v56, 16
    %v189 = vpop.permute.xlu0 %188
    %190 = vrot.lane.b32.xlu0 %v53, 16
    %v191 = vpop.permute.xlu0 %190
    %192 = vrot.lane.b32.xlu0 %v57, 16
    %v193 = vpop.permute.xlu0 %192
    %194 = vrot.lane.b32.xlu0 %v54, 16
    %v195 = vpop.permute.xlu0 %194
    %196 = vrot.lane.b32.xlu0 %v58, 16
    %v197 = vpop.permute.xlu0 %196
    %vm198 = vcmp.lt.s32.totalorder %v117, 16
    %v199 = vsel %vm198, %v191, %v195
    %v200 = vsel %vm198, %v193, %v197
    %v201 = vsel %vm198, %v187, %v191
    %v202 = vsel %vm198, %v189, %v193
    %v203 = vsel %vm198, %v183, %v187
    %v204 = vsel %vm198, %v185, %v189
    %v205 = vsel %vm198, %v195, %v183
    %v206 = vsel %vm198, %v197, %v185
    %v207 = vsel %vm73, 1, 0
    %v208 = vlaneseq
    %v209 = vshrl.u32 %v208, 7
    %v210 = vsub.s32 0, %v209
    %v211 = vrot.slane %v207, %v210
    %v212 = vlaneseq
    %v213 = vshrl.u32 %v212, 7
    %v214 = vsub.s32 1, %v213
    %v215 = vrot.slane %v207, %v214
    %v216 = vlaneseq
    %v217 = vshrl.u32 %v216, 7
    %v218 = vsub.s32 2, %v217
    %v219 = vrot.slane %v207, %v218
    %v220 = vlaneseq
    %v221 = vshrl.u32 %v220, 7
    %v222 = vsub.s32 3, %v221
    %v223 = vrot.slane %v207, %v222
    %vm224 = vcmp.eq.s32.totalorder %v211, 1
    %vm225 = vcmp.eq.s32.totalorder %v215, 1
    %vm226 = vcmp.eq.s32.totalorder %v219, 1
    %vm227 = vcmp.eq.s32.totalorder %v223, 1
    %v228 = vsel %vm224, %v205, 0.0
    %v229 = vsel %vm225, %v203, 0.0
    %v230 = vsel %vm226, %v201, 0.0
    %v231 = vsel %vm227, %v199, 0.0
    %v232 = vsel %vm224, %v206, 0.0
    %v233 = vsel %vm225, %v204, 0.0
    %v234 = vsel %vm226, %v202, 0.0
    %v235 = vsel %vm227, %v200, 0.0
    %236 = vset.pattern.permute.xlu0 1
    %237 = vperm.xlu0 %236, %v98
    %v238 = vpop.permute.xlu0 %237
    %240 = vset.pattern.permute.xlu0 1
    %241 = vperm.xlu0 %240, %v99
    %v242 = vpop.permute.xlu0 %241
    %v244 = vmul.f32 %v238, %v228
    %v245 = vmul.f32 %v238, %v229
    %v246 = vmul.f32 %v238, %v230
    %v247 = vmul.f32 %v238, %v231
    %v248 = vmul.f32 %v242, %v232
    %v249 = vmul.f32 %v242, %v233
    %v250 = vmul.f32 %v242, %v234
    %v251 = vmul.f32 %v242, %v235
    %v252 = vadd.f32 %v174, %v244
    %v253 = vadd.f32 %v175, %v245
    %v254 = vadd.f32 %v176, %v246
    %v255 = vadd.f32 %v177, %v247
    %v256 = vadd.f32 %v178, %v248
    %v257 = vadd.f32 %v179, %v249
    %v258 = vadd.f32 %v180, %v250
    %v259 = vadd.f32 %v181, %v251
    %260 = vrot.lane.b32.xlu0 %v51, 15
    %v261 = vpop.permute.xlu0 %260
    %262 = vrot.lane.b32.xlu0 %v55, 15
    %v263 = vpop.permute.xlu0 %262
    %264 = vrot.lane.b32.xlu0 %v52, 15
    %v265 = vpop.permute.xlu0 %264
    %266 = vrot.lane.b32.xlu0 %v56, 15
    %v267 = vpop.permute.xlu0 %266
    %268 = vrot.lane.b32.xlu0 %v53, 15
    %v269 = vpop.permute.xlu0 %268
    %270 = vrot.lane.b32.xlu0 %v57, 15
    %v271 = vpop.permute.xlu0 %270
    %272 = vrot.lane.b32.xlu0 %v54, 15
    %v273 = vpop.permute.xlu0 %272
    %274 = vrot.lane.b32.xlu0 %v58, 15
    %v275 = vpop.permute.xlu0 %274
    %vm276 = vcmp.lt.s32.totalorder %v117, 15
    %v277 = vsel %vm276, %v269, %v273
    %v278 = vsel %vm276, %v271, %v275
    %v279 = vsel %vm276, %v265, %v269
    %v280 = vsel %vm276, %v267, %v271
    %v281 = vsel %vm276, %v261, %v265
    %v282 = vsel %vm276, %v263, %v267
    %v283 = vsel %vm276, %v273, %v261
    %v284 = vsel %vm276, %v275, %v263
    %v285 = vsel %vm78, 1, 0
    %v286 = vlaneseq
    %v287 = vshrl.u32 %v286, 7
    %v288 = vsub.s32 0, %v287
    %v289 = vrot.slane %v285, %v288
    %v290 = vlaneseq
    %v291 = vshrl.u32 %v290, 7
    %v292 = vsub.s32 1, %v291
    %v293 = vrot.slane %v285, %v292
    %v294 = vlaneseq
    %v295 = vshrl.u32 %v294, 7
    %v296 = vsub.s32 2, %v295
    %v297 = vrot.slane %v285, %v296
    %v298 = vlaneseq
    %v299 = vshrl.u32 %v298, 7
    %v300 = vsub.s32 3, %v299
    %v301 = vrot.slane %v285, %v300
    %vm302 = vcmp.eq.s32.totalorder %v289, 1
    %vm303 = vcmp.eq.s32.totalorder %v293, 1
    %vm304 = vcmp.eq.s32.totalorder %v297, 1
    %vm305 = vcmp.eq.s32.totalorder %v301, 1
    %v306 = vsel %vm302, %v283, 0.0
    %v307 = vsel %vm303, %v281, 0.0
    %v308 = vsel %vm304, %v279, 0.0
    %v309 = vsel %vm305, %v277, 0.0
    %v310 = vsel %vm302, %v284, 0.0
    %v311 = vsel %vm303, %v282, 0.0
    %v312 = vsel %vm304, %v280, 0.0
    %v313 = vsel %vm305, %v278, 0.0
    %314 = vset.pattern.permute.xlu0 2
    %315 = vperm.xlu0 %314, %v98
    %v316 = vpop.permute.xlu0 %315
    %318 = vset.pattern.permute.xlu0 2
    %319 = vperm.xlu0 %318, %v99
    %v320 = vpop.permute.xlu0 %319
    %v322 = vmul.f32 %v316, %v306
    %v323 = vmul.f32 %v316, %v307
    %v324 = vmul.f32 %v316, %v308
    %v325 = vmul.f32 %v316, %v309
    %v326 = vmul.f32 %v320, %v310
    %v327 = vmul.f32 %v320, %v311
    %v328 = vmul.f32 %v320, %v312
    %v329 = vmul.f32 %v320, %v313
    %v330 = vadd.f32 %v252, %v322
    %v331 = vadd.f32 %v253, %v323
    %v332 = vadd.f32 %v254, %v324
    %v333 = vadd.f32 %v255, %v325
    %v334 = vadd.f32 %v256, %v326
    %v335 = vadd.f32 %v257, %v327
    %v336 = vadd.f32 %v258, %v328
    %v337 = vadd.f32 %v259, %v329
    %338 = vrot.lane.b32.xlu0 %v51, 1
    %v339 = vpop.permute.xlu0 %338
    %340 = vrot.lane.b32.xlu0 %v55, 1
    %v341 = vpop.permute.xlu0 %340
    %342 = vrot.lane.b32.xlu0 %v52, 1
    %v343 = vpop.permute.xlu0 %342
    %344 = vrot.lane.b32.xlu0 %v56, 1
    %v345 = vpop.permute.xlu0 %344
    %346 = vrot.lane.b32.xlu0 %v53, 1
    %v347 = vpop.permute.xlu0 %346
    %348 = vrot.lane.b32.xlu0 %v57, 1
    %v349 = vpop.permute.xlu0 %348
    %350 = vrot.lane.b32.xlu0 %v54, 1
    %v351 = vpop.permute.xlu0 %350
    %352 = vrot.lane.b32.xlu0 %v58, 1
    %v353 = vpop.permute.xlu0 %352
    %vm354 = vcmp.lt.s32.totalorder %v117, 1
    %v355 = vsel %vm354, %v347, %v351
    %v356 = vsel %vm354, %v349, %v353
    %v357 = vsel %vm354, %v343, %v347
    %v358 = vsel %vm354, %v345, %v349
    %v359 = vsel %vm354, %v339, %v343
    %v360 = vsel %vm354, %v341, %v345
    %v361 = vsel %vm354, %v351, %v339
    %v362 = vsel %vm354, %v353, %v341
    %v363 = vsel %vm83, 1, 0
    %v364 = vlaneseq
    %v365 = vshrl.u32 %v364, 7
    %v366 = vsub.s32 0, %v365
    %v367 = vrot.slane %v363, %v366
    %v368 = vlaneseq
    %v369 = vshrl.u32 %v368, 7
    %v370 = vsub.s32 1, %v369
    %v371 = vrot.slane %v363, %v370
    %v372 = vlaneseq
    %v373 = vshrl.u32 %v372, 7
    %v374 = vsub.s32 2, %v373
    %v375 = vrot.slane %v363, %v374
    %v376 = vlaneseq
    %v377 = vshrl.u32 %v376, 7
    %v378 = vsub.s32 3, %v377
    %v379 = vrot.slane %v363, %v378
    %vm380 = vcmp.eq.s32.totalorder %v367, 1
    %vm381 = vcmp.eq.s32.totalorder %v371, 1
    %vm382 = vcmp.eq.s32.totalorder %v375, 1
    %vm383 = vcmp.eq.s32.totalorder %v379, 1
    %v384 = vsel %vm380, %v361, 0.0
    %v385 = vsel %vm381, %v359, 0.0
    %v386 = vsel %vm382, %v357, 0.0
    %v387 = vsel %vm383, %v355, 0.0
    %v388 = vsel %vm380, %v362, 0.0
    %v389 = vsel %vm381, %v360, 0.0
    %v390 = vsel %vm382, %v358, 0.0
    %v391 = vsel %vm383, %v356, 0.0
    %392 = vset.pattern.permute.xlu0 3
    %393 = vperm.xlu0 %392, %v98
    %v394 = vpop.permute.xlu0 %393
    %396 = vset.pattern.permute.xlu0 3
    %397 = vperm.xlu0 %396, %v99
    %v398 = vpop.permute.xlu0 %397
    %v400 = vmul.f32 %v394, %v384
    %v401 = vmul.f32 %v394, %v385
    %v402 = vmul.f32 %v394, %v386
    %v403 = vmul.f32 %v394, %v387
    %v404 = vmul.f32 %v398, %v388
    %v405 = vmul.f32 %v398, %v389
    %v406 = vmul.f32 %v398, %v390
    %v407 = vmul.f32 %v398, %v391
    %v408 = vadd.f32 %v330, %v400
    %v409 = vadd.f32 %v331, %v401
    %v410 = vadd.f32 %v332, %v402
    %v411 = vadd.f32 %v333, %v403
    %v412 = vadd.f32 %v334, %v404
    %v413 = vadd.f32 %v335, %v405
    %v414 = vadd.f32 %v336, %v406
    %v415 = vadd.f32 %v337, %v407
    %v416 = vsel %vm85, 1, 0
    %v417 = vlaneseq
    %v418 = vshrl.u32 %v417, 7
    %v419 = vsub.s32 0, %v418
    %v420 = vrot.slane %v416, %v419
    %v421 = vlaneseq
    %v422 = vshrl.u32 %v421, 7
    %v423 = vsub.s32 1, %v422
    %v424 = vrot.slane %v416, %v423
    %v425 = vlaneseq
    %v426 = vshrl.u32 %v425, 7
    %v427 = vsub.s32 2, %v426
    %v428 = vrot.slane %v416, %v427
    %v429 = vlaneseq
    %v430 = vshrl.u32 %v429, 7
    %v431 = vsub.s32 3, %v430
    %v432 = vrot.slane %v416, %v431
    %vm433 = vcmp.eq.s32.totalorder %v420, 1
    %vm434 = vcmp.eq.s32.totalorder %v424, 1
    %vm435 = vcmp.eq.s32.totalorder %v428, 1
    %vm436 = vcmp.eq.s32.totalorder %v432, 1
    %v437 = vsel %vm433, %v51, 0.0
    %v438 = vsel %vm434, %v52, 0.0
    %v439 = vsel %vm435, %v53, 0.0
    %v440 = vsel %vm436, %v54, 0.0
    %v441 = vsel %vm433, %v55, 0.0
    %v442 = vsel %vm434, %v56, 0.0
    %v443 = vsel %vm435, %v57, 0.0
    %v444 = vsel %vm436, %v58, 0.0
    %445 = vset.pattern.permute.xlu0 4
    %446 = vperm.xlu0 %445, %v98
    %v447 = vpop.permute.xlu0 %446
    %449 = vset.pattern.permute.xlu0 4
    %450 = vperm.xlu0 %449, %v99
    %v451 = vpop.permute.xlu0 %450
    %v453 = vmul.f32 %v447, %v437
    %v454 = vmul.f32 %v447, %v438
    %v455 = vmul.f32 %v447, %v439
    %v456 = vmul.f32 %v447, %v440
    %v457 = vmul.f32 %v451, %v441
    %v458 = vmul.f32 %v451, %v442
    %v459 = vmul.f32 %v451, %v443
    %v460 = vmul.f32 %v451, %v444
    %v461 = vadd.f32 %v408, %v453
    %v462 = vadd.f32 %v409, %v454
    %v463 = vadd.f32 %v410, %v455
    %v464 = vadd.f32 %v411, %v456
    %v465 = vadd.f32 %v412, %v457
    %v466 = vadd.f32 %v413, %v458
    %v467 = vadd.f32 %v414, %v459
    %v468 = vadd.f32 %v415, %v460
    %469 = vrot.lane.b32.xlu0 %v51, 127
    %v470 = vpop.permute.xlu0 %469
    %471 = vrot.lane.b32.xlu0 %v55, 127
    %v472 = vpop.permute.xlu0 %471
    %473 = vrot.lane.b32.xlu0 %v52, 127
    %v474 = vpop.permute.xlu0 %473
    %475 = vrot.lane.b32.xlu0 %v56, 127
    %v476 = vpop.permute.xlu0 %475
    %477 = vrot.lane.b32.xlu0 %v53, 127
    %v478 = vpop.permute.xlu0 %477
    %479 = vrot.lane.b32.xlu0 %v57, 127
    %v480 = vpop.permute.xlu0 %479
    %481 = vrot.lane.b32.xlu0 %v54, 127
    %v482 = vpop.permute.xlu0 %481
    %483 = vrot.lane.b32.xlu0 %v58, 127
    %v484 = vpop.permute.xlu0 %483
    %vm485 = vcmp.lt.s32.totalorder %v117, 127
    %v486 = vsel %vm485, %v478, %v482
    %v487 = vsel %vm485, %v480, %v484
    %v488 = vsel %vm485, %v474, %v478
    %v489 = vsel %vm485, %v476, %v480
    %v490 = vsel %vm485, %v470, %v474
    %v491 = vsel %vm485, %v472, %v476
    %v492 = vsel %vm485, %v482, %v470
    %v493 = vsel %vm485, %v484, %v472
    %v494 = vsel %vm87, 1, 0
    %v495 = vlaneseq
    %v496 = vshrl.u32 %v495, 7
    %v497 = vsub.s32 0, %v496
    %v498 = vrot.slane %v494, %v497
    %v499 = vlaneseq
    %v500 = vshrl.u32 %v499, 7
    %v501 = vsub.s32 1, %v500
    %v502 = vrot.slane %v494, %v501
    %v503 = vlaneseq
    %v504 = vshrl.u32 %v503, 7
    %v505 = vsub.s32 2, %v504
    %v506 = vrot.slane %v494, %v505
    %v507 = vlaneseq
    %v508 = vshrl.u32 %v507, 7
    %v509 = vsub.s32 3, %v508
    %v510 = vrot.slane %v494, %v509
    %vm511 = vcmp.eq.s32.totalorder %v498, 1
    %vm512 = vcmp.eq.s32.totalorder %v502, 1
    %vm513 = vcmp.eq.s32.totalorder %v506, 1
    %vm514 = vcmp.eq.s32.totalorder %v510, 1
    %v515 = vsel %vm511, %v490, 0.0
    %v516 = vsel %vm512, %v488, 0.0
    %v517 = vsel %vm513, %v486, 0.0
    %v518 = vsel %vm514, %v492, 0.0
    %v519 = vsel %vm511, %v491, 0.0
    %v520 = vsel %vm512, %v489, 0.0
    %v521 = vsel %vm513, %v487, 0.0
    %v522 = vsel %vm514, %v493, 0.0
    %523 = vset.pattern.permute.xlu0 5
    %524 = vperm.xlu0 %523, %v98
    %v525 = vpop.permute.xlu0 %524
    %527 = vset.pattern.permute.xlu0 5
    %528 = vperm.xlu0 %527, %v99
    %v529 = vpop.permute.xlu0 %528
    %v531 = vmul.f32 %v525, %v515
    %v532 = vmul.f32 %v525, %v516
    %v533 = vmul.f32 %v525, %v517
    %v534 = vmul.f32 %v525, %v518
    %v535 = vmul.f32 %v529, %v519
    %v536 = vmul.f32 %v529, %v520
    %v537 = vmul.f32 %v529, %v521
    %v538 = vmul.f32 %v529, %v522
    %v539 = vadd.f32 %v461, %v531
    %v540 = vadd.f32 %v462, %v532
    %v541 = vadd.f32 %v463, %v533
    %v542 = vadd.f32 %v464, %v534
    %v543 = vadd.f32 %v465, %v535
    %v544 = vadd.f32 %v466, %v536
    %v545 = vadd.f32 %v467, %v537
    %v546 = vadd.f32 %v468, %v538
    %547 = vrot.lane.b32.xlu0 %v51, 113
    %v548 = vpop.permute.xlu0 %547
    %549 = vrot.lane.b32.xlu0 %v55, 113
    %v550 = vpop.permute.xlu0 %549
    %551 = vrot.lane.b32.xlu0 %v52, 113
    %v552 = vpop.permute.xlu0 %551
    %553 = vrot.lane.b32.xlu0 %v56, 113
    %v554 = vpop.permute.xlu0 %553
    %555 = vrot.lane.b32.xlu0 %v53, 113
    %v556 = vpop.permute.xlu0 %555
    %557 = vrot.lane.b32.xlu0 %v57, 113
    %v558 = vpop.permute.xlu0 %557
    %559 = vrot.lane.b32.xlu0 %v54, 113
    %v560 = vpop.permute.xlu0 %559
    %561 = vrot.lane.b32.xlu0 %v58, 113
    %v562 = vpop.permute.xlu0 %561
    %vm563 = vcmp.lt.s32.totalorder %v117, 113
    %v564 = vsel %vm563, %v556, %v560
    %v565 = vsel %vm563, %v558, %v562
    %v566 = vsel %vm563, %v552, %v556
    %v567 = vsel %vm563, %v554, %v558
    %v568 = vsel %vm563, %v548, %v552
    %v569 = vsel %vm563, %v550, %v554
    %v570 = vsel %vm563, %v560, %v548
    %v571 = vsel %vm563, %v562, %v550
    %v572 = vsel %vm93, 1, 0
    %v573 = vlaneseq
    %v574 = vshrl.u32 %v573, 7
    %v575 = vsub.s32 0, %v574
    %v576 = vrot.slane %v572, %v575
    %v577 = vlaneseq
    %v578 = vshrl.u32 %v577, 7
    %v579 = vsub.s32 1, %v578
    %v580 = vrot.slane %v572, %v579
    %v581 = vlaneseq
    %v582 = vshrl.u32 %v581, 7
    %v583 = vsub.s32 2, %v582
    %v584 = vrot.slane %v572, %v583
    %v585 = vlaneseq
    %v586 = vshrl.u32 %v585, 7
    %v587 = vsub.s32 3, %v586
    %v588 = vrot.slane %v572, %v587
    %vm589 = vcmp.eq.s32.totalorder %v576, 1
    %vm590 = vcmp.eq.s32.totalorder %v580, 1
    %vm591 = vcmp.eq.s32.totalorder %v584, 1
    %vm592 = vcmp.eq.s32.totalorder %v588, 1
    %v593 = vsel %vm589, %v568, 0.0
    %v594 = vsel %vm590, %v566, 0.0
    %v595 = vsel %vm591, %v564, 0.0
    %v596 = vsel %vm592, %v570, 0.0
    %v597 = vsel %vm589, %v569, 0.0
    %v598 = vsel %vm590, %v567, 0.0
    %v599 = vsel %vm591, %v565, 0.0
    %v600 = vsel %vm592, %v571, 0.0
    %601 = vset.pattern.permute.xlu0 6
    %602 = vperm.xlu0 %601, %v98
    %v603 = vpop.permute.xlu0 %602
    %605 = vset.pattern.permute.xlu0 6
    %606 = vperm.xlu0 %605, %v99
    %v607 = vpop.permute.xlu0 %606
    %v609 = vmul.f32 %v603, %v593
    %v610 = vmul.f32 %v603, %v594
    %v611 = vmul.f32 %v603, %v595
    %v612 = vmul.f32 %v603, %v596
    %v613 = vmul.f32 %v607, %v597
    %v614 = vmul.f32 %v607, %v598
    %v615 = vmul.f32 %v607, %v599
    %v616 = vmul.f32 %v607, %v600
    %v617 = vadd.f32 %v539, %v609
    %v618 = vadd.f32 %v540, %v610
    %v619 = vadd.f32 %v541, %v611
    %v620 = vadd.f32 %v542, %v612
    %v621 = vadd.f32 %v543, %v613
    %v622 = vadd.f32 %v544, %v614
    %v623 = vadd.f32 %v545, %v615
    %v624 = vadd.f32 %v546, %v616
    %625 = vrot.lane.b32.xlu0 %v51, 112
    %v626 = vpop.permute.xlu0 %625
    %627 = vrot.lane.b32.xlu0 %v55, 112
    %v628 = vpop.permute.xlu0 %627
    %629 = vrot.lane.b32.xlu0 %v52, 112
    %v630 = vpop.permute.xlu0 %629
    %631 = vrot.lane.b32.xlu0 %v56, 112
    %v632 = vpop.permute.xlu0 %631
    %633 = vrot.lane.b32.xlu0 %v53, 112
    %v634 = vpop.permute.xlu0 %633
    %635 = vrot.lane.b32.xlu0 %v57, 112
    %v636 = vpop.permute.xlu0 %635
    %637 = vrot.lane.b32.xlu0 %v54, 112
    %v638 = vpop.permute.xlu0 %637
    %639 = vrot.lane.b32.xlu0 %v58, 112
    %v640 = vpop.permute.xlu0 %639
    %vm641 = vcmp.lt.s32.totalorder %v117, 112
    %v642 = vsel %vm641, %v634, %v638
    %v643 = vsel %vm641, %v636, %v640
    %v644 = vsel %vm641, %v630, %v634
    %v645 = vsel %vm641, %v632, %v636
    %v646 = vsel %vm641, %v626, %v630
    %v647 = vsel %vm641, %v628, %v632
    %v648 = vsel %vm641, %v638, %v626
    %v649 = vsel %vm641, %v640, %v628
    %v650 = vsel %vm95, 1, 0
    %v651 = vlaneseq
    %v652 = vshrl.u32 %v651, 7
    %v653 = vsub.s32 0, %v652
    %v654 = vrot.slane %v650, %v653
    %v655 = vlaneseq
    %v656 = vshrl.u32 %v655, 7
    %v657 = vsub.s32 1, %v656
    %v658 = vrot.slane %v650, %v657
    %v659 = vlaneseq
    %v660 = vshrl.u32 %v659, 7
    %v661 = vsub.s32 2, %v660
    %v662 = vrot.slane %v650, %v661
    %v663 = vlaneseq
    %v664 = vshrl.u32 %v663, 7
    %v665 = vsub.s32 3, %v664
    %v666 = vrot.slane %v650, %v665
    %vm667 = vcmp.eq.s32.totalorder %v654, 1
    %vm668 = vcmp.eq.s32.totalorder %v658, 1
    %vm669 = vcmp.eq.s32.totalorder %v662, 1
    %vm670 = vcmp.eq.s32.totalorder %v666, 1
    %v671 = vsel %vm667, %v646, 0.0
    %v672 = vsel %vm668, %v644, 0.0
    %v673 = vsel %vm669, %v642, 0.0
    %v674 = vsel %vm670, %v648, 0.0
    %v675 = vsel %vm667, %v647, 0.0
    %v676 = vsel %vm668, %v645, 0.0
    %v677 = vsel %vm669, %v643, 0.0
    %v678 = vsel %vm670, %v649, 0.0
    %679 = vset.pattern.permute.xlu0 7
    %680 = vperm.xlu0 %679, %v98
    %v681 = vpop.permute.xlu0 %680
    %683 = vset.pattern.permute.xlu0 7
    %684 = vperm.xlu0 %683, %v99
    %v685 = vpop.permute.xlu0 %684
    %v687 = vmul.f32 %v681, %v671
    %v688 = vmul.f32 %v681, %v672
    %v689 = vmul.f32 %v681, %v673
    %v690 = vmul.f32 %v681, %v674
    %v691 = vmul.f32 %v685, %v675
    %v692 = vmul.f32 %v685, %v676
    %v693 = vmul.f32 %v685, %v677
    %v694 = vmul.f32 %v685, %v678
    %v695 = vadd.f32 %v617, %v687
    %v696 = vadd.f32 %v618, %v688
    %v697 = vadd.f32 %v619, %v689
    %v698 = vadd.f32 %v620, %v690
    %v699 = vadd.f32 %v621, %v691
    %v700 = vadd.f32 %v622, %v692
    %v701 = vadd.f32 %v623, %v693
    %v702 = vadd.f32 %v624, %v694
    %703 = vrot.lane.b32.xlu0 %v51, 111
    %v704 = vpop.permute.xlu0 %703
    %705 = vrot.lane.b32.xlu0 %v55, 111
    %v706 = vpop.permute.xlu0 %705
    %707 = vrot.lane.b32.xlu0 %v52, 111
    %v708 = vpop.permute.xlu0 %707
    %709 = vrot.lane.b32.xlu0 %v56, 111
    %v710 = vpop.permute.xlu0 %709
    %711 = vrot.lane.b32.xlu0 %v53, 111
    %v712 = vpop.permute.xlu0 %711
    %713 = vrot.lane.b32.xlu0 %v57, 111
    %v714 = vpop.permute.xlu0 %713
    %715 = vrot.lane.b32.xlu0 %v54, 111
    %v716 = vpop.permute.xlu0 %715
    %717 = vrot.lane.b32.xlu0 %v58, 111
    %v718 = vpop.permute.xlu0 %717
    %vm719 = vcmp.lt.s32.totalorder %v117, 111
    %v720 = vsel %vm719, %v712, %v716
    %v721 = vsel %vm719, %v714, %v718
    %v722 = vsel %vm719, %v708, %v712
    %v723 = vsel %vm719, %v710, %v714
    %v724 = vsel %vm719, %v704, %v708
    %v725 = vsel %vm719, %v706, %v710
    %v726 = vsel %vm719, %v716, %v704
    %v727 = vsel %vm719, %v718, %v706
    %v728 = vsel %vm97, 1, 0
    %v729 = vlaneseq
    %v730 = vshrl.u32 %v729, 7
    %v731 = vsub.s32 0, %v730
    %v732 = vrot.slane %v728, %v731
    %v733 = vlaneseq
    %v734 = vshrl.u32 %v733, 7
    %v735 = vsub.s32 1, %v734
    %v736 = vrot.slane %v728, %v735
    %v737 = vlaneseq
    %v738 = vshrl.u32 %v737, 7
    %v739 = vsub.s32 2, %v738
    %v740 = vrot.slane %v728, %v739
    %v741 = vlaneseq
    %v742 = vshrl.u32 %v741, 7
    %v743 = vsub.s32 3, %v742
    %v744 = vrot.slane %v728, %v743
    %vm745 = vcmp.eq.s32.totalorder %v732, 1
    %vm746 = vcmp.eq.s32.totalorder %v736, 1
    %vm747 = vcmp.eq.s32.totalorder %v740, 1
    %vm748 = vcmp.eq.s32.totalorder %v744, 1
    %v749 = vsel %vm745, %v724, 0.0
    %v750 = vsel %vm746, %v722, 0.0
    %v751 = vsel %vm747, %v720, 0.0
    %v752 = vsel %vm748, %v726, 0.0
    %v753 = vsel %vm745, %v725, 0.0
    %v754 = vsel %vm746, %v723, 0.0
    %v755 = vsel %vm747, %v721, 0.0
    %v756 = vsel %vm748, %v727, 0.0
    %757 = vset.pattern.permute.xlu0 8
    %758 = vperm.xlu0 %757, %v98
    %v759 = vpop.permute.xlu0 %758
    %761 = vset.pattern.permute.xlu0 8
    %762 = vperm.xlu0 %761, %v99
    %v763 = vpop.permute.xlu0 %762
    %v765 = vmul.f32 %v759, %v749
    %v766 = vmul.f32 %v759, %v750
    %v767 = vmul.f32 %v759, %v751
    %v768 = vmul.f32 %v759, %v752
    %v769 = vmul.f32 %v763, %v753
    %v770 = vmul.f32 %v763, %v754
    %v771 = vmul.f32 %v763, %v755
    %v772 = vmul.f32 %v763, %v756
    %v773 = vadd.f32 %v695, %v765
    %v774 = vadd.f32 %v696, %v766
    %v775 = vadd.f32 %v697, %v767
    %v776 = vadd.f32 %v698, %v768
    %v777 = vadd.f32 %v699, %v769
    %v778 = vadd.f32 %v700, %v770
    %v779 = vadd.f32 %v701, %v771
    %v780 = vadd.f32 %v702, %v772
    %v781 = vld [vmem:[%s4] sm:$0xff]
    %v782 = vld [vmem:[%s4 + $0x8] sm:$0xff]
    %784 = vset.pattern.permute.xlu0 0
    %785 = vperm.xlu0 %784, %v781
    %v786 = vpop.permute.xlu0 %785
    %789 = vset.pattern.permute.xlu0 0
    %790 = vperm.xlu0 %789, %v782
    %v791 = vpop.permute.xlu0 %790
    %v793 = vadd.f32 %v773, %v786
    %v794 = vadd.f32 %v774, %v786
    %v795 = vadd.f32 %v775, %v786
    %v796 = vadd.f32 %v776, %v786
    %v797 = vadd.f32 %v777, %v791
    %v798 = vadd.f32 %v778, %v791
    %v799 = vadd.f32 %v779, %v791
    %v800 = vadd.f32 %v780, %v791
    %v801 = vadd.f32 %v793, %v794
    %v802 = vadd.f32 %v801, %v795
    %v803 = vadd.f32 %v802, %v796
    %804 = vadd.xlane.f32.xlu0 %v803
    %v805 = vpop.xlane.xlu0 %804
    %v806 = vadd.f32 %v797, %v798
    %v807 = vadd.f32 %v806, %v799
    %v808 = vadd.f32 %v807, %v800
    %809 = vadd.xlane.f32.xlu0 %v808
    %v810 = vpop.xlane.xlu0 %809
    %v811 = vmul.f32 %v805, 0.001953125
    %v812 = vmul.f32 %v810, 0.001953125
    %v813 = vmul.f32 %v793, %v793
    %v814 = vmul.f32 %v794, %v794
    %v815 = vmul.f32 %v795, %v795
    %v816 = vmul.f32 %v796, %v796
    %v817 = vmul.f32 %v797, %v797
    %v818 = vmul.f32 %v798, %v798
    %v819 = vmul.f32 %v799, %v799
    %v820 = vmul.f32 %v800, %v800
    %v821 = vadd.f32 %v813, %v814
    %v822 = vadd.f32 %v821, %v815
    %v823 = vadd.f32 %v822, %v816
    %824 = vadd.xlane.f32.xlu0 %v823
    %v825 = vpop.xlane.xlu0 %824
    %v826 = vadd.f32 %v817, %v818
    %v827 = vadd.f32 %v826, %v819
    %v828 = vadd.f32 %v827, %v820
    %829 = vadd.xlane.f32.xlu0 %v828
    %v830 = vpop.xlane.xlu0 %829
    %v831 = vmul.f32 %v825, 0.001953125
    %v832 = vmul.f32 %v830, 0.001953125
    %v833 = vmul.f32 %v811, %v811
    %v834 = vmul.f32 %v812, %v812
    %v835 = vsub.f32 %v831, %v833
    %v836 = vsub.f32 %v832, %v834
    %v837 = vld [vmem:[%s5] sm:$0xff]
    %v838 = vld [vmem:[%s5 + $0x8] sm:$0xff]
    %v839 = vadd.f32 %v835, 1e-05
    %v840 = vadd.f32 %v836, 1e-05
    %v841 = vrsqrt.pop %v839
    %v842 = vrsqrt.pop %v840
    %v843 = vmul.f32 %v837, %v841
    %v844 = vmul.f32 %v838, %v842
    %v845 = vld [vmem:[%s6] sm:$0xff]
    %v846 = vld [vmem:[%s6 + $0x8] sm:$0xff]
    %v847 = vmul.f32 %v811, %v843
    %v848 = vmul.f32 %v812, %v844
    %v849 = vsub.f32 %v845, %v847
    %v850 = vsub.f32 %v846, %v848
    %v851 = vld [vmem:[%s7] sm:$0xff]
    %v852 = vld [vmem:[%s7 + $0x8] sm:$0xff]
    %v853 = vld [vmem:[%s8] sm:$0xff]
    %v854 = vld [vmem:[%s8 + $0x8] sm:$0xff]
    %v855 = vlaneseq
    %v856 = vshrl.u32 %v855, 7
    %v857 = vsub.s32 0, %v856
    %v858 = vrot.slane %v843, %v857
    %v859 = vmul.f32 %v851, %v858
    %v860 = vmul.f32 %v852, %v858
    %862 = vset.pattern.permute.xlu0 0
    %863 = vperm.xlu0 %862, %v859
    %v864 = vpop.permute.xlu0 %863
    %867 = vset.pattern.permute.xlu0 0
    %868 = vperm.xlu0 %867, %v860
    %v869 = vpop.permute.xlu0 %868
    %v871 = vlaneseq
    %v872 = vshrl.u32 %v871, 7
    %v873 = vsub.s32 0, %v872
    %v874 = vrot.slane %v793, %v873
    %v875 = vlaneseq
    %v876 = vshrl.u32 %v875, 7
    %v877 = vsub.s32 0, %v876
    %v878 = vrot.slane %v794, %v877
    %v879 = vlaneseq
    %v880 = vshrl.u32 %v879, 7
    %v881 = vsub.s32 0, %v880
    %v882 = vrot.slane %v795, %v881
    %v883 = vlaneseq
    %v884 = vshrl.u32 %v883, 7
    %v885 = vsub.s32 0, %v884
    %v886 = vrot.slane %v796, %v885
    %v887 = vmul.f32 %v864, %v874
    %v888 = vmul.f32 %v864, %v878
    %v889 = vmul.f32 %v864, %v882
    %v890 = vmul.f32 %v864, %v886
    %v891 = vmul.f32 %v869, %v874
    %v892 = vmul.f32 %v869, %v878
    %v893 = vmul.f32 %v869, %v882
    %v894 = vmul.f32 %v869, %v886
    %v895 = vadd.f32 %v887, 0.0
    %v896 = vadd.f32 %v888, 0.0
    %v897 = vadd.f32 %v889, 0.0
    %v898 = vadd.f32 %v890, 0.0
    %v899 = vadd.f32 %v891, 0.0
    %v900 = vadd.f32 %v892, 0.0
    %v901 = vadd.f32 %v893, 0.0
    %v902 = vadd.f32 %v894, 0.0
    %v903 = vlaneseq
    %v904 = vshrl.u32 %v903, 7
    %v905 = vsub.s32 0, %v904
    %v906 = vrot.slane %v849, %v905
    %v907 = vmul.f32 %v851, %v906
    %v908 = vmul.f32 %v852, %v906
    %v909 = vadd.f32 %v853, %v907
    %v910 = vadd.f32 %v854, %v908
    %v911 = vlaneseq
    %v912 = vshrl.u32 %v911, 7
    %v913 = vsub.s32 1, %v912
    %v914 = vrot.slane %v843, %v913
    %916 = vrot.lane.b32.xlu0 %v914, 1
    %v917 = vpop.permute.xlu0 %916
    %v919 = vmul.f32 %v851, %v917
    %v920 = vmul.f32 %v852, %v917
    %922 = vset.pattern.permute.xlu0 1
    %923 = vperm.xlu0 %922, %v919
    %v924 = vpop.permute.xlu0 %923
    %927 = vset.pattern.permute.xlu0 1
    %928 = vperm.xlu0 %927, %v920
    %v929 = vpop.permute.xlu0 %928
    %v931 = vlaneseq
    %v932 = vshrl.u32 %v931, 7
    %v933 = vsub.s32 1, %v932
    %v934 = vrot.slane %v793, %v933
    %v935 = vlaneseq
    %v936 = vshrl.u32 %v935, 7
    %v937 = vsub.s32 1, %v936
    %v938 = vrot.slane %v794, %v937
    %v939 = vlaneseq
    %v940 = vshrl.u32 %v939, 7
    %v941 = vsub.s32 1, %v940
    %v942 = vrot.slane %v795, %v941
    %v943 = vlaneseq
    %v944 = vshrl.u32 %v943, 7
    %v945 = vsub.s32 1, %v944
    %v946 = vrot.slane %v796, %v945
    %v947 = vmul.f32 %v924, %v934
    %v948 = vmul.f32 %v924, %v938
    %v949 = vmul.f32 %v924, %v942
    %v950 = vmul.f32 %v924, %v946
    %v951 = vmul.f32 %v929, %v934
    %v952 = vmul.f32 %v929, %v938
    %v953 = vmul.f32 %v929, %v942
    %v954 = vmul.f32 %v929, %v946
    %v955 = vadd.f32 %v895, %v947
    %v956 = vadd.f32 %v896, %v948
    %v957 = vadd.f32 %v897, %v949
    %v958 = vadd.f32 %v898, %v950
    %v959 = vadd.f32 %v899, %v951
    %v960 = vadd.f32 %v900, %v952
    %v961 = vadd.f32 %v901, %v953
    %v962 = vadd.f32 %v902, %v954
    %v963 = vlaneseq
    %v964 = vshrl.u32 %v963, 7
    %v965 = vsub.s32 1, %v964
    %v966 = vrot.slane %v849, %v965
    %968 = vrot.lane.b32.xlu0 %v966, 1
    %v969 = vpop.permute.xlu0 %968
    %v971 = vmul.f32 %v851, %v969
    %v972 = vmul.f32 %v852, %v969
    %975 = vrot.lane.b32.xlu0 %v971, 127
    %v976 = vpop.permute.xlu0 %975
    %977 = vrot.lane.b32.xlu0 %v972, 127
    %v978 = vpop.permute.xlu0 %977
    %v981 = vadd.f32 %v909, %v976
    %v982 = vadd.f32 %v910, %v978
    %v983 = vlaneseq
    %v984 = vshrl.u32 %v983, 7
    %v985 = vsub.s32 2, %v984
    %v986 = vrot.slane %v843, %v985
    %988 = vrot.lane.b32.xlu0 %v986, 2
    %v989 = vpop.permute.xlu0 %988
    %v991 = vmul.f32 %v851, %v989
    %v992 = vmul.f32 %v852, %v989
    %994 = vset.pattern.permute.xlu0 2
    %995 = vperm.xlu0 %994, %v991
    %v996 = vpop.permute.xlu0 %995
    %999 = vset.pattern.permute.xlu0 2
    %1000 = vperm.xlu0 %999, %v992
    %v1001 = vpop.permute.xlu0 %1000
    %v1003 = vlaneseq
    %v1004 = vshrl.u32 %v1003, 7
    %v1005 = vsub.s32 2, %v1004
    %v1006 = vrot.slane %v793, %v1005
    %v1007 = vlaneseq
    %v1008 = vshrl.u32 %v1007, 7
    %v1009 = vsub.s32 2, %v1008
    %v1010 = vrot.slane %v794, %v1009
    %v1011 = vlaneseq
    %v1012 = vshrl.u32 %v1011, 7
    %v1013 = vsub.s32 2, %v1012
    %v1014 = vrot.slane %v795, %v1013
    %v1015 = vlaneseq
    %v1016 = vshrl.u32 %v1015, 7
    %v1017 = vsub.s32 2, %v1016
    %v1018 = vrot.slane %v796, %v1017
    %v1019 = vmul.f32 %v996, %v1006
    %v1020 = vmul.f32 %v996, %v1010
    %v1021 = vmul.f32 %v996, %v1014
    %v1022 = vmul.f32 %v996, %v1018
    %v1023 = vmul.f32 %v1001, %v1006
    %v1024 = vmul.f32 %v1001, %v1010
    %v1025 = vmul.f32 %v1001, %v1014
    %v1026 = vmul.f32 %v1001, %v1018
    %v1027 = vadd.f32 %v955, %v1019
    %v1028 = vadd.f32 %v956, %v1020
    %v1029 = vadd.f32 %v957, %v1021
    %v1030 = vadd.f32 %v958, %v1022
    %v1031 = vadd.f32 %v959, %v1023
    %v1032 = vadd.f32 %v960, %v1024
    %v1033 = vadd.f32 %v961, %v1025
    %v1034 = vadd.f32 %v962, %v1026
    %v1035 = vlaneseq
    %v1036 = vshrl.u32 %v1035, 7
    %v1037 = vsub.s32 2, %v1036
    %v1038 = vrot.slane %v849, %v1037
    %1040 = vrot.lane.b32.xlu0 %v1038, 2
    %v1041 = vpop.permute.xlu0 %1040
    %v1043 = vmul.f32 %v851, %v1041
    %v1044 = vmul.f32 %v852, %v1041
    %1047 = vrot.lane.b32.xlu0 %v1043, 126
    %v1048 = vpop.permute.xlu0 %1047
    %1049 = vrot.lane.b32.xlu0 %v1044, 126
    %v1050 = vpop.permute.xlu0 %1049
    %v1053 = vadd.f32 %v981, %v1048
    %v1054 = vadd.f32 %v982, %v1050
    %v1055 = vlaneseq
    %v1056 = vshrl.u32 %v1055, 7
    %v1057 = vsub.s32 3, %v1056
    %v1058 = vrot.slane %v843, %v1057
    %1060 = vrot.lane.b32.xlu0 %v1058, 3
    %v1061 = vpop.permute.xlu0 %1060
    %v1063 = vmul.f32 %v851, %v1061
    %v1064 = vmul.f32 %v852, %v1061
    %1066 = vset.pattern.permute.xlu0 3
    %1067 = vperm.xlu0 %1066, %v1063
    %v1068 = vpop.permute.xlu0 %1067
    %1071 = vset.pattern.permute.xlu0 3
    %1072 = vperm.xlu0 %1071, %v1064
    %v1073 = vpop.permute.xlu0 %1072
    %v1075 = vlaneseq
    %v1076 = vshrl.u32 %v1075, 7
    %v1077 = vsub.s32 3, %v1076
    %v1078 = vrot.slane %v793, %v1077
    %v1079 = vlaneseq
    %v1080 = vshrl.u32 %v1079, 7
    %v1081 = vsub.s32 3, %v1080
    %v1082 = vrot.slane %v794, %v1081
    %v1083 = vlaneseq
    %v1084 = vshrl.u32 %v1083, 7
    %v1085 = vsub.s32 3, %v1084
    %v1086 = vrot.slane %v795, %v1085
    %v1087 = vlaneseq
    %v1088 = vshrl.u32 %v1087, 7
    %v1089 = vsub.s32 3, %v1088
    %v1090 = vrot.slane %v796, %v1089
    %v1091 = vmul.f32 %v1068, %v1078
    %v1092 = vmul.f32 %v1068, %v1082
    %v1093 = vmul.f32 %v1068, %v1086
    %v1094 = vmul.f32 %v1068, %v1090
    %v1095 = vmul.f32 %v1073, %v1078
    %v1096 = vmul.f32 %v1073, %v1082
    %v1097 = vmul.f32 %v1073, %v1086
    %v1098 = vmul.f32 %v1073, %v1090
    %v1099 = vadd.f32 %v1027, %v1091
    %v1100 = vadd.f32 %v1028, %v1092
    %v1101 = vadd.f32 %v1029, %v1093
    %v1102 = vadd.f32 %v1030, %v1094
    %v1103 = vadd.f32 %v1031, %v1095
    %v1104 = vadd.f32 %v1032, %v1096
    %v1105 = vadd.f32 %v1033, %v1097
    %v1106 = vadd.f32 %v1034, %v1098
    %v1107 = vlaneseq
    %v1108 = vshrl.u32 %v1107, 7
    %v1109 = vsub.s32 3, %v1108
    %v1110 = vrot.slane %v849, %v1109
    %1112 = vrot.lane.b32.xlu0 %v1110, 3
    %v1113 = vpop.permute.xlu0 %1112
    %v1115 = vmul.f32 %v851, %v1113
    %v1116 = vmul.f32 %v852, %v1113
    %1119 = vrot.lane.b32.xlu0 %v1115, 125
    %v1120 = vpop.permute.xlu0 %1119
    %1121 = vrot.lane.b32.xlu0 %v1116, 125
    %v1122 = vpop.permute.xlu0 %1121
    %v1125 = vadd.f32 %v1053, %v1120
    %v1126 = vadd.f32 %v1054, %v1122
    %v1127 = vlaneseq
    %v1128 = vshrl.u32 %v1127, 7
    %v1129 = vsub.s32 4, %v1128
    %v1130 = vrot.slane %v843, %v1129
    %1132 = vrot.lane.b32.xlu0 %v1130, 4
    %v1133 = vpop.permute.xlu0 %1132
    %v1135 = vmul.f32 %v851, %v1133
    %v1136 = vmul.f32 %v852, %v1133
    %1138 = vset.pattern.permute.xlu0 4
    %1139 = vperm.xlu0 %1138, %v1135
    %v1140 = vpop.permute.xlu0 %1139
    %1143 = vset.pattern.permute.xlu0 4
    %1144 = vperm.xlu0 %1143, %v1136
    %v1145 = vpop.permute.xlu0 %1144
    %v1147 = vlaneseq
    %v1148 = vshrl.u32 %v1147, 7
    %v1149 = vsub.s32 4, %v1148
    %v1150 = vrot.slane %v793, %v1149
    %v1151 = vlaneseq
    %v1152 = vshrl.u32 %v1151, 7
    %v1153 = vsub.s32 4, %v1152
    %v1154 = vrot.slane %v794, %v1153
    %v1155 = vlaneseq
    %v1156 = vshrl.u32 %v1155, 7
    %v1157 = vsub.s32 4, %v1156
    %v1158 = vrot.slane %v795, %v1157
    %v1159 = vlaneseq
    %v1160 = vshrl.u32 %v1159, 7
    %v1161 = vsub.s32 4, %v1160
    %v1162 = vrot.slane %v796, %v1161
    %v1163 = vmul.f32 %v1140, %v1150
    %v1164 = vmul.f32 %v1140, %v1154
    %v1165 = vmul.f32 %v1140, %v1158
    %v1166 = vmul.f32 %v1140, %v1162
    %v1167 = vmul.f32 %v1145, %v1150
    %v1168 = vmul.f32 %v1145, %v1154
    %v1169 = vmul.f32 %v1145, %v1158
    %v1170 = vmul.f32 %v1145, %v1162
    %v1171 = vadd.f32 %v1099, %v1163
    %v1172 = vadd.f32 %v1100, %v1164
    %v1173 = vadd.f32 %v1101, %v1165
    %v1174 = vadd.f32 %v1102, %v1166
    %v1175 = vadd.f32 %v1103, %v1167
    %v1176 = vadd.f32 %v1104, %v1168
    %v1177 = vadd.f32 %v1105, %v1169
    %v1178 = vadd.f32 %v1106, %v1170
    %v1179 = vlaneseq
    %v1180 = vshrl.u32 %v1179, 7
    %v1181 = vsub.s32 4, %v1180
    %v1182 = vrot.slane %v849, %v1181
    %1184 = vrot.lane.b32.xlu0 %v1182, 4
    %v1185 = vpop.permute.xlu0 %1184
    %v1187 = vmul.f32 %v851, %v1185
    %v1188 = vmul.f32 %v852, %v1185
    %1191 = vrot.lane.b32.xlu0 %v1187, 124
    %v1192 = vpop.permute.xlu0 %1191
    %1193 = vrot.lane.b32.xlu0 %v1188, 124
    %v1194 = vpop.permute.xlu0 %1193
    %v1197 = vadd.f32 %v1125, %v1192
    %v1198 = vadd.f32 %v1126, %v1194
    %v1199 = vlaneseq
    %v1200 = vshrl.u32 %v1199, 7
    %v1201 = vsub.s32 5, %v1200
    %v1202 = vrot.slane %v843, %v1201
    %1204 = vrot.lane.b32.xlu0 %v1202, 5
    %v1205 = vpop.permute.xlu0 %1204
    %v1207 = vmul.f32 %v851, %v1205
    %v1208 = vmul.f32 %v852, %v1205
    %1210 = vset.pattern.permute.xlu0 5
    %1211 = vperm.xlu0 %1210, %v1207
    %v1212 = vpop.permute.xlu0 %1211
    %1215 = vset.pattern.permute.xlu0 5
    %1216 = vperm.xlu0 %1215, %v1208
    %v1217 = vpop.permute.xlu0 %1216
    %v1219 = vlaneseq
    %v1220 = vshrl.u32 %v1219, 7
    %v1221 = vsub.s32 5, %v1220
    %v1222 = vrot.slane %v793, %v1221
    %v1223 = vlaneseq
    %v1224 = vshrl.u32 %v1223, 7
    %v1225 = vsub.s32 5, %v1224
    %v1226 = vrot.slane %v794, %v1225
    %v1227 = vlaneseq
    %v1228 = vshrl.u32 %v1227, 7
    %v1229 = vsub.s32 5, %v1228
    %v1230 = vrot.slane %v795, %v1229
    %v1231 = vlaneseq
    %v1232 = vshrl.u32 %v1231, 7
    %v1233 = vsub.s32 5, %v1232
    %v1234 = vrot.slane %v796, %v1233
    %v1235 = vmul.f32 %v1212, %v1222
    %v1236 = vmul.f32 %v1212, %v1226
    %v1237 = vmul.f32 %v1212, %v1230
    %v1238 = vmul.f32 %v1212, %v1234
    %v1239 = vmul.f32 %v1217, %v1222
    %v1240 = vmul.f32 %v1217, %v1226
    %v1241 = vmul.f32 %v1217, %v1230
    %v1242 = vmul.f32 %v1217, %v1234
    %v1243 = vadd.f32 %v1171, %v1235
    %v1244 = vadd.f32 %v1172, %v1236
    %v1245 = vadd.f32 %v1173, %v1237
    %v1246 = vadd.f32 %v1174, %v1238
    %v1247 = vadd.f32 %v1175, %v1239
    %v1248 = vadd.f32 %v1176, %v1240
    %v1249 = vadd.f32 %v1177, %v1241
    %v1250 = vadd.f32 %v1178, %v1242
    %v1251 = vlaneseq
    %v1252 = vshrl.u32 %v1251, 7
    %v1253 = vsub.s32 5, %v1252
    %v1254 = vrot.slane %v849, %v1253
    %1256 = vrot.lane.b32.xlu0 %v1254, 5
    %v1257 = vpop.permute.xlu0 %1256
    %v1259 = vmul.f32 %v851, %v1257
    %v1260 = vmul.f32 %v852, %v1257
    %1263 = vrot.lane.b32.xlu0 %v1259, 123
    %v1264 = vpop.permute.xlu0 %1263
    %1265 = vrot.lane.b32.xlu0 %v1260, 123
    %v1266 = vpop.permute.xlu0 %1265
    %v1269 = vadd.f32 %v1197, %v1264
    %v1270 = vadd.f32 %v1198, %v1266
    %v1271 = vlaneseq
    %v1272 = vshrl.u32 %v1271, 7
    %v1273 = vsub.s32 6, %v1272
    %v1274 = vrot.slane %v843, %v1273
    %1276 = vrot.lane.b32.xlu0 %v1274, 6
    %v1277 = vpop.permute.xlu0 %1276
    %v1279 = vmul.f32 %v851, %v1277
    %v1280 = vmul.f32 %v852, %v1277
    %1282 = vset.pattern.permute.xlu0 6
    %1283 = vperm.xlu0 %1282, %v1279
    %v1284 = vpop.permute.xlu0 %1283
    %1287 = vset.pattern.permute.xlu0 6
    %1288 = vperm.xlu0 %1287, %v1280
    %v1289 = vpop.permute.xlu0 %1288
    %v1291 = vlaneseq
    %v1292 = vshrl.u32 %v1291, 7
    %v1293 = vsub.s32 6, %v1292
    %v1294 = vrot.slane %v793, %v1293
    %v1295 = vlaneseq
    %v1296 = vshrl.u32 %v1295, 7
    %v1297 = vsub.s32 6, %v1296
    %v1298 = vrot.slane %v794, %v1297
    %v1299 = vlaneseq
    %v1300 = vshrl.u32 %v1299, 7
    %v1301 = vsub.s32 6, %v1300
    %v1302 = vrot.slane %v795, %v1301
    %v1303 = vlaneseq
    %v1304 = vshrl.u32 %v1303, 7
    %v1305 = vsub.s32 6, %v1304
    %v1306 = vrot.slane %v796, %v1305
    %v1307 = vmul.f32 %v1284, %v1294
    %v1308 = vmul.f32 %v1284, %v1298
    %v1309 = vmul.f32 %v1284, %v1302
    %v1310 = vmul.f32 %v1284, %v1306
    %v1311 = vmul.f32 %v1289, %v1294
    %v1312 = vmul.f32 %v1289, %v1298
    %v1313 = vmul.f32 %v1289, %v1302
    %v1314 = vmul.f32 %v1289, %v1306
    %v1315 = vadd.f32 %v1243, %v1307
    %v1316 = vadd.f32 %v1244, %v1308
    %v1317 = vadd.f32 %v1245, %v1309
    %v1318 = vadd.f32 %v1246, %v1310
    %v1319 = vadd.f32 %v1247, %v1311
    %v1320 = vadd.f32 %v1248, %v1312
    %v1321 = vadd.f32 %v1249, %v1313
    %v1322 = vadd.f32 %v1250, %v1314
    %v1323 = vlaneseq
    %v1324 = vshrl.u32 %v1323, 7
    %v1325 = vsub.s32 6, %v1324
    %v1326 = vrot.slane %v849, %v1325
    %1328 = vrot.lane.b32.xlu0 %v1326, 6
    %v1329 = vpop.permute.xlu0 %1328
    %v1331 = vmul.f32 %v851, %v1329
    %v1332 = vmul.f32 %v852, %v1329
    %1335 = vrot.lane.b32.xlu0 %v1331, 122
    %v1336 = vpop.permute.xlu0 %1335
    %1337 = vrot.lane.b32.xlu0 %v1332, 122
    %v1338 = vpop.permute.xlu0 %1337
    %v1341 = vadd.f32 %v1269, %v1336
    %v1342 = vadd.f32 %v1270, %v1338
    %v1343 = vlaneseq
    %v1344 = vshrl.u32 %v1343, 7
    %v1345 = vsub.s32 7, %v1344
    %v1346 = vrot.slane %v843, %v1345
    %1348 = vrot.lane.b32.xlu0 %v1346, 7
    %v1349 = vpop.permute.xlu0 %1348
    %v1351 = vmul.f32 %v851, %v1349
    %v1352 = vmul.f32 %v852, %v1349
    %1354 = vset.pattern.permute.xlu0 7
    %1355 = vperm.xlu0 %1354, %v1351
    %v1356 = vpop.permute.xlu0 %1355
    %1359 = vset.pattern.permute.xlu0 7
    %1360 = vperm.xlu0 %1359, %v1352
    %v1361 = vpop.permute.xlu0 %1360
    %v1363 = vlaneseq
    %v1364 = vshrl.u32 %v1363, 7
    %v1365 = vsub.s32 7, %v1364
    %v1366 = vrot.slane %v793, %v1365
    %v1367 = vlaneseq
    %v1368 = vshrl.u32 %v1367, 7
    %v1369 = vsub.s32 7, %v1368
    %v1370 = vrot.slane %v794, %v1369
    %v1371 = vlaneseq
    %v1372 = vshrl.u32 %v1371, 7
    %v1373 = vsub.s32 7, %v1372
    %v1374 = vrot.slane %v795, %v1373
    %v1375 = vlaneseq
    %v1376 = vshrl.u32 %v1375, 7
    %v1377 = vsub.s32 7, %v1376
    %v1378 = vrot.slane %v796, %v1377
    %v1379 = vmul.f32 %v1356, %v1366
    %v1380 = vmul.f32 %v1356, %v1370
    %v1381 = vmul.f32 %v1356, %v1374
    %v1382 = vmul.f32 %v1356, %v1378
    %v1383 = vmul.f32 %v1361, %v1366
    %v1384 = vmul.f32 %v1361, %v1370
    %v1385 = vmul.f32 %v1361, %v1374
    %v1386 = vmul.f32 %v1361, %v1378
    %v1387 = vadd.f32 %v1315, %v1379
    %v1388 = vadd.f32 %v1316, %v1380
    %v1389 = vadd.f32 %v1317, %v1381
    %v1390 = vadd.f32 %v1318, %v1382
    %v1391 = vadd.f32 %v1319, %v1383
    %v1392 = vadd.f32 %v1320, %v1384
    %v1393 = vadd.f32 %v1321, %v1385
    %v1394 = vadd.f32 %v1322, %v1386
    %v1395 = vlaneseq
    %v1396 = vshrl.u32 %v1395, 7
    %v1397 = vsub.s32 7, %v1396
    %v1398 = vrot.slane %v849, %v1397
    %1400 = vrot.lane.b32.xlu0 %v1398, 7
    %v1401 = vpop.permute.xlu0 %1400
    %v1403 = vmul.f32 %v851, %v1401
    %v1404 = vmul.f32 %v852, %v1401
    %1407 = vrot.lane.b32.xlu0 %v1403, 121
    %v1408 = vpop.permute.xlu0 %1407
    %1409 = vrot.lane.b32.xlu0 %v1404, 121
    %v1410 = vpop.permute.xlu0 %1409
    %v1413 = vadd.f32 %v1341, %v1408
    %v1414 = vadd.f32 %v1342, %v1410
    %v1415 = vlaneseq
    %v1416 = vshrl.u32 %v1415, 7
    %v1417 = vsub.s32 0, %v1416
    %v1418 = vrot.slane %v844, %v1417
    %1420 = vrot.lane.b32.xlu0 %v1418, 8
    %v1421 = vpop.permute.xlu0 %1420
    %v1423 = vmul.f32 %v851, %v1421
    %v1424 = vmul.f32 %v852, %v1421
    %1426 = vset.pattern.permute.xlu0 8
    %1427 = vperm.xlu0 %1426, %v1423
    %v1428 = vpop.permute.xlu0 %1427
    %1431 = vset.pattern.permute.xlu0 8
    %1432 = vperm.xlu0 %1431, %v1424
    %v1433 = vpop.permute.xlu0 %1432
    %v1435 = vlaneseq
    %v1436 = vshrl.u32 %v1435, 7
    %v1437 = vsub.s32 0, %v1436
    %v1438 = vrot.slane %v797, %v1437
    %v1439 = vlaneseq
    %v1440 = vshrl.u32 %v1439, 7
    %v1441 = vsub.s32 0, %v1440
    %v1442 = vrot.slane %v798, %v1441
    %v1443 = vlaneseq
    %v1444 = vshrl.u32 %v1443, 7
    %v1445 = vsub.s32 0, %v1444
    %v1446 = vrot.slane %v799, %v1445
    %v1447 = vlaneseq
    %v1448 = vshrl.u32 %v1447, 7
    %v1449 = vsub.s32 0, %v1448
    %v1450 = vrot.slane %v800, %v1449
    %v1451 = vmul.f32 %v1428, %v1438
    %v1452 = vmul.f32 %v1428, %v1442
    %v1453 = vmul.f32 %v1428, %v1446
    %v1454 = vmul.f32 %v1428, %v1450
    %v1455 = vmul.f32 %v1433, %v1438
    %v1456 = vmul.f32 %v1433, %v1442
    %v1457 = vmul.f32 %v1433, %v1446
    %v1458 = vmul.f32 %v1433, %v1450
    %v1459 = vadd.f32 %v1387, %v1451
    %v1460 = vadd.f32 %v1388, %v1452
    %v1461 = vadd.f32 %v1389, %v1453
    %v1462 = vadd.f32 %v1390, %v1454
    %v1463 = vadd.f32 %v1391, %v1455
    %v1464 = vadd.f32 %v1392, %v1456
    %v1465 = vadd.f32 %v1393, %v1457
    %v1466 = vadd.f32 %v1394, %v1458
    %v1467 = vlaneseq
    %v1468 = vshrl.u32 %v1467, 7
    %v1469 = vsub.s32 0, %v1468
    %v1470 = vrot.slane %v850, %v1469
    %1472 = vrot.lane.b32.xlu0 %v1470, 8
    %v1473 = vpop.permute.xlu0 %1472
    %v1475 = vmul.f32 %v851, %v1473
    %v1476 = vmul.f32 %v852, %v1473
    %1479 = vrot.lane.b32.xlu0 %v1475, 120
    %v1480 = vpop.permute.xlu0 %1479
    %1481 = vrot.lane.b32.xlu0 %v1476, 120
    %v1482 = vpop.permute.xlu0 %1481
    %v1485 = vadd.f32 %v1413, %v1480
    %v1486 = vadd.f32 %v1414, %v1482
    %v1487 = vlaneseq
    %v1488 = vshrl.u32 %v1487, 7
    %v1489 = vsub.s32 1, %v1488
    %v1490 = vrot.slane %v844, %v1489
    %1492 = vrot.lane.b32.xlu0 %v1490, 9
    %v1493 = vpop.permute.xlu0 %1492
    %v1495 = vmul.f32 %v851, %v1493
    %v1496 = vmul.f32 %v852, %v1493
    %1498 = vset.pattern.permute.xlu0 9
    %1499 = vperm.xlu0 %1498, %v1495
    %v1500 = vpop.permute.xlu0 %1499
    %1503 = vset.pattern.permute.xlu0 9
    %1504 = vperm.xlu0 %1503, %v1496
    %v1505 = vpop.permute.xlu0 %1504
    %v1507 = vlaneseq
    %v1508 = vshrl.u32 %v1507, 7
    %v1509 = vsub.s32 1, %v1508
    %v1510 = vrot.slane %v797, %v1509
    %v1511 = vlaneseq
    %v1512 = vshrl.u32 %v1511, 7
    %v1513 = vsub.s32 1, %v1512
    %v1514 = vrot.slane %v798, %v1513
    %v1515 = vlaneseq
    %v1516 = vshrl.u32 %v1515, 7
    %v1517 = vsub.s32 1, %v1516
    %v1518 = vrot.slane %v799, %v1517
    %v1519 = vlaneseq
    %v1520 = vshrl.u32 %v1519, 7
    %v1521 = vsub.s32 1, %v1520
    %v1522 = vrot.slane %v800, %v1521
    %v1523 = vmul.f32 %v1500, %v1510
    %v1524 = vmul.f32 %v1500, %v1514
    %v1525 = vmul.f32 %v1500, %v1518
    %v1526 = vmul.f32 %v1500, %v1522
    %v1527 = vmul.f32 %v1505, %v1510
    %v1528 = vmul.f32 %v1505, %v1514
    %v1529 = vmul.f32 %v1505, %v1518
    %v1530 = vmul.f32 %v1505, %v1522
    %v1531 = vadd.f32 %v1459, %v1523
    %v1532 = vadd.f32 %v1460, %v1524
    %v1533 = vadd.f32 %v1461, %v1525
    %v1534 = vadd.f32 %v1462, %v1526
    %v1535 = vadd.f32 %v1463, %v1527
    %v1536 = vadd.f32 %v1464, %v1528
    %v1537 = vadd.f32 %v1465, %v1529
    %v1538 = vadd.f32 %v1466, %v1530
    %v1539 = vlaneseq
    %v1540 = vshrl.u32 %v1539, 7
    %v1541 = vsub.s32 1, %v1540
    %v1542 = vrot.slane %v850, %v1541
    %1544 = vrot.lane.b32.xlu0 %v1542, 9
    %v1545 = vpop.permute.xlu0 %1544
    %v1547 = vmul.f32 %v851, %v1545
    %v1548 = vmul.f32 %v852, %v1545
    %1551 = vrot.lane.b32.xlu0 %v1547, 119
    %v1552 = vpop.permute.xlu0 %1551
    %1553 = vrot.lane.b32.xlu0 %v1548, 119
    %v1554 = vpop.permute.xlu0 %1553
    %v1557 = vadd.f32 %v1485, %v1552
    %v1558 = vadd.f32 %v1486, %v1554
    %v1559 = vlaneseq
    %v1560 = vshrl.u32 %v1559, 7
    %v1561 = vsub.s32 2, %v1560
    %v1562 = vrot.slane %v844, %v1561
    %1564 = vrot.lane.b32.xlu0 %v1562, 10
    %v1565 = vpop.permute.xlu0 %1564
    %v1567 = vmul.f32 %v851, %v1565
    %v1568 = vmul.f32 %v852, %v1565
    %1570 = vset.pattern.permute.xlu0 10
    %1571 = vperm.xlu0 %1570, %v1567
    %v1572 = vpop.permute.xlu0 %1571
    %1575 = vset.pattern.permute.xlu0 10
    %1576 = vperm.xlu0 %1575, %v1568
    %v1577 = vpop.permute.xlu0 %1576
    %v1579 = vlaneseq
    %v1580 = vshrl.u32 %v1579, 7
    %v1581 = vsub.s32 2, %v1580
    %v1582 = vrot.slane %v797, %v1581
    %v1583 = vlaneseq
    %v1584 = vshrl.u32 %v1583, 7
    %v1585 = vsub.s32 2, %v1584
    %v1586 = vrot.slane %v798, %v1585
    %v1587 = vlaneseq
    %v1588 = vshrl.u32 %v1587, 7
    %v1589 = vsub.s32 2, %v1588
    %v1590 = vrot.slane %v799, %v1589
    %v1591 = vlaneseq
    %v1592 = vshrl.u32 %v1591, 7
    %v1593 = vsub.s32 2, %v1592
    %v1594 = vrot.slane %v800, %v1593
    %v1595 = vmul.f32 %v1572, %v1582
    %v1596 = vmul.f32 %v1572, %v1586
    %v1597 = vmul.f32 %v1572, %v1590
    %v1598 = vmul.f32 %v1572, %v1594
    %v1599 = vmul.f32 %v1577, %v1582
    %v1600 = vmul.f32 %v1577, %v1586
    %v1601 = vmul.f32 %v1577, %v1590
    %v1602 = vmul.f32 %v1577, %v1594
    %v1603 = vadd.f32 %v1531, %v1595
    %v1604 = vadd.f32 %v1532, %v1596
    %v1605 = vadd.f32 %v1533, %v1597
    %v1606 = vadd.f32 %v1534, %v1598
    %v1607 = vadd.f32 %v1535, %v1599
    %v1608 = vadd.f32 %v1536, %v1600
    %v1609 = vadd.f32 %v1537, %v1601
    %v1610 = vadd.f32 %v1538, %v1602
    %v1611 = vlaneseq
    %v1612 = vshrl.u32 %v1611, 7
    %v1613 = vsub.s32 2, %v1612
    %v1614 = vrot.slane %v850, %v1613
    %1616 = vrot.lane.b32.xlu0 %v1614, 10
    %v1617 = vpop.permute.xlu0 %1616
    %v1619 = vmul.f32 %v851, %v1617
    %v1620 = vmul.f32 %v852, %v1617
    %1623 = vrot.lane.b32.xlu0 %v1619, 118
    %v1624 = vpop.permute.xlu0 %1623
    %1625 = vrot.lane.b32.xlu0 %v1620, 118
    %v1626 = vpop.permute.xlu0 %1625
    %v1629 = vadd.f32 %v1557, %v1624
    %v1630 = vadd.f32 %v1558, %v1626
    %v1631 = vlaneseq
    %v1632 = vshrl.u32 %v1631, 7
    %v1633 = vsub.s32 3, %v1632
    %v1634 = vrot.slane %v844, %v1633
    %1636 = vrot.lane.b32.xlu0 %v1634, 11
    %v1637 = vpop.permute.xlu0 %1636
    %v1639 = vmul.f32 %v851, %v1637
    %v1640 = vmul.f32 %v852, %v1637
    %1642 = vset.pattern.permute.xlu0 11
    %1643 = vperm.xlu0 %1642, %v1639
    %v1644 = vpop.permute.xlu0 %1643
    %1647 = vset.pattern.permute.xlu0 11
    %1648 = vperm.xlu0 %1647, %v1640
    %v1649 = vpop.permute.xlu0 %1648
    %v1651 = vlaneseq
    %v1652 = vshrl.u32 %v1651, 7
    %v1653 = vsub.s32 3, %v1652
    %v1654 = vrot.slane %v797, %v1653
    %v1655 = vlaneseq
    %v1656 = vshrl.u32 %v1655, 7
    %v1657 = vsub.s32 3, %v1656
    %v1658 = vrot.slane %v798, %v1657
    %v1659 = vlaneseq
    %v1660 = vshrl.u32 %v1659, 7
    %v1661 = vsub.s32 3, %v1660
    %v1662 = vrot.slane %v799, %v1661
    %v1663 = vlaneseq
    %v1664 = vshrl.u32 %v1663, 7
    %v1665 = vsub.s32 3, %v1664
    %v1666 = vrot.slane %v800, %v1665
    %v1667 = vmul.f32 %v1644, %v1654
    %v1668 = vmul.f32 %v1644, %v1658
    %v1669 = vmul.f32 %v1644, %v1662
    %v1670 = vmul.f32 %v1644, %v1666
    %v1671 = vmul.f32 %v1649, %v1654
    %v1672 = vmul.f32 %v1649, %v1658
    %v1673 = vmul.f32 %v1649, %v1662
    %v1674 = vmul.f32 %v1649, %v1666
    %v1675 = vadd.f32 %v1603, %v1667
    %v1676 = vadd.f32 %v1604, %v1668
    %v1677 = vadd.f32 %v1605, %v1669
    %v1678 = vadd.f32 %v1606, %v1670
    %v1679 = vadd.f32 %v1607, %v1671
    %v1680 = vadd.f32 %v1608, %v1672
    %v1681 = vadd.f32 %v1609, %v1673
    %v1682 = vadd.f32 %v1610, %v1674
    %v1683 = vlaneseq
    %v1684 = vshrl.u32 %v1683, 7
    %v1685 = vsub.s32 3, %v1684
    %v1686 = vrot.slane %v850, %v1685
    %1688 = vrot.lane.b32.xlu0 %v1686, 11
    %v1689 = vpop.permute.xlu0 %1688
    %v1691 = vmul.f32 %v851, %v1689
    %v1692 = vmul.f32 %v852, %v1689
    %1695 = vrot.lane.b32.xlu0 %v1691, 117
    %v1696 = vpop.permute.xlu0 %1695
    %1697 = vrot.lane.b32.xlu0 %v1692, 117
    %v1698 = vpop.permute.xlu0 %1697
    %v1701 = vadd.f32 %v1629, %v1696
    %v1702 = vadd.f32 %v1630, %v1698
    %v1703 = vlaneseq
    %v1704 = vshrl.u32 %v1703, 7
    %v1705 = vsub.s32 4, %v1704
    %v1706 = vrot.slane %v844, %v1705
    %1708 = vrot.lane.b32.xlu0 %v1706, 12
    %v1709 = vpop.permute.xlu0 %1708
    %v1711 = vmul.f32 %v851, %v1709
    %v1712 = vmul.f32 %v852, %v1709
    %1714 = vset.pattern.permute.xlu0 12
    %1715 = vperm.xlu0 %1714, %v1711
    %v1716 = vpop.permute.xlu0 %1715
    %1719 = vset.pattern.permute.xlu0 12
    %1720 = vperm.xlu0 %1719, %v1712
    %v1721 = vpop.permute.xlu0 %1720
    %v1723 = vlaneseq
    %v1724 = vshrl.u32 %v1723, 7
    %v1725 = vsub.s32 4, %v1724
    %v1726 = vrot.slane %v797, %v1725
    %v1727 = vlaneseq
    %v1728 = vshrl.u32 %v1727, 7
    %v1729 = vsub.s32 4, %v1728
    %v1730 = vrot.slane %v798, %v1729
    %v1731 = vlaneseq
    %v1732 = vshrl.u32 %v1731, 7
    %v1733 = vsub.s32 4, %v1732
    %v1734 = vrot.slane %v799, %v1733
    %v1735 = vlaneseq
    %v1736 = vshrl.u32 %v1735, 7
    %v1737 = vsub.s32 4, %v1736
    %v1738 = vrot.slane %v800, %v1737
    %v1739 = vmul.f32 %v1716, %v1726
    %v1740 = vmul.f32 %v1716, %v1730
    %v1741 = vmul.f32 %v1716, %v1734
    %v1742 = vmul.f32 %v1716, %v1738
    %v1743 = vmul.f32 %v1721, %v1726
    %v1744 = vmul.f32 %v1721, %v1730
    %v1745 = vmul.f32 %v1721, %v1734
    %v1746 = vmul.f32 %v1721, %v1738
    %v1747 = vadd.f32 %v1675, %v1739
    %v1748 = vadd.f32 %v1676, %v1740
    %v1749 = vadd.f32 %v1677, %v1741
    %v1750 = vadd.f32 %v1678, %v1742
    %v1751 = vadd.f32 %v1679, %v1743
    %v1752 = vadd.f32 %v1680, %v1744
    %v1753 = vadd.f32 %v1681, %v1745
    %v1754 = vadd.f32 %v1682, %v1746
    %v1755 = vlaneseq
    %v1756 = vshrl.u32 %v1755, 7
    %v1757 = vsub.s32 4, %v1756
    %v1758 = vrot.slane %v850, %v1757
    %1760 = vrot.lane.b32.xlu0 %v1758, 12
    %v1761 = vpop.permute.xlu0 %1760
    %v1763 = vmul.f32 %v851, %v1761
    %v1764 = vmul.f32 %v852, %v1761
    %1767 = vrot.lane.b32.xlu0 %v1763, 116
    %v1768 = vpop.permute.xlu0 %1767
    %1769 = vrot.lane.b32.xlu0 %v1764, 116
    %v1770 = vpop.permute.xlu0 %1769
    %v1773 = vadd.f32 %v1701, %v1768
    %v1774 = vadd.f32 %v1702, %v1770
    %v1775 = vlaneseq
    %v1776 = vshrl.u32 %v1775, 7
    %v1777 = vsub.s32 5, %v1776
    %v1778 = vrot.slane %v844, %v1777
    %1780 = vrot.lane.b32.xlu0 %v1778, 13
    %v1781 = vpop.permute.xlu0 %1780
    %v1783 = vmul.f32 %v851, %v1781
    %v1784 = vmul.f32 %v852, %v1781
    %1786 = vset.pattern.permute.xlu0 13
    %1787 = vperm.xlu0 %1786, %v1783
    %v1788 = vpop.permute.xlu0 %1787
    %1791 = vset.pattern.permute.xlu0 13
    %1792 = vperm.xlu0 %1791, %v1784
    %v1793 = vpop.permute.xlu0 %1792
    %v1795 = vlaneseq
    %v1796 = vshrl.u32 %v1795, 7
    %v1797 = vsub.s32 5, %v1796
    %v1798 = vrot.slane %v797, %v1797
    %v1799 = vlaneseq
    %v1800 = vshrl.u32 %v1799, 7
    %v1801 = vsub.s32 5, %v1800
    %v1802 = vrot.slane %v798, %v1801
    %v1803 = vlaneseq
    %v1804 = vshrl.u32 %v1803, 7
    %v1805 = vsub.s32 5, %v1804
    %v1806 = vrot.slane %v799, %v1805
    %v1807 = vlaneseq
    %v1808 = vshrl.u32 %v1807, 7
    %v1809 = vsub.s32 5, %v1808
    %v1810 = vrot.slane %v800, %v1809
    %v1811 = vmul.f32 %v1788, %v1798
    %v1812 = vmul.f32 %v1788, %v1802
    %v1813 = vmul.f32 %v1788, %v1806
    %v1814 = vmul.f32 %v1788, %v1810
    %v1815 = vmul.f32 %v1793, %v1798
    %v1816 = vmul.f32 %v1793, %v1802
    %v1817 = vmul.f32 %v1793, %v1806
    %v1818 = vmul.f32 %v1793, %v1810
    %v1819 = vadd.f32 %v1747, %v1811
    %v1820 = vadd.f32 %v1748, %v1812
    %v1821 = vadd.f32 %v1749, %v1813
    %v1822 = vadd.f32 %v1750, %v1814
    %v1823 = vadd.f32 %v1751, %v1815
    %v1824 = vadd.f32 %v1752, %v1816
    %v1825 = vadd.f32 %v1753, %v1817
    %v1826 = vadd.f32 %v1754, %v1818
    %v1827 = vlaneseq
    %v1828 = vshrl.u32 %v1827, 7
    %v1829 = vsub.s32 5, %v1828
    %v1830 = vrot.slane %v850, %v1829
    %1832 = vrot.lane.b32.xlu0 %v1830, 13
    %v1833 = vpop.permute.xlu0 %1832
    %v1835 = vmul.f32 %v851, %v1833
    %v1836 = vmul.f32 %v852, %v1833
    %1839 = vrot.lane.b32.xlu0 %v1835, 115
    %v1840 = vpop.permute.xlu0 %1839
    %1841 = vrot.lane.b32.xlu0 %v1836, 115
    %v1842 = vpop.permute.xlu0 %1841
    %v1845 = vadd.f32 %v1773, %v1840
    %v1846 = vadd.f32 %v1774, %v1842
    %v1847 = vlaneseq
    %v1848 = vshrl.u32 %v1847, 7
    %v1849 = vsub.s32 6, %v1848
    %v1850 = vrot.slane %v844, %v1849
    %1852 = vrot.lane.b32.xlu0 %v1850, 14
    %v1853 = vpop.permute.xlu0 %1852
    %v1855 = vmul.f32 %v851, %v1853
    %v1856 = vmul.f32 %v852, %v1853
    %1858 = vset.pattern.permute.xlu0 14
    %1859 = vperm.xlu0 %1858, %v1855
    %v1860 = vpop.permute.xlu0 %1859
    %1863 = vset.pattern.permute.xlu0 14
    %1864 = vperm.xlu0 %1863, %v1856
    %v1865 = vpop.permute.xlu0 %1864
    %v1867 = vlaneseq
    %v1868 = vshrl.u32 %v1867, 7
    %v1869 = vsub.s32 6, %v1868
    %v1870 = vrot.slane %v797, %v1869
    %v1871 = vlaneseq
    %v1872 = vshrl.u32 %v1871, 7
    %v1873 = vsub.s32 6, %v1872
    %v1874 = vrot.slane %v798, %v1873
    %v1875 = vlaneseq
    %v1876 = vshrl.u32 %v1875, 7
    %v1877 = vsub.s32 6, %v1876
    %v1878 = vrot.slane %v799, %v1877
    %v1879 = vlaneseq
    %v1880 = vshrl.u32 %v1879, 7
    %v1881 = vsub.s32 6, %v1880
    %v1882 = vrot.slane %v800, %v1881
    %v1883 = vmul.f32 %v1860, %v1870
    %v1884 = vmul.f32 %v1860, %v1874
    %v1885 = vmul.f32 %v1860, %v1878
    %v1886 = vmul.f32 %v1860, %v1882
    %v1887 = vmul.f32 %v1865, %v1870
    %v1888 = vmul.f32 %v1865, %v1874
    %v1889 = vmul.f32 %v1865, %v1878
    %v1890 = vmul.f32 %v1865, %v1882
    %v1891 = vadd.f32 %v1819, %v1883
    %v1892 = vadd.f32 %v1820, %v1884
    %v1893 = vadd.f32 %v1821, %v1885
    %v1894 = vadd.f32 %v1822, %v1886
    %v1895 = vadd.f32 %v1823, %v1887
    %v1896 = vadd.f32 %v1824, %v1888
    %v1897 = vadd.f32 %v1825, %v1889
    %v1898 = vadd.f32 %v1826, %v1890
    %v1899 = vlaneseq
    %v1900 = vshrl.u32 %v1899, 7
    %v1901 = vsub.s32 6, %v1900
    %v1902 = vrot.slane %v850, %v1901
    %1904 = vrot.lane.b32.xlu0 %v1902, 14
    %v1905 = vpop.permute.xlu0 %1904
    %v1907 = vmul.f32 %v851, %v1905
    %v1908 = vmul.f32 %v852, %v1905
    %1911 = vrot.lane.b32.xlu0 %v1907, 114
    %v1912 = vpop.permute.xlu0 %1911
    %1913 = vrot.lane.b32.xlu0 %v1908, 114
    %v1914 = vpop.permute.xlu0 %1913
    %v1917 = vadd.f32 %v1845, %v1912
    %v1918 = vadd.f32 %v1846, %v1914
    %v1919 = vlaneseq
    %v1920 = vshrl.u32 %v1919, 7
    %v1921 = vsub.s32 7, %v1920
    %v1922 = vrot.slane %v844, %v1921
    %1924 = vrot.lane.b32.xlu0 %v1922, 15
    %v1925 = vpop.permute.xlu0 %1924
    %v1927 = vmul.f32 %v851, %v1925
    %v1928 = vmul.f32 %v852, %v1925
    %1930 = vset.pattern.permute.xlu0 15
    %1931 = vperm.xlu0 %1930, %v1927
    %v1932 = vpop.permute.xlu0 %1931
    %1935 = vset.pattern.permute.xlu0 15
    %1936 = vperm.xlu0 %1935, %v1928
    %v1937 = vpop.permute.xlu0 %1936
    %v1939 = vlaneseq
    %v1940 = vshrl.u32 %v1939, 7
    %v1941 = vsub.s32 7, %v1940
    %v1942 = vrot.slane %v797, %v1941
    %v1943 = vlaneseq
    %v1944 = vshrl.u32 %v1943, 7
    %v1945 = vsub.s32 7, %v1944
    %v1946 = vrot.slane %v798, %v1945
    %v1947 = vlaneseq
    %v1948 = vshrl.u32 %v1947, 7
    %v1949 = vsub.s32 7, %v1948
    %v1950 = vrot.slane %v799, %v1949
    %v1951 = vlaneseq
    %v1952 = vshrl.u32 %v1951, 7
    %v1953 = vsub.s32 7, %v1952
    %v1954 = vrot.slane %v800, %v1953
    %v1955 = vmul.f32 %v1932, %v1942
    %v1956 = vmul.f32 %v1932, %v1946
    %v1957 = vmul.f32 %v1932, %v1950
    %v1958 = vmul.f32 %v1932, %v1954
    %v1959 = vmul.f32 %v1937, %v1942
    %v1960 = vmul.f32 %v1937, %v1946
    %v1961 = vmul.f32 %v1937, %v1950
    %v1962 = vmul.f32 %v1937, %v1954
    %v1963 = vadd.f32 %v1891, %v1955
    %v1964 = vadd.f32 %v1892, %v1956
    %v1965 = vadd.f32 %v1893, %v1957
    %v1966 = vadd.f32 %v1894, %v1958
    %v1967 = vadd.f32 %v1895, %v1959
    %v1968 = vadd.f32 %v1896, %v1960
    %v1969 = vadd.f32 %v1897, %v1961
    %v1970 = vadd.f32 %v1898, %v1962
    %v1971 = vlaneseq
    %v1972 = vshrl.u32 %v1971, 7
    %v1973 = vsub.s32 7, %v1972
    %v1974 = vrot.slane %v850, %v1973
    %1976 = vrot.lane.b32.xlu0 %v1974, 15
    %v1977 = vpop.permute.xlu0 %1976
    %v1979 = vmul.f32 %v851, %v1977
    %v1980 = vmul.f32 %v852, %v1977
    %1983 = vrot.lane.b32.xlu0 %v1979, 113
    %v1984 = vpop.permute.xlu0 %1983
    %1985 = vrot.lane.b32.xlu0 %v1980, 113
    %v1986 = vpop.permute.xlu0 %1985
    %v1989 = vadd.f32 %v1917, %v1984
    %v1990 = vadd.f32 %v1918, %v1986
    %1992 = vset.pattern.permute.xlu0 0
    %1993 = vperm.xlu0 %1992, %v1989
    %v1994 = vpop.permute.xlu0 %1993
    %1997 = vset.pattern.permute.xlu0 0
    %1998 = vperm.xlu0 %1997, %v1990
    %v1999 = vpop.permute.xlu0 %1998
    %v2001 = vadd.f32 %v1963, %v1994
    %v2002 = vadd.f32 %v1964, %v1994
    %v2003 = vadd.f32 %v1965, %v1994
    %v2004 = vadd.f32 %v1966, %v1994
    %v2005 = vadd.f32 %v1967, %v1999
    %v2006 = vadd.f32 %v1968, %v1999
    %v2007 = vadd.f32 %v1969, %v1999
    %v2008 = vadd.f32 %v1970, %v1999
    %v2009 = vadd.f32 %v2001, %v2002
    %v2010 = vadd.f32 %v2009, %v2003
    %v2011 = vadd.f32 %v2010, %v2004
    %2012 = vadd.xlane.f32.xlu0 %v2011
    %v2013 = vpop.xlane.xlu0 %2012
    %v2014 = vadd.f32 %v2005, %v2006
    %v2015 = vadd.f32 %v2014, %v2007
    %v2016 = vadd.f32 %v2015, %v2008
    %2017 = vadd.xlane.f32.xlu0 %v2016
    %v2018 = vpop.xlane.xlu0 %2017
    %v2019 = vmul.f32 %v2013, 0.001953125
    %v2020 = vmul.f32 %v2018, 0.001953125
    %v2021 = vmul.f32 %v2001, %v2001
    %v2022 = vmul.f32 %v2002, %v2002
    %v2023 = vmul.f32 %v2003, %v2003
    %v2024 = vmul.f32 %v2004, %v2004
    %v2025 = vmul.f32 %v2005, %v2005
    %v2026 = vmul.f32 %v2006, %v2006
    %v2027 = vmul.f32 %v2007, %v2007
    %v2028 = vmul.f32 %v2008, %v2008
    %v2029 = vadd.f32 %v2021, %v2022
    %v2030 = vadd.f32 %v2029, %v2023
    %v2031 = vadd.f32 %v2030, %v2024
    %2032 = vadd.xlane.f32.xlu0 %v2031
    %v2033 = vpop.xlane.xlu0 %2032
    %v2034 = vadd.f32 %v2025, %v2026
    %v2035 = vadd.f32 %v2034, %v2027
    %v2036 = vadd.f32 %v2035, %v2028
    %2037 = vadd.xlane.f32.xlu0 %v2036
    %v2038 = vpop.xlane.xlu0 %2037
    %v2039 = vmul.f32 %v2033, 0.001953125
    %v2040 = vmul.f32 %v2038, 0.001953125
    %v2041 = vmul.f32 %v2019, %v2019
    %v2042 = vmul.f32 %v2020, %v2020
    %v2043 = vsub.f32 %v2039, %v2041
    %v2044 = vsub.f32 %v2040, %v2042
    %v2045 = vsub.f32 %v2001, %v2019
    %v2046 = vsub.f32 %v2002, %v2019
    %v2047 = vsub.f32 %v2003, %v2019
    %v2048 = vsub.f32 %v2004, %v2019
    %v2049 = vsub.f32 %v2005, %v2020
    %v2050 = vsub.f32 %v2006, %v2020
    %v2051 = vsub.f32 %v2007, %v2020
    %v2052 = vsub.f32 %v2008, %v2020
    %v2053 = vld [vmem:[%s9] sm:$0xff]
    %v2054 = vld [vmem:[%s9 + $0x8] sm:$0xff]
    %v2055 = vadd.f32 %v2043, 1e-05
    %v2056 = vadd.f32 %v2044, 1e-05
    %v2057 = vrsqrt.pop %v2055
    %v2058 = vrsqrt.pop %v2056
    %v2059 = vmul.f32 %v2053, %v2057
    %v2060 = vmul.f32 %v2054, %v2058
    %2062 = vset.pattern.permute.xlu0 0
    %2063 = vperm.xlu0 %2062, %v2059
    %v2064 = vpop.permute.xlu0 %2063
    %2067 = vset.pattern.permute.xlu0 0
    %2068 = vperm.xlu0 %2067, %v2060
    %v2069 = vpop.permute.xlu0 %2068
    %v2071 = vmul.f32 %v2045, %v2064
    %v2072 = vmul.f32 %v2046, %v2064
    %v2073 = vmul.f32 %v2047, %v2064
    %v2074 = vmul.f32 %v2048, %v2064
    %v2075 = vmul.f32 %v2049, %v2069
    %v2076 = vmul.f32 %v2050, %v2069
    %v2077 = vmul.f32 %v2051, %v2069
    %v2078 = vmul.f32 %v2052, %v2069
    %v2079 = vld [vmem:[%s10] sm:$0xff]
    %v2080 = vld [vmem:[%s10 + $0x8] sm:$0xff]
    %2082 = vset.pattern.permute.xlu0 0
    %2083 = vperm.xlu0 %2082, %v2079
    %v2084 = vpop.permute.xlu0 %2083
    %2087 = vset.pattern.permute.xlu0 0
    %2088 = vperm.xlu0 %2087, %v2080
    %v2089 = vpop.permute.xlu0 %2088
    %v2091 = vadd.f32 %v2071, %v2084
    %v2092 = vadd.f32 %v2072, %v2084
    %v2093 = vadd.f32 %v2073, %v2084
    %v2094 = vadd.f32 %v2074, %v2084
    %v2095 = vadd.f32 %v2075, %v2089
    %v2096 = vadd.f32 %v2076, %v2089
    %v2097 = vadd.f32 %v2077, %v2089
    %v2098 = vadd.f32 %v2078, %v2089
    %v2099 = vadd.f32 %v2091, %v51
    %v2100 = vadd.f32 %v2092, %v52
    %v2101 = vadd.f32 %v2093, %v53
    %v2102 = vadd.f32 %v2094, %v54
    %v2103 = vadd.f32 %v2095, %v55
    %v2104 = vadd.f32 %v2096, %v56
    %v2105 = vadd.f32 %v2097, %v57
    %v2106 = vadd.f32 %v2098, %v58
    %v2107 = vmax.f32 %v2099, 0.0
    %v2108 = vmax.f32 %v2100, 0.0
    %v2109 = vmax.f32 %v2101, 0.0
    %v2110 = vmax.f32 %v2102, 0.0
    %v2111 = vmax.f32 %v2103, 0.0
    %v2112 = vmax.f32 %v2104, 0.0
    %v2113 = vmax.f32 %v2105, 0.0
    %v2114 = vmax.f32 %v2106, 0.0
    %v2115 = vld [vmem:[%s11] sm:$0xff]
    %v2116 = vld [vmem:[%s11 + $0x8] sm:$0xff]
    %2117 = vrot.lane.b32.xlu0 %v2107, 17
    %v2118 = vpop.permute.xlu0 %2117
    %2119 = vrot.lane.b32.xlu0 %v2111, 17
    %v2120 = vpop.permute.xlu0 %2119
    %2121 = vrot.lane.b32.xlu0 %v2108, 17
    %v2122 = vpop.permute.xlu0 %2121
    %2123 = vrot.lane.b32.xlu0 %v2112, 17
    %v2124 = vpop.permute.xlu0 %2123
    %2125 = vrot.lane.b32.xlu0 %v2109, 17
    %v2126 = vpop.permute.xlu0 %2125
    %2127 = vrot.lane.b32.xlu0 %v2113, 17
    %v2128 = vpop.permute.xlu0 %2127
    %2129 = vrot.lane.b32.xlu0 %v2110, 17
    %v2130 = vpop.permute.xlu0 %2129
    %2131 = vrot.lane.b32.xlu0 %v2114, 17
    %v2132 = vpop.permute.xlu0 %2131
    %v2133 = vsel %vm118, %v2126, %v2130
    %v2134 = vsel %vm118, %v2128, %v2132
    %v2135 = vsel %vm118, %v2122, %v2126
    %v2136 = vsel %vm118, %v2124, %v2128
    %v2137 = vsel %vm118, %v2118, %v2122
    %v2138 = vsel %vm118, %v2120, %v2124
    %v2139 = vsel %vm118, %v2130, %v2118
    %v2140 = vsel %vm118, %v2132, %v2120
    %v2141 = vsel %vm144, %v2139, 0.0
    %v2142 = vsel %vm145, %v2137, 0.0
    %v2143 = vsel %vm146, %v2135, 0.0
    %v2144 = vsel %vm147, %v2133, 0.0
    %v2145 = vsel %vm144, %v2140, 0.0
    %v2146 = vsel %vm145, %v2138, 0.0
    %v2147 = vsel %vm146, %v2136, 0.0
    %v2148 = vsel %vm147, %v2134, 0.0
    %2150 = vset.pattern.permute.xlu0 0
    %2151 = vperm.xlu0 %2150, %v2115
    %v2152 = vpop.permute.xlu0 %2151
    %2155 = vset.pattern.permute.xlu0 0
    %2156 = vperm.xlu0 %2155, %v2116
    %v2157 = vpop.permute.xlu0 %2156
    %v2159 = vmul.f32 %v2152, %v2141
    %v2160 = vmul.f32 %v2152, %v2142
    %v2161 = vmul.f32 %v2152, %v2143
    %v2162 = vmul.f32 %v2152, %v2144
    %v2163 = vmul.f32 %v2157, %v2145
    %v2164 = vmul.f32 %v2157, %v2146
    %v2165 = vmul.f32 %v2157, %v2147
    %v2166 = vmul.f32 %v2157, %v2148
    %v2167 = vadd.f32 %v2159, 0.0
    %v2168 = vadd.f32 %v2160, 0.0
    %v2169 = vadd.f32 %v2161, 0.0
    %v2170 = vadd.f32 %v2162, 0.0
    %v2171 = vadd.f32 %v2163, 0.0
    %v2172 = vadd.f32 %v2164, 0.0
    %v2173 = vadd.f32 %v2165, 0.0
    %v2174 = vadd.f32 %v2166, 0.0
    %2175 = vrot.lane.b32.xlu0 %v2107, 16
    %v2176 = vpop.permute.xlu0 %2175
    %2177 = vrot.lane.b32.xlu0 %v2111, 16
    %v2178 = vpop.permute.xlu0 %2177
    %2179 = vrot.lane.b32.xlu0 %v2108, 16
    %v2180 = vpop.permute.xlu0 %2179
    %2181 = vrot.lane.b32.xlu0 %v2112, 16
    %v2182 = vpop.permute.xlu0 %2181
    %2183 = vrot.lane.b32.xlu0 %v2109, 16
    %v2184 = vpop.permute.xlu0 %2183
    %2185 = vrot.lane.b32.xlu0 %v2113, 16
    %v2186 = vpop.permute.xlu0 %2185
    %2187 = vrot.lane.b32.xlu0 %v2110, 16
    %v2188 = vpop.permute.xlu0 %2187
    %2189 = vrot.lane.b32.xlu0 %v2114, 16
    %v2190 = vpop.permute.xlu0 %2189
    %v2191 = vsel %vm198, %v2184, %v2188
    %v2192 = vsel %vm198, %v2186, %v2190
    %v2193 = vsel %vm198, %v2180, %v2184
    %v2194 = vsel %vm198, %v2182, %v2186
    %v2195 = vsel %vm198, %v2176, %v2180
    %v2196 = vsel %vm198, %v2178, %v2182
    %v2197 = vsel %vm198, %v2188, %v2176
    %v2198 = vsel %vm198, %v2190, %v2178
    %v2199 = vsel %vm224, %v2197, 0.0
    %v2200 = vsel %vm225, %v2195, 0.0
    %v2201 = vsel %vm226, %v2193, 0.0
    %v2202 = vsel %vm227, %v2191, 0.0
    %v2203 = vsel %vm224, %v2198, 0.0
    %v2204 = vsel %vm225, %v2196, 0.0
    %v2205 = vsel %vm226, %v2194, 0.0
    %v2206 = vsel %vm227, %v2192, 0.0
    %2207 = vset.pattern.permute.xlu0 1
    %2208 = vperm.xlu0 %2207, %v2115
    %v2209 = vpop.permute.xlu0 %2208
    %2211 = vset.pattern.permute.xlu0 1
    %2212 = vperm.xlu0 %2211, %v2116
    %v2213 = vpop.permute.xlu0 %2212
    %v2215 = vmul.f32 %v2209, %v2199
    %v2216 = vmul.f32 %v2209, %v2200
    %v2217 = vmul.f32 %v2209, %v2201
    %v2218 = vmul.f32 %v2209, %v2202
    %v2219 = vmul.f32 %v2213, %v2203
    %v2220 = vmul.f32 %v2213, %v2204
    %v2221 = vmul.f32 %v2213, %v2205
    %v2222 = vmul.f32 %v2213, %v2206
    %v2223 = vadd.f32 %v2167, %v2215
    %v2224 = vadd.f32 %v2168, %v2216
    %v2225 = vadd.f32 %v2169, %v2217
    %v2226 = vadd.f32 %v2170, %v2218
    %v2227 = vadd.f32 %v2171, %v2219
    %v2228 = vadd.f32 %v2172, %v2220
    %v2229 = vadd.f32 %v2173, %v2221
    %v2230 = vadd.f32 %v2174, %v2222
    %2231 = vrot.lane.b32.xlu0 %v2107, 15
    %v2232 = vpop.permute.xlu0 %2231
    %2233 = vrot.lane.b32.xlu0 %v2111, 15
    %v2234 = vpop.permute.xlu0 %2233
    %2235 = vrot.lane.b32.xlu0 %v2108, 15
    %v2236 = vpop.permute.xlu0 %2235
    %2237 = vrot.lane.b32.xlu0 %v2112, 15
    %v2238 = vpop.permute.xlu0 %2237
    %2239 = vrot.lane.b32.xlu0 %v2109, 15
    %v2240 = vpop.permute.xlu0 %2239
    %2241 = vrot.lane.b32.xlu0 %v2113, 15
    %v2242 = vpop.permute.xlu0 %2241
    %2243 = vrot.lane.b32.xlu0 %v2110, 15
    %v2244 = vpop.permute.xlu0 %2243
    %2245 = vrot.lane.b32.xlu0 %v2114, 15
    %v2246 = vpop.permute.xlu0 %2245
    %v2247 = vsel %vm276, %v2240, %v2244
    %v2248 = vsel %vm276, %v2242, %v2246
    %v2249 = vsel %vm276, %v2236, %v2240
    %v2250 = vsel %vm276, %v2238, %v2242
    %v2251 = vsel %vm276, %v2232, %v2236
    %v2252 = vsel %vm276, %v2234, %v2238
    %v2253 = vsel %vm276, %v2244, %v2232
    %v2254 = vsel %vm276, %v2246, %v2234
    %v2255 = vsel %vm302, %v2253, 0.0
    %v2256 = vsel %vm303, %v2251, 0.0
    %v2257 = vsel %vm304, %v2249, 0.0
    %v2258 = vsel %vm305, %v2247, 0.0
    %v2259 = vsel %vm302, %v2254, 0.0
    %v2260 = vsel %vm303, %v2252, 0.0
    %v2261 = vsel %vm304, %v2250, 0.0
    %v2262 = vsel %vm305, %v2248, 0.0
    %2263 = vset.pattern.permute.xlu0 2
    %2264 = vperm.xlu0 %2263, %v2115
    %v2265 = vpop.permute.xlu0 %2264
    %2267 = vset.pattern.permute.xlu0 2
    %2268 = vperm.xlu0 %2267, %v2116
    %v2269 = vpop.permute.xlu0 %2268
    %v2271 = vmul.f32 %v2265, %v2255
    %v2272 = vmul.f32 %v2265, %v2256
    %v2273 = vmul.f32 %v2265, %v2257
    %v2274 = vmul.f32 %v2265, %v2258
    %v2275 = vmul.f32 %v2269, %v2259
    %v2276 = vmul.f32 %v2269, %v2260
    %v2277 = vmul.f32 %v2269, %v2261
    %v2278 = vmul.f32 %v2269, %v2262
    %v2279 = vadd.f32 %v2223, %v2271
    %v2280 = vadd.f32 %v2224, %v2272
    %v2281 = vadd.f32 %v2225, %v2273
    %v2282 = vadd.f32 %v2226, %v2274
    %v2283 = vadd.f32 %v2227, %v2275
    %v2284 = vadd.f32 %v2228, %v2276
    %v2285 = vadd.f32 %v2229, %v2277
    %v2286 = vadd.f32 %v2230, %v2278
    %2287 = vrot.lane.b32.xlu0 %v2107, 1
    %v2288 = vpop.permute.xlu0 %2287
    %2289 = vrot.lane.b32.xlu0 %v2111, 1
    %v2290 = vpop.permute.xlu0 %2289
    %2291 = vrot.lane.b32.xlu0 %v2108, 1
    %v2292 = vpop.permute.xlu0 %2291
    %2293 = vrot.lane.b32.xlu0 %v2112, 1
    %v2294 = vpop.permute.xlu0 %2293
    %2295 = vrot.lane.b32.xlu0 %v2109, 1
    %v2296 = vpop.permute.xlu0 %2295
    %2297 = vrot.lane.b32.xlu0 %v2113, 1
    %v2298 = vpop.permute.xlu0 %2297
    %2299 = vrot.lane.b32.xlu0 %v2110, 1
    %v2300 = vpop.permute.xlu0 %2299
    %2301 = vrot.lane.b32.xlu0 %v2114, 1
    %v2302 = vpop.permute.xlu0 %2301
    %v2303 = vsel %vm354, %v2296, %v2300
    %v2304 = vsel %vm354, %v2298, %v2302
    %v2305 = vsel %vm354, %v2292, %v2296
    %v2306 = vsel %vm354, %v2294, %v2298
    %v2307 = vsel %vm354, %v2288, %v2292
    %v2308 = vsel %vm354, %v2290, %v2294
    %v2309 = vsel %vm354, %v2300, %v2288
    %v2310 = vsel %vm354, %v2302, %v2290
    %v2311 = vsel %vm380, %v2309, 0.0
    %v2312 = vsel %vm381, %v2307, 0.0
    %v2313 = vsel %vm382, %v2305, 0.0
    %v2314 = vsel %vm383, %v2303, 0.0
    %v2315 = vsel %vm380, %v2310, 0.0
    %v2316 = vsel %vm381, %v2308, 0.0
    %v2317 = vsel %vm382, %v2306, 0.0
    %v2318 = vsel %vm383, %v2304, 0.0
    %2319 = vset.pattern.permute.xlu0 3
    %2320 = vperm.xlu0 %2319, %v2115
    %v2321 = vpop.permute.xlu0 %2320
    %2323 = vset.pattern.permute.xlu0 3
    %2324 = vperm.xlu0 %2323, %v2116
    %v2325 = vpop.permute.xlu0 %2324
    %v2327 = vmul.f32 %v2321, %v2311
    %v2328 = vmul.f32 %v2321, %v2312
    %v2329 = vmul.f32 %v2321, %v2313
    %v2330 = vmul.f32 %v2321, %v2314
    %v2331 = vmul.f32 %v2325, %v2315
    %v2332 = vmul.f32 %v2325, %v2316
    %v2333 = vmul.f32 %v2325, %v2317
    %v2334 = vmul.f32 %v2325, %v2318
    %v2335 = vadd.f32 %v2279, %v2327
    %v2336 = vadd.f32 %v2280, %v2328
    %v2337 = vadd.f32 %v2281, %v2329
    %v2338 = vadd.f32 %v2282, %v2330
    %v2339 = vadd.f32 %v2283, %v2331
    %v2340 = vadd.f32 %v2284, %v2332
    %v2341 = vadd.f32 %v2285, %v2333
    %v2342 = vadd.f32 %v2286, %v2334
    %v2343 = vsel %vm433, %v2107, 0.0
    %v2344 = vsel %vm434, %v2108, 0.0
    %v2345 = vsel %vm435, %v2109, 0.0
    %v2346 = vsel %vm436, %v2110, 0.0
    %v2347 = vsel %vm433, %v2111, 0.0
    %v2348 = vsel %vm434, %v2112, 0.0
    %v2349 = vsel %vm435, %v2113, 0.0
    %v2350 = vsel %vm436, %v2114, 0.0
    %2351 = vset.pattern.permute.xlu0 4
    %2352 = vperm.xlu0 %2351, %v2115
    %v2353 = vpop.permute.xlu0 %2352
    %2355 = vset.pattern.permute.xlu0 4
    %2356 = vperm.xlu0 %2355, %v2116
    %v2357 = vpop.permute.xlu0 %2356
    %v2359 = vmul.f32 %v2353, %v2343
    %v2360 = vmul.f32 %v2353, %v2344
    %v2361 = vmul.f32 %v2353, %v2345
    %v2362 = vmul.f32 %v2353, %v2346
    %v2363 = vmul.f32 %v2357, %v2347
    %v2364 = vmul.f32 %v2357, %v2348
    %v2365 = vmul.f32 %v2357, %v2349
    %v2366 = vmul.f32 %v2357, %v2350
    %v2367 = vadd.f32 %v2335, %v2359
    %v2368 = vadd.f32 %v2336, %v2360
    %v2369 = vadd.f32 %v2337, %v2361
    %v2370 = vadd.f32 %v2338, %v2362
    %v2371 = vadd.f32 %v2339, %v2363
    %v2372 = vadd.f32 %v2340, %v2364
    %v2373 = vadd.f32 %v2341, %v2365
    %v2374 = vadd.f32 %v2342, %v2366
    %2375 = vrot.lane.b32.xlu0 %v2107, 127
    %v2376 = vpop.permute.xlu0 %2375
    %2377 = vrot.lane.b32.xlu0 %v2111, 127
    %v2378 = vpop.permute.xlu0 %2377
    %2379 = vrot.lane.b32.xlu0 %v2108, 127
    %v2380 = vpop.permute.xlu0 %2379
    %2381 = vrot.lane.b32.xlu0 %v2112, 127
    %v2382 = vpop.permute.xlu0 %2381
    %2383 = vrot.lane.b32.xlu0 %v2109, 127
    %v2384 = vpop.permute.xlu0 %2383
    %2385 = vrot.lane.b32.xlu0 %v2113, 127
    %v2386 = vpop.permute.xlu0 %2385
    %2387 = vrot.lane.b32.xlu0 %v2110, 127
    %v2388 = vpop.permute.xlu0 %2387
    %2389 = vrot.lane.b32.xlu0 %v2114, 127
    %v2390 = vpop.permute.xlu0 %2389
    %v2391 = vsel %vm485, %v2384, %v2388
    %v2392 = vsel %vm485, %v2386, %v2390
    %v2393 = vsel %vm485, %v2380, %v2384
    %v2394 = vsel %vm485, %v2382, %v2386
    %v2395 = vsel %vm485, %v2376, %v2380
    %v2396 = vsel %vm485, %v2378, %v2382
    %v2397 = vsel %vm485, %v2388, %v2376
    %v2398 = vsel %vm485, %v2390, %v2378
    %v2399 = vsel %vm511, %v2395, 0.0
    %v2400 = vsel %vm512, %v2393, 0.0
    %v2401 = vsel %vm513, %v2391, 0.0
    %v2402 = vsel %vm514, %v2397, 0.0
    %v2403 = vsel %vm511, %v2396, 0.0
    %v2404 = vsel %vm512, %v2394, 0.0
    %v2405 = vsel %vm513, %v2392, 0.0
    %v2406 = vsel %vm514, %v2398, 0.0
    %2407 = vset.pattern.permute.xlu0 5
    %2408 = vperm.xlu0 %2407, %v2115
    %v2409 = vpop.permute.xlu0 %2408
    %2411 = vset.pattern.permute.xlu0 5
    %2412 = vperm.xlu0 %2411, %v2116
    %v2413 = vpop.permute.xlu0 %2412
    %v2415 = vmul.f32 %v2409, %v2399
    %v2416 = vmul.f32 %v2409, %v2400
    %v2417 = vmul.f32 %v2409, %v2401
    %v2418 = vmul.f32 %v2409, %v2402
    %v2419 = vmul.f32 %v2413, %v2403
    %v2420 = vmul.f32 %v2413, %v2404
    %v2421 = vmul.f32 %v2413, %v2405
    %v2422 = vmul.f32 %v2413, %v2406
    %v2423 = vadd.f32 %v2367, %v2415
    %v2424 = vadd.f32 %v2368, %v2416
    %v2425 = vadd.f32 %v2369, %v2417
    %v2426 = vadd.f32 %v2370, %v2418
    %v2427 = vadd.f32 %v2371, %v2419
    %v2428 = vadd.f32 %v2372, %v2420
    %v2429 = vadd.f32 %v2373, %v2421
    %v2430 = vadd.f32 %v2374, %v2422
    %2431 = vrot.lane.b32.xlu0 %v2107, 113
    %v2432 = vpop.permute.xlu0 %2431
    %2433 = vrot.lane.b32.xlu0 %v2111, 113
    %v2434 = vpop.permute.xlu0 %2433
    %2435 = vrot.lane.b32.xlu0 %v2108, 113
    %v2436 = vpop.permute.xlu0 %2435
    %2437 = vrot.lane.b32.xlu0 %v2112, 113
    %v2438 = vpop.permute.xlu0 %2437
    %2439 = vrot.lane.b32.xlu0 %v2109, 113
    %v2440 = vpop.permute.xlu0 %2439
    %2441 = vrot.lane.b32.xlu0 %v2113, 113
    %v2442 = vpop.permute.xlu0 %2441
    %2443 = vrot.lane.b32.xlu0 %v2110, 113
    %v2444 = vpop.permute.xlu0 %2443
    %2445 = vrot.lane.b32.xlu0 %v2114, 113
    %v2446 = vpop.permute.xlu0 %2445
    %v2447 = vsel %vm563, %v2440, %v2444
    %v2448 = vsel %vm563, %v2442, %v2446
    %v2449 = vsel %vm563, %v2436, %v2440
    %v2450 = vsel %vm563, %v2438, %v2442
    %v2451 = vsel %vm563, %v2432, %v2436
    %v2452 = vsel %vm563, %v2434, %v2438
    %v2453 = vsel %vm563, %v2444, %v2432
    %v2454 = vsel %vm563, %v2446, %v2434
    %v2455 = vsel %vm589, %v2451, 0.0
    %v2456 = vsel %vm590, %v2449, 0.0
    %v2457 = vsel %vm591, %v2447, 0.0
    %v2458 = vsel %vm592, %v2453, 0.0
    %v2459 = vsel %vm589, %v2452, 0.0
    %v2460 = vsel %vm590, %v2450, 0.0
    %v2461 = vsel %vm591, %v2448, 0.0
    %v2462 = vsel %vm592, %v2454, 0.0
    %2463 = vset.pattern.permute.xlu0 6
    %2464 = vperm.xlu0 %2463, %v2115
    %v2465 = vpop.permute.xlu0 %2464
    %2467 = vset.pattern.permute.xlu0 6
    %2468 = vperm.xlu0 %2467, %v2116
    %v2469 = vpop.permute.xlu0 %2468
    %v2471 = vmul.f32 %v2465, %v2455
    %v2472 = vmul.f32 %v2465, %v2456
    %v2473 = vmul.f32 %v2465, %v2457
    %v2474 = vmul.f32 %v2465, %v2458
    %v2475 = vmul.f32 %v2469, %v2459
    %v2476 = vmul.f32 %v2469, %v2460
    %v2477 = vmul.f32 %v2469, %v2461
    %v2478 = vmul.f32 %v2469, %v2462
    %v2479 = vadd.f32 %v2423, %v2471
    %v2480 = vadd.f32 %v2424, %v2472
    %v2481 = vadd.f32 %v2425, %v2473
    %v2482 = vadd.f32 %v2426, %v2474
    %v2483 = vadd.f32 %v2427, %v2475
    %v2484 = vadd.f32 %v2428, %v2476
    %v2485 = vadd.f32 %v2429, %v2477
    %v2486 = vadd.f32 %v2430, %v2478
    %2487 = vrot.lane.b32.xlu0 %v2107, 112
    %v2488 = vpop.permute.xlu0 %2487
    %2489 = vrot.lane.b32.xlu0 %v2111, 112
    %v2490 = vpop.permute.xlu0 %2489
    %2491 = vrot.lane.b32.xlu0 %v2108, 112
    %v2492 = vpop.permute.xlu0 %2491
    %2493 = vrot.lane.b32.xlu0 %v2112, 112
    %v2494 = vpop.permute.xlu0 %2493
    %2495 = vrot.lane.b32.xlu0 %v2109, 112
    %v2496 = vpop.permute.xlu0 %2495
    %2497 = vrot.lane.b32.xlu0 %v2113, 112
    %v2498 = vpop.permute.xlu0 %2497
    %2499 = vrot.lane.b32.xlu0 %v2110, 112
    %v2500 = vpop.permute.xlu0 %2499
    %2501 = vrot.lane.b32.xlu0 %v2114, 112
    %v2502 = vpop.permute.xlu0 %2501
    %v2503 = vsel %vm641, %v2496, %v2500
    %v2504 = vsel %vm641, %v2498, %v2502
    %v2505 = vsel %vm641, %v2492, %v2496
    %v2506 = vsel %vm641, %v2494, %v2498
    %v2507 = vsel %vm641, %v2488, %v2492
    %v2508 = vsel %vm641, %v2490, %v2494
    %v2509 = vsel %vm641, %v2500, %v2488
    %v2510 = vsel %vm641, %v2502, %v2490
    %v2511 = vsel %vm667, %v2507, 0.0
    %v2512 = vsel %vm668, %v2505, 0.0
    %v2513 = vsel %vm669, %v2503, 0.0
    %v2514 = vsel %vm670, %v2509, 0.0
    %v2515 = vsel %vm667, %v2508, 0.0
    %v2516 = vsel %vm668, %v2506, 0.0
    %v2517 = vsel %vm669, %v2504, 0.0
    %v2518 = vsel %vm670, %v2510, 0.0
    %2519 = vset.pattern.permute.xlu0 7
    %2520 = vperm.xlu0 %2519, %v2115
    %v2521 = vpop.permute.xlu0 %2520
    %2523 = vset.pattern.permute.xlu0 7
    %2524 = vperm.xlu0 %2523, %v2116
    %v2525 = vpop.permute.xlu0 %2524
    %v2527 = vmul.f32 %v2521, %v2511
    %v2528 = vmul.f32 %v2521, %v2512
    %v2529 = vmul.f32 %v2521, %v2513
    %v2530 = vmul.f32 %v2521, %v2514
    %v2531 = vmul.f32 %v2525, %v2515
    %v2532 = vmul.f32 %v2525, %v2516
    %v2533 = vmul.f32 %v2525, %v2517
    %v2534 = vmul.f32 %v2525, %v2518
    %v2535 = vadd.f32 %v2479, %v2527
    %v2536 = vadd.f32 %v2480, %v2528
    %v2537 = vadd.f32 %v2481, %v2529
    %v2538 = vadd.f32 %v2482, %v2530
    %v2539 = vadd.f32 %v2483, %v2531
    %v2540 = vadd.f32 %v2484, %v2532
    %v2541 = vadd.f32 %v2485, %v2533
    %v2542 = vadd.f32 %v2486, %v2534
    %2543 = vrot.lane.b32.xlu0 %v2107, 111
    %v2544 = vpop.permute.xlu0 %2543
    %2545 = vrot.lane.b32.xlu0 %v2111, 111
    %v2546 = vpop.permute.xlu0 %2545
    %2547 = vrot.lane.b32.xlu0 %v2108, 111
    %v2548 = vpop.permute.xlu0 %2547
    %2549 = vrot.lane.b32.xlu0 %v2112, 111
    %v2550 = vpop.permute.xlu0 %2549
    %2551 = vrot.lane.b32.xlu0 %v2109, 111
    %v2552 = vpop.permute.xlu0 %2551
    %2553 = vrot.lane.b32.xlu0 %v2113, 111
    %v2554 = vpop.permute.xlu0 %2553
    %2555 = vrot.lane.b32.xlu0 %v2110, 111
    %v2556 = vpop.permute.xlu0 %2555
    %2557 = vrot.lane.b32.xlu0 %v2114, 111
    %v2558 = vpop.permute.xlu0 %2557
    %v2559 = vsel %vm719, %v2552, %v2556
    %v2560 = vsel %vm719, %v2554, %v2558
    %v2561 = vsel %vm719, %v2548, %v2552
    %v2562 = vsel %vm719, %v2550, %v2554
    %v2563 = vsel %vm719, %v2544, %v2548
    %v2564 = vsel %vm719, %v2546, %v2550
    %v2565 = vsel %vm719, %v2556, %v2544
    %v2566 = vsel %vm719, %v2558, %v2546
    %v2567 = vsel %vm745, %v2563, 0.0
    %v2568 = vsel %vm746, %v2561, 0.0
    %v2569 = vsel %vm747, %v2559, 0.0
    %v2570 = vsel %vm748, %v2565, 0.0
    %v2571 = vsel %vm745, %v2564, 0.0
    %v2572 = vsel %vm746, %v2562, 0.0
    %v2573 = vsel %vm747, %v2560, 0.0
    %v2574 = vsel %vm748, %v2566, 0.0
    %2575 = vset.pattern.permute.xlu0 8
    %2576 = vperm.xlu0 %2575, %v2115
    %v2577 = vpop.permute.xlu0 %2576
    %2579 = vset.pattern.permute.xlu0 8
    %2580 = vperm.xlu0 %2579, %v2116
    %v2581 = vpop.permute.xlu0 %2580
    %v2583 = vmul.f32 %v2577, %v2567
    %v2584 = vmul.f32 %v2577, %v2568
    %v2585 = vmul.f32 %v2577, %v2569
    %v2586 = vmul.f32 %v2577, %v2570
    %v2587 = vmul.f32 %v2581, %v2571
    %v2588 = vmul.f32 %v2581, %v2572
    %v2589 = vmul.f32 %v2581, %v2573
    %v2590 = vmul.f32 %v2581, %v2574
    %v2591 = vadd.f32 %v2535, %v2583
    %v2592 = vadd.f32 %v2536, %v2584
    %v2593 = vadd.f32 %v2537, %v2585
    %v2594 = vadd.f32 %v2538, %v2586
    %v2595 = vadd.f32 %v2539, %v2587
    %v2596 = vadd.f32 %v2540, %v2588
    %v2597 = vadd.f32 %v2541, %v2589
    %v2598 = vadd.f32 %v2542, %v2590
    %v2599 = vld [vmem:[%s12] sm:$0xff]
    %v2600 = vld [vmem:[%s12 + $0x8] sm:$0xff]
    %2602 = vset.pattern.permute.xlu0 0
    %2603 = vperm.xlu0 %2602, %v2599
    %v2604 = vpop.permute.xlu0 %2603
    %2607 = vset.pattern.permute.xlu0 0
    %2608 = vperm.xlu0 %2607, %v2600
    %v2609 = vpop.permute.xlu0 %2608
    %v2611 = vadd.f32 %v2591, %v2604
    %v2612 = vadd.f32 %v2592, %v2604
    %v2613 = vadd.f32 %v2593, %v2604
    %v2614 = vadd.f32 %v2594, %v2604
    %v2615 = vadd.f32 %v2595, %v2609
    %v2616 = vadd.f32 %v2596, %v2609
    %v2617 = vadd.f32 %v2597, %v2609
    %v2618 = vadd.f32 %v2598, %v2609
    %v2619 = vadd.f32 %v2611, %v2612
    %v2620 = vadd.f32 %v2619, %v2613
    %v2621 = vadd.f32 %v2620, %v2614
    %2622 = vadd.xlane.f32.xlu0 %v2621
    %v2623 = vpop.xlane.xlu0 %2622
    %v2624 = vadd.f32 %v2615, %v2616
    %v2625 = vadd.f32 %v2624, %v2617
    %v2626 = vadd.f32 %v2625, %v2618
    %2627 = vadd.xlane.f32.xlu0 %v2626
    %v2628 = vpop.xlane.xlu0 %2627
    %v2629 = vmul.f32 %v2623, 0.001953125
    %v2630 = vmul.f32 %v2628, 0.001953125
    %v2631 = vmul.f32 %v2611, %v2611
    %v2632 = vmul.f32 %v2612, %v2612
    %v2633 = vmul.f32 %v2613, %v2613
    %v2634 = vmul.f32 %v2614, %v2614
    %v2635 = vmul.f32 %v2615, %v2615
    %v2636 = vmul.f32 %v2616, %v2616
    %v2637 = vmul.f32 %v2617, %v2617
    %v2638 = vmul.f32 %v2618, %v2618
    %v2639 = vadd.f32 %v2631, %v2632
    %v2640 = vadd.f32 %v2639, %v2633
    %v2641 = vadd.f32 %v2640, %v2634
    %2642 = vadd.xlane.f32.xlu0 %v2641
    %v2643 = vpop.xlane.xlu0 %2642
    %v2644 = vadd.f32 %v2635, %v2636
    %v2645 = vadd.f32 %v2644, %v2637
    %v2646 = vadd.f32 %v2645, %v2638
    %2647 = vadd.xlane.f32.xlu0 %v2646
    %v2648 = vpop.xlane.xlu0 %2647
    %v2649 = vmul.f32 %v2643, 0.001953125
    %v2650 = vmul.f32 %v2648, 0.001953125
    %v2651 = vmul.f32 %v2629, %v2629
    %v2652 = vmul.f32 %v2630, %v2630
    %v2653 = vsub.f32 %v2649, %v2651
    %v2654 = vsub.f32 %v2650, %v2652
    %v2655 = vsub.f32 %v2611, %v2629
    %v2656 = vsub.f32 %v2612, %v2629
    %v2657 = vsub.f32 %v2613, %v2629
    %v2658 = vsub.f32 %v2614, %v2629
    %v2659 = vsub.f32 %v2615, %v2630
    %v2660 = vsub.f32 %v2616, %v2630
    %v2661 = vsub.f32 %v2617, %v2630
    %v2662 = vsub.f32 %v2618, %v2630
    %v2663 = vld [vmem:[%s13] sm:$0xff]
    %v2664 = vld [vmem:[%s13 + $0x8] sm:$0xff]
    %v2665 = vadd.f32 %v2653, 1e-05
    %v2666 = vadd.f32 %v2654, 1e-05
    %v2667 = vrsqrt.pop %v2665
    %v2668 = vrsqrt.pop %v2666
    %v2669 = vmul.f32 %v2663, %v2667
    %v2670 = vmul.f32 %v2664, %v2668
    %2672 = vset.pattern.permute.xlu0 0
    %2673 = vperm.xlu0 %2672, %v2669
    %v2674 = vpop.permute.xlu0 %2673
    %2677 = vset.pattern.permute.xlu0 0
    %2678 = vperm.xlu0 %2677, %v2670
    %v2679 = vpop.permute.xlu0 %2678
    %v2681 = vmul.f32 %v2655, %v2674
    %v2682 = vmul.f32 %v2656, %v2674
    %v2683 = vmul.f32 %v2657, %v2674
    %v2684 = vmul.f32 %v2658, %v2674
    %v2685 = vmul.f32 %v2659, %v2679
    %v2686 = vmul.f32 %v2660, %v2679
    %v2687 = vmul.f32 %v2661, %v2679
    %v2688 = vmul.f32 %v2662, %v2679
    %v2689 = vld [vmem:[%s14] sm:$0xff]
    %v2690 = vld [vmem:[%s14 + $0x8] sm:$0xff]
    %2692 = vset.pattern.permute.xlu0 0
    %2693 = vperm.xlu0 %2692, %v2689
    %v2694 = vpop.permute.xlu0 %2693
    %2697 = vset.pattern.permute.xlu0 0
    %2698 = vperm.xlu0 %2697, %v2690
    %v2699 = vpop.permute.xlu0 %2698
    %v2701 = vadd.f32 %v2681, %v2694
    %v2702 = vadd.f32 %v2682, %v2694
    %v2703 = vadd.f32 %v2683, %v2694
    %v2704 = vadd.f32 %v2684, %v2694
    %v2705 = vadd.f32 %v2685, %v2699
    %v2706 = vadd.f32 %v2686, %v2699
    %v2707 = vadd.f32 %v2687, %v2699
    %v2708 = vadd.f32 %v2688, %v2699
    %v2709 = vadd.f32 %v2701, %v2107
    %v2710 = vadd.f32 %v2702, %v2108
    %v2711 = vadd.f32 %v2703, %v2109
    %v2712 = vadd.f32 %v2704, %v2110
    %v2713 = vadd.f32 %v2705, %v2111
    %v2714 = vadd.f32 %v2706, %v2112
    %v2715 = vadd.f32 %v2707, %v2113
    %v2716 = vadd.f32 %v2708, %v2114
    %v2717 = vadd.f32 %v2709, %v51
    %v2718 = vadd.f32 %v2710, %v52
    %v2719 = vadd.f32 %v2711, %v53
    %v2720 = vadd.f32 %v2712, %v54
    %v2721 = vadd.f32 %v2713, %v55
    %v2722 = vadd.f32 %v2714, %v56
    %v2723 = vadd.f32 %v2715, %v57
    %v2724 = vadd.f32 %v2716, %v58
    %v2725 = vmax.f32 %v2717, 0.0
    %v2726 = vmax.f32 %v2718, 0.0
    %v2727 = vmax.f32 %v2719, 0.0
    %v2728 = vmax.f32 %v2720, 0.0
    %v2729 = vmax.f32 %v2721, 0.0
    %v2730 = vmax.f32 %v2722, 0.0
    %v2731 = vmax.f32 %v2723, 0.0
    %v2732 = vmax.f32 %v2724, 0.0
    %2733 = vst [vmem:[#allocation2] sm:$0xff] %v2725
    %2734 = vst [vmem:[#allocation2 + $0x8] sm:$0xff] %v2726
    %2735 = vst [vmem:[#allocation2 + $0x10] sm:$0xff] %v2727
    %2736 = vst [vmem:[#allocation2 + $0x18] sm:$0xff] %v2728
    %2737 = vst [vmem:[#allocation2 + $0x20] sm:$0xff] %v2729
    %2738 = vst [vmem:[#allocation2 + $0x28] sm:$0xff] %v2730
    %2739 = vst [vmem:[#allocation2 + $0x30] sm:$0xff] %v2731
    %2740 = vst [vmem:[#allocation2 + $0x38] sm:$0xff] %v2732
    // Predicated region
    $region62: #{tpu_custom_call.1} parent=1 // pred_check
      _
    $region63: #{tpu_custom_call.1} parent=1 // pred_check_branch
      %2742 = sbr.rel (0) target = $region65
    $region64: #{tpu_custom_call.1} parent=1 // pred_region
      %s2744 = ssub.s32 1024, 1024
      %2745 = vsyncadd [#allocation3], %s2744
      %s2746 = sshll.u32 [#allocation2], 4
      %s2747 = int_to_ptr.vmem [resolvable:$true] %s2746
      %2752 = dma.vmem_to_hbm [thread:$0]  %s2747, 1024, %s15, [#allocation3], 512, 512, 32
    $region65: #{tpu_custom_call.1} parent=1 // pred_fallthru
      _
    // Predicated region
    $region66: #{tpu_custom_call.1} parent=1 // pred_check
      _
    $region67: #{tpu_custom_call.1} parent=1 // pred_check_branch
      %2754 = sbr.rel (0) target = $region69
    $region68: #{tpu_custom_call.1} parent=1 // pred_region
      %2755 = dma.done [#allocation3], 1024
    $region69: #{tpu_custom_call.1} parent=1 // pred_fallthru
      _
    %2756 = vsyncpa [#allocation3], 1

</llo_original>
